<compile_context>
chip_gen: v7x
topology: tpu7x:2x2x1
jax: 0.10.0
libtpu: 0.0.40
codegen_flags: <defaults>
</compile_context>

<pallas_src>
import functools

import jax
import jax.numpy as jnp
from jax.experimental import pallas as pl
from jax.experimental.pallas import tpu as pltpu

LN_EPS = 1e-5
LANE = 128


def _round_up(n, m):
    return ((n + m - 1) // m) * m


def _fused_layer_norm(z, gamma, beta, inv_n):
    """Single-pass LayerNorm over the last axis; `inv_n` = 1 / real_width."""
    mu = jnp.sum(z, axis=-1, keepdims=True) * inv_n
    ms = jnp.sum(z * z, axis=-1, keepdims=True) * inv_n
    var = jnp.maximum(ms - mu * mu, 0.0)
    return (z - mu) * jax.lax.rsqrt(var + LN_EPS) * gamma + beta


def _residual_mlp_kernel(
    x_ref,        # (TB, Ip)   compute dtype (e.g. bf16)
    w0_ref,       # (Ip, Wp)
    b0_ref,       # (1, Wp)
    wres_ref,     # (D, Wp, Wp)
    bres_ref,     # (D, Wp)
    gres_ref,     # (D, Wp)    per-block LN gamma (unused if not layer_norm)
    betres_ref,   # (D, Wp)    per-block LN beta
    gf_ref,       # (1, Wp)    final LN gamma
    betf_ref,     # (1, Wp)    final LN beta
    wf_ref,       # (Wp, Op)
    bf_ref,       # (1, Op)
    o_ref,        # (TB, Op)
    *,
    depth: int,
    layer_norm: bool,
    inv_width: float,
    compute_dtype,
):
    f32 = jnp.float32

    # input projection: bf16 x bf16 -> f32 accumulation on the MXU
    h = jnp.dot(x_ref[...], w0_ref[...], preferred_element_type=f32)
    h = h + b0_ref[...].astype(f32)

    # residual blocks (depth is static -> unrolled)
    for d in range(depth):
        z = h
        if layer_norm:
            z = _fused_layer_norm(
                z, gres_ref[d, :].astype(f32), betres_ref[d, :].astype(f32), inv_width
            )
        z = jnp.maximum(z, 0.0)  # relu
        h = (h
             + jnp.dot(z.astype(compute_dtype), wres_ref[d], preferred_element_type=f32)
             + bres_ref[d, :].astype(f32))

    if layer_norm:
        h = _fused_layer_norm(
            h, gf_ref[...].astype(f32), betf_ref[...].astype(f32), inv_width
        )
    h = jnp.maximum(h, 0.0)  # activation before final_linear
    out = jnp.dot(h.astype(compute_dtype), wf_ref[...], preferred_element_type=f32)
    out = out + bf_ref[...].astype(f32)
    o_ref[...] = out.astype(o_ref.dtype)


def residual_mlp_pallas(x, params, *, depth: int, layer_norm: bool, batch_tile: int = 256):
    B, input_dim = x.shape
    width = params["w0"].shape[1]
    output_dim = params["wf"].shape[1]
    dtype = params["w0"].dtype
    itemsize = jnp.dtype(dtype).itemsize
    sub = 16 if itemsize == 2 else 8            # sublane packing of the batch axis

    # lane-dense (multiple-of-128) padded feature dims
    Ip = _round_up(input_dim, LANE)
    Wp = _round_up(width, LANE)
    Op = _round_up(output_dim, LANE)

    # batch tile: big (feeds the MXU), multiple of the sublane pack, and
    # preferably >= 2 grid steps so both v7x TensorCores get work.
    bt = min(int(batch_tile), _round_up(B, sub))
    bt = max(sub, _round_up(bt, sub))
    if _round_up(B, bt) // bt < 2 and B > sub:
        bt = _round_up(pl.cdiv(B, 2), sub)
    Bp = _round_up(B, bt)

    def pad_to(a, shape):
        pads = [(0, s - d) for d, s in zip(a.shape, shape)]
        return jnp.pad(a, pads) if any(p for _, p in pads) else a

    xp = pad_to(x.astype(dtype), (Bp, Ip))
    w0 = pad_to(params["w0"], (Ip, Wp))
    b0 = pad_to(params["b0"], (1, Wp))
    if depth > 0:
        wres = pad_to(params["wres"], (depth, Wp, Wp))
        bres = pad_to(params["bres"], (depth, Wp))
        gres = pad_to(params["gres"], (depth, Wp))
        betres = pad_to(params["betres"], (depth, Wp))
    else:
        # dummy single-slice stack (never read: static depth==0); avoids 0-extent blocks
        wres = jnp.zeros((1, Wp, Wp), dtype)
        bres = jnp.zeros((1, Wp), dtype)
        gres = jnp.ones((1, Wp), dtype)
        betres = jnp.zeros((1, Wp), dtype)
    gf = pad_to(params["gf"], (1, Wp))
    betf = pad_to(params["betf"], (1, Wp))
    wf = pad_to(params["wf"], (Wp, Op))
    bf = pad_to(params["bf"], (1, Op))

    weights = (w0, b0, wres, bres, gres, betres, gf, betf, wf, bf)
    weight_bytes = sum(int(a.size) * a.dtype.itemsize for a in weights)

    def full_spec(shape):
        nd = len(shape)
        return pl.BlockSpec(shape, lambda i: (0,) * nd)   # grid-invariant, VMEM resident

    kernel = functools.partial(
        _residual_mlp_kernel,
        depth=depth,
        layer_norm=layer_norm,
        inv_width=1.0 / float(width),
        compute_dtype=dtype,
    )

    # explicit VMEM budget: resident weights (double-buffered by the pipeline),
    # double-buffered x/out tiles, f32 activation working set, plus headroom.
    vmem_limit = (2 * weight_bytes
                  + 2 * (bt * Ip + bt * Op) * itemsize
                  + 4 * bt * Wp * 4
                  + (8 << 20))
    vmem_limit = int(min(max(vmem_limit, 32 << 20), 100 << 20))

    flops = 2 * Bp * (Ip * Wp + depth * Wp * Wp + Wp * Op)
    cost = pl.CostEstimate(
        flops=flops,
        transcendentals=Bp * (depth + 1) if layer_norm else 0,
        bytes_accessed=int(xp.size) * itemsize + weight_bytes + Bp * Op * itemsize,
    )

    out = pl.pallas_call(
        kernel,
        out_shape=jax.ShapeDtypeStruct((Bp, Op), x.dtype),
        grid_spec=pltpu.PrefetchScalarGridSpec(
            num_scalar_prefetch=0,
            grid=(Bp // bt,),
            in_specs=[
                pl.BlockSpec((bt, Ip), lambda i: (i, 0)),
                *(full_spec(w.shape) for w in weights),
            ],
            out_specs=pl.BlockSpec((bt, Op), lambda i: (i, 0)),
        ),
        compiler_params=pltpu.CompilerParams(
            dimension_semantics=("parallel",),
            vmem_limit_bytes=vmem_limit,
        ),
        cost_estimate=cost,
    )(xp, *weights)

    return out[:B, :output_dim]


def init_params(key, input_dim, width, depth, output_dim, dtype=jnp.bfloat16):
    """PyTorch-style uniform(-1/sqrt(fan_in), +1/sqrt(fan_in)) init; weights stored (in, out)."""
    ks = jax.random.split(key, 4)

    def lin(k, fan_in, fan_out):
        bound = 1.0 / float(fan_in) ** 0.5
        kw, kb = jax.random.split(k)
        w = jax.random.uniform(kw, (fan_in, fan_out), jnp.float32, -bound, bound)
        b = jax.random.uniform(kb, (1, fan_out), jnp.float32, -bound, bound)
        return w.astype(dtype), b.astype(dtype)

    w0, b0 = lin(ks[0], input_dim, width)
    wres_l, bres_l = [], []
    for d in range(depth):
        w, b = lin(jax.random.fold_in(ks[1], d), width, width)
        wres_l.append(w)
        bres_l.append(b[0])
    wf, bf = lin(ks[2], width, output_dim)
    zero_row = jnp.zeros((0, width), dtype)
    return {
        "w0": w0, "b0": b0,
        "wres": jnp.stack(wres_l) if depth > 0 else jnp.zeros((0, width, width), dtype),
        "bres": jnp.stack(bres_l) if depth > 0 else zero_row,
        "gres": jnp.ones((depth, width), dtype) if depth > 0 else zero_row,
        "betres": jnp.zeros((depth, width), dtype) if depth > 0 else zero_row,
        "gf": jnp.ones((1, width), dtype),
        "betf": jnp.zeros((1, width), dtype),
        "wf": wf, "bf": bf,
    }


def residual_mlp_reference(x, params, *, depth, layer_norm):
    """Pure-JAX reference mirroring the PyTorch forward and the kernel's precision
    policy (bf16 matmul inputs, f32 accumulation / LayerNorm / residual)."""
    f32 = jnp.float32
    cdt = params["w0"].dtype
    inv_w = 1.0 / float(params["w0"].shape[1])
    h = jnp.dot(x.astype(cdt), params["w0"], preferred_element_type=f32)
    h = h + params["b0"].astype(f32)
    for d in range(depth):
        z = h
        if layer_norm:
            z = _fused_layer_norm(z, params["gres"][d].astype(f32),
                                  params["betres"][d].astype(f32), inv_w)
        z = jnp.maximum(z, 0.0)
        h = (h
             + jnp.dot(z.astype(cdt), params["wres"][d], preferred_element_type=f32)
             + params["bres"][d].astype(f32))
    if layer_norm:
        h = _fused_layer_norm(h, params["gf"].astype(f32), params["betf"].astype(f32), inv_w)
    h = jnp.maximum(h, 0.0)
    return (jnp.dot(h.astype(cdt), params["wf"], preferred_element_type=f32)
            + params["bf"].astype(f32))


if __name__ == "__main__":
    # ResidualMLP(input_dim=8, width=96, depth=2, output_dim=4, activation='relu', layer_norm=True)
    input_dim, width, depth, output_dim = 8, 96, 2, 4
    layer_norm = True
    batch = 512                      # tiled as 2 x 256 -> both v7x TensorCores get a step

    key = jax.random.PRNGKey(0)
    kx, kp = jax.random.split(key)
    x = jax.random.normal(kx, (batch, input_dim), jnp.float32).astype(jnp.bfloat16)
    params = init_params(kp, input_dim, width, depth, output_dim, dtype=jnp.bfloat16)

    out = residual_mlp_pallas(x, params, depth=depth, layer_norm=layer_norm, batch_tile=256)
    out = jax.block_until_ready(out)

    ref = residual_mlp_reference(x, params, depth=depth, layer_norm=layer_norm)
    assert out.shape == (batch, output_dim)
    err = float(jnp.max(jnp.abs(out.astype(jnp.float32) - ref)))
    assert err < 3e-2, f"mismatch vs JAX reference: max abs err {err}"

    print("KERNEL_OK")
</pallas_src>

<mosaic_0001>
module attributes {stable_mosaic.version = 11 : i64} {
  func.func @_residual_mlp_kernel(%arg0: i32, %arg1: memref<256x128xbf16, #tpu.memory_space<vmem>>, %arg2: memref<128x128xbf16, #tpu.memory_space<vmem>>, %arg3: memref<1x128xbf16, #tpu.memory_space<vmem>>, %arg4: memref<2x128x128xbf16, #tpu.memory_space<vmem>>, %arg5: memref<2x128xbf16, #tpu.memory_space<vmem>>, %arg6: memref<2x128xbf16, #tpu.memory_space<vmem>>, %arg7: memref<2x128xbf16, #tpu.memory_space<vmem>>, %arg8: memref<1x128xbf16, #tpu.memory_space<vmem>>, %arg9: memref<1x128xbf16, #tpu.memory_space<vmem>>, %arg10: memref<128x128xbf16, #tpu.memory_space<vmem>>, %arg11: memref<1x128xbf16, #tpu.memory_space<vmem>>, %arg12: memref<256x128xbf16, #tpu.memory_space<vmem>>) attributes {dimension_semantics = [#tpu.dimension_semantics<parallel>], iteration_bounds = array<i64: 2>, scalar_prefetch = 0 : i64, scratch_operands = 0 : i64, tpu.core_type = #tpu.core_type<tc>, window_params = [{transform_indices = @transform_0, window_bounds = array<i64: 256, 128>}, {pipeline_mode = #tpu.pipeline_mode<synchronous>, transform_indices = @transform_1, window_bounds = array<i64: 128, 128>}, {pipeline_mode = #tpu.pipeline_mode<synchronous>, transform_indices = @transform_2, window_bounds = array<i64: 1, 128>}, {pipeline_mode = #tpu.pipeline_mode<synchronous>, transform_indices = @transform_3, window_bounds = array<i64: 2, 128, 128>}, {pipeline_mode = #tpu.pipeline_mode<synchronous>, transform_indices = @transform_4, window_bounds = array<i64: 2, 128>}, {pipeline_mode = #tpu.pipeline_mode<synchronous>, transform_indices = @transform_5, window_bounds = array<i64: 2, 128>}, {pipeline_mode = #tpu.pipeline_mode<synchronous>, transform_indices = @transform_6, window_bounds = array<i64: 2, 128>}, {pipeline_mode = #tpu.pipeline_mode<synchronous>, transform_indices = @transform_7, window_bounds = array<i64: 1, 128>}, {pipeline_mode = #tpu.pipeline_mode<synchronous>, transform_indices = @transform_8, window_bounds = array<i64: 1, 128>}, {pipeline_mode = #tpu.pipeline_mode<synchronous>, transform_indices = @transform_9, window_bounds = array<i64: 128, 128>}, {pipeline_mode = #tpu.pipeline_mode<synchronous>, transform_indices = @transform_10, window_bounds = array<i64: 1, 128>}, {transform_indices = @transform_11, window_bounds = array<i64: 256, 128>}]} {
    %c0 = arith.constant 0 : index
    %c0_0 = arith.constant 0 : index
    %0 = vector.load %arg1[%c0, %c0_0] : memref<256x128xbf16, #tpu.memory_space<vmem>>, vector<256x128xbf16>
    %c0_1 = arith.constant 0 : index
    %c0_2 = arith.constant 0 : index
    %1 = vector.load %arg2[%c0_1, %c0_2] : memref<128x128xbf16, #tpu.memory_space<vmem>>, vector<128x128xbf16>
    %cst = arith.constant dense<0.000000e+00> : vector<256x128xf32>
    %2 = tpu.matmul %0, %1, %cst {dimension_numbers = #tpu.dot_dimension_numbers<[1], [0], [0], [1], [0, 0, 1, 1], [], []>} : vector<256x128xbf16>, vector<128x128xbf16>, vector<256x128xf32> -> vector<256x128xf32>
    %c0_3 = arith.constant 0 : index
    %c0_4 = arith.constant 0 : index
    %3 = vector.load %arg3[%c0_3, %c0_4] : memref<1x128xbf16, #tpu.memory_space<vmem>>, vector<1x128xbf16>
    %4 = arith.extf %3 : vector<1x128xbf16> to vector<1x128xf32>
    %5 = vector.broadcast %4 : vector<1x128xf32> to vector<256x128xf32>
    %6 = arith.addf %2, %5 : vector<256x128xf32>
    %c0_5 = arith.constant 0 : index
    %c0_6 = arith.constant 0 : index
    %7 = vector.load %arg6[%c0_5, %c0_6] : memref<2x128xbf16, #tpu.memory_space<vmem>>, vector<1x128xbf16>
    %8 = vector.shape_cast %7 : vector<1x128xbf16> to vector<128xbf16>
    %9 = arith.extf %8 : vector<128xbf16> to vector<128xf32>
    %c0_7 = arith.constant 0 : index
    %c0_8 = arith.constant 0 : index
    %10 = vector.load %arg7[%c0_7, %c0_8] : memref<2x128xbf16, #tpu.memory_space<vmem>>, vector<1x128xbf16>
    %11 = vector.shape_cast %10 : vector<1x128xbf16> to vector<128xbf16>
    %12 = arith.extf %11 : vector<128xbf16> to vector<128xf32>
    %cst_9 = arith.constant dense<0.000000e+00> : vector<256xf32>
    %13 = vector.multi_reduction <add>, %6, %cst_9 [1] : vector<256x128xf32> to vector<256xf32>
    %14 = vector.shape_cast %13 : vector<256xf32> to vector<256x1xf32>
    %cst_10 = arith.constant 0.010416667 : f32
    %15 = vector.broadcast %cst_10 : f32 to vector<256x1xf32>
    %16 = arith.mulf %14, %15 : vector<256x1xf32>
    %17 = arith.mulf %6, %6 : vector<256x128xf32>
    %cst_11 = arith.constant dense<0.000000e+00> : vector<256xf32>
    %18 = vector.multi_reduction <add>, %17, %cst_11 [1] : vector<256x128xf32> to vector<256xf32>
    %19 = vector.shape_cast %18 : vector<256xf32> to vector<256x1xf32>
    %cst_12 = arith.constant 0.010416667 : f32
    %20 = vector.broadcast %cst_12 : f32 to vector<256x1xf32>
    %21 = arith.mulf %19, %20 : vector<256x1xf32>
    %22 = arith.mulf %16, %16 : vector<256x1xf32>
    %23 = arith.subf %21, %22 : vector<256x1xf32>
    %cst_13 = arith.constant 0.000000e+00 : f32
    %24 = vector.broadcast %cst_13 : f32 to vector<256x1xf32>
    %25 = arith.maximumf %23, %24 : vector<256x1xf32>
    %26 = vector.broadcast %16 : vector<256x1xf32> to vector<256x128xf32>
    %27 = arith.subf %6, %26 : vector<256x128xf32>
    %cst_14 = arith.constant 9.99999974E-6 : f32
    %28 = vector.broadcast %cst_14 : f32 to vector<256x1xf32>
    %29 = arith.addf %25, %28 : vector<256x1xf32>
    %30 = math.rsqrt %29 : vector<256x1xf32>
    %31 = vector.broadcast %30 : vector<256x1xf32> to vector<256x128xf32>
    %32 = arith.mulf %27, %31 : vector<256x128xf32>
    %33 = vector.shape_cast %9 : vector<128xf32> to vector<1x128xf32>
    %34 = vector.broadcast %33 : vector<1x128xf32> to vector<256x128xf32>
    %35 = arith.mulf %32, %34 : vector<256x128xf32>
    %36 = vector.shape_cast %12 : vector<128xf32> to vector<1x128xf32>
    %37 = vector.broadcast %36 : vector<1x128xf32> to vector<256x128xf32>
    %38 = arith.addf %35, %37 : vector<256x128xf32>
    %cst_15 = arith.constant 0.000000e+00 : f32
    %39 = vector.broadcast %cst_15 : f32 to vector<256x128xf32>
    %40 = arith.maximumf %38, %39 : vector<256x128xf32>
    %41 = arith.truncf %40 : vector<256x128xf32> to vector<256x128xbf16>
    %c0_16 = arith.constant 0 : index
    %c0_17 = arith.constant 0 : index
    %c0_18 = arith.constant 0 : index
    %42 = vector.load %arg4[%c0_16, %c0_17, %c0_18] : memref<2x128x128xbf16, #tpu.memory_space<vmem>>, vector<1x128x128xbf16>
    %43 = vector.shape_cast %42 : vector<1x128x128xbf16> to vector<128x128xbf16>
    %cst_19 = arith.constant dense<0.000000e+00> : vector<256x128xf32>
    %44 = tpu.matmul %41, %43, %cst_19 {dimension_numbers = #tpu.dot_dimension_numbers<[1], [0], [0], [1], [0, 0, 1, 1], [], []>} : vector<256x128xbf16>, vector<128x128xbf16>, vector<256x128xf32> -> vector<256x128xf32>
    %45 = arith.addf %6, %44 : vector<256x128xf32>
    %c0_20 = arith.constant 0 : index
    %c0_21 = arith.constant 0 : index
    %46 = vector.load %arg5[%c0_20, %c0_21] : memref<2x128xbf16, #tpu.memory_space<vmem>>, vector<1x128xbf16>
    %47 = vector.shape_cast %46 : vector<1x128xbf16> to vector<128xbf16>
    %48 = arith.extf %47 : vector<128xbf16> to vector<128xf32>
    %49 = vector.shape_cast %48 : vector<128xf32> to vector<1x128xf32>
    %50 = vector.broadcast %49 : vector<1x128xf32> to vector<256x128xf32>
    %51 = arith.addf %45, %50 : vector<256x128xf32>
    %c1 = arith.constant 1 : index
    %c0_22 = arith.constant 0 : index
    %52 = vector.load %arg6[%c1, %c0_22] : memref<2x128xbf16, #tpu.memory_space<vmem>>, vector<1x128xbf16>
    %53 = vector.shape_cast %52 : vector<1x128xbf16> to vector<128xbf16>
    %54 = arith.extf %53 : vector<128xbf16> to vector<128xf32>
    %c1_23 = arith.constant 1 : index
    %c0_24 = arith.constant 0 : index
    %55 = vector.load %arg7[%c1_23, %c0_24] : memref<2x128xbf16, #tpu.memory_space<vmem>>, vector<1x128xbf16>
    %56 = vector.shape_cast %55 : vector<1x128xbf16> to vector<128xbf16>
    %57 = arith.extf %56 : vector<128xbf16> to vector<128xf32>
    %cst_25 = arith.constant dense<0.000000e+00> : vector<256xf32>
    %58 = vector.multi_reduction <add>, %51, %cst_25 [1] : vector<256x128xf32> to vector<256xf32>
    %59 = vector.shape_cast %58 : vector<256xf32> to vector<256x1xf32>
    %cst_26 = arith.constant 0.010416667 : f32
    %60 = vector.broadcast %cst_26 : f32 to vector<256x1xf32>
    %61 = arith.mulf %59, %60 : vector<256x1xf32>
    %62 = arith.mulf %51, %51 : vector<256x128xf32>
    %cst_27 = arith.constant dense<0.000000e+00> : vector<256xf32>
    %63 = vector.multi_reduction <add>, %62, %cst_27 [1] : vector<256x128xf32> to vector<256xf32>
    %64 = vector.shape_cast %63 : vector<256xf32> to vector<256x1xf32>
    %cst_28 = arith.constant 0.010416667 : f32
    %65 = vector.broadcast %cst_28 : f32 to vector<256x1xf32>
    %66 = arith.mulf %64, %65 : vector<256x1xf32>
    %67 = arith.mulf %61, %61 : vector<256x1xf32>
    %68 = arith.subf %66, %67 : vector<256x1xf32>
    %cst_29 = arith.constant 0.000000e+00 : f32
    %69 = vector.broadcast %cst_29 : f32 to vector<256x1xf32>
    %70 = arith.maximumf %68, %69 : vector<256x1xf32>
    %71 = vector.broadcast %61 : vector<256x1xf32> to vector<256x128xf32>
    %72 = arith.subf %51, %71 : vector<256x128xf32>
    %cst_30 = arith.constant 9.99999974E-6 : f32
    %73 = vector.broadcast %cst_30 : f32 to vector<256x1xf32>
    %74 = arith.addf %70, %73 : vector<256x1xf32>
    %75 = math.rsqrt %74 : vector<256x1xf32>
    %76 = vector.broadcast %75 : vector<256x1xf32> to vector<256x128xf32>
    %77 = arith.mulf %72, %76 : vector<256x128xf32>
    %78 = vector.shape_cast %54 : vector<128xf32> to vector<1x128xf32>
    %79 = vector.broadcast %78 : vector<1x128xf32> to vector<256x128xf32>
    %80 = arith.mulf %77, %79 : vector<256x128xf32>
    %81 = vector.shape_cast %57 : vector<128xf32> to vector<1x128xf32>
    %82 = vector.broadcast %81 : vector<1x128xf32> to vector<256x128xf32>
    %83 = arith.addf %80, %82 : vector<256x128xf32>
    %cst_31 = arith.constant 0.000000e+00 : f32
    %84 = vector.broadcast %cst_31 : f32 to vector<256x128xf32>
    %85 = arith.maximumf %83, %84 : vector<256x128xf32>
    %86 = arith.truncf %85 : vector<256x128xf32> to vector<256x128xbf16>
    %c1_32 = arith.constant 1 : index
    %c0_33 = arith.constant 0 : index
    %c0_34 = arith.constant 0 : index
    %87 = vector.load %arg4[%c1_32, %c0_33, %c0_34] : memref<2x128x128xbf16, #tpu.memory_space<vmem>>, vector<1x128x128xbf16>
    %88 = vector.shape_cast %87 : vector<1x128x128xbf16> to vector<128x128xbf16>
    %cst_35 = arith.constant dense<0.000000e+00> : vector<256x128xf32>
    %89 = tpu.matmul %86, %88, %cst_35 {dimension_numbers = #tpu.dot_dimension_numbers<[1], [0], [0], [1], [0, 0, 1, 1], [], []>} : vector<256x128xbf16>, vector<128x128xbf16>, vector<256x128xf32> -> vector<256x128xf32>
    %90 = arith.addf %51, %89 : vector<256x128xf32>
    %c1_36 = arith.constant 1 : index
    %c0_37 = arith.constant 0 : index
    %91 = vector.load %arg5[%c1_36, %c0_37] : memref<2x128xbf16, #tpu.memory_space<vmem>>, vector<1x128xbf16>
    %92 = vector.shape_cast %91 : vector<1x128xbf16> to vector<128xbf16>
    %93 = arith.extf %92 : vector<128xbf16> to vector<128xf32>
    %94 = vector.shape_cast %93 : vector<128xf32> to vector<1x128xf32>
    %95 = vector.broadcast %94 : vector<1x128xf32> to vector<256x128xf32>
    %96 = arith.addf %90, %95 : vector<256x128xf32>
    %c0_38 = arith.constant 0 : index
    %c0_39 = arith.constant 0 : index
    %97 = vector.load %arg8[%c0_38, %c0_39] : memref<1x128xbf16, #tpu.memory_space<vmem>>, vector<1x128xbf16>
    %98 = arith.extf %97 : vector<1x128xbf16> to vector<1x128xf32>
    %c0_40 = arith.constant 0 : index
    %c0_41 = arith.constant 0 : index
    %99 = vector.load %arg9[%c0_40, %c0_41] : memref<1x128xbf16, #tpu.memory_space<vmem>>, vector<1x128xbf16>
    %100 = arith.extf %99 : vector<1x128xbf16> to vector<1x128xf32>
    %cst_42 = arith.constant dense<0.000000e+00> : vector<256xf32>
    %101 = vector.multi_reduction <add>, %96, %cst_42 [1] : vector<256x128xf32> to vector<256xf32>
    %102 = vector.shape_cast %101 : vector<256xf32> to vector<256x1xf32>
    %cst_43 = arith.constant 0.010416667 : f32
    %103 = vector.broadcast %cst_43 : f32 to vector<256x1xf32>
    %104 = arith.mulf %102, %103 : vector<256x1xf32>
    %105 = arith.mulf %96, %96 : vector<256x128xf32>
    %cst_44 = arith.constant dense<0.000000e+00> : vector<256xf32>
    %106 = vector.multi_reduction <add>, %105, %cst_44 [1] : vector<256x128xf32> to vector<256xf32>
    %107 = vector.shape_cast %106 : vector<256xf32> to vector<256x1xf32>
    %cst_45 = arith.constant 0.010416667 : f32
    %108 = vector.broadcast %cst_45 : f32 to vector<256x1xf32>
    %109 = arith.mulf %107, %108 : vector<256x1xf32>
    %110 = arith.mulf %104, %104 : vector<256x1xf32>
    %111 = arith.subf %109, %110 : vector<256x1xf32>
    %cst_46 = arith.constant 0.000000e+00 : f32
    %112 = vector.broadcast %cst_46 : f32 to vector<256x1xf32>
    %113 = arith.maximumf %111, %112 : vector<256x1xf32>
    %114 = vector.broadcast %104 : vector<256x1xf32> to vector<256x128xf32>
    %115 = arith.subf %96, %114 : vector<256x128xf32>
    %cst_47 = arith.constant 9.99999974E-6 : f32
    %116 = vector.broadcast %cst_47 : f32 to vector<256x1xf32>
    %117 = arith.addf %113, %116 : vector<256x1xf32>
    %118 = math.rsqrt %117 : vector<256x1xf32>
    %119 = vector.broadcast %118 : vector<256x1xf32> to vector<256x128xf32>
    %120 = arith.mulf %115, %119 : vector<256x128xf32>
    %121 = vector.broadcast %98 : vector<1x128xf32> to vector<256x128xf32>
    %122 = arith.mulf %120, %121 : vector<256x128xf32>
    %123 = vector.broadcast %100 : vector<1x128xf32> to vector<256x128xf32>
    %124 = arith.addf %122, %123 : vector<256x128xf32>
    %cst_48 = arith.constant 0.000000e+00 : f32
    %125 = vector.broadcast %cst_48 : f32 to vector<256x128xf32>
    %126 = arith.maximumf %124, %125 : vector<256x128xf32>
    %127 = arith.truncf %126 : vector<256x128xf32> to vector<256x128xbf16>
    %c0_49 = arith.constant 0 : index
    %c0_50 = arith.constant 0 : index
    %128 = vector.load %arg10[%c0_49, %c0_50] : memref<128x128xbf16, #tpu.memory_space<vmem>>, vector<128x128xbf16>
    %cst_51 = arith.constant dense<0.000000e+00> : vector<256x128xf32>
    %129 = tpu.matmul %127, %128, %cst_51 {dimension_numbers = #tpu.dot_dimension_numbers<[1], [0], [0], [1], [0, 0, 1, 1], [], []>} : vector<256x128xbf16>, vector<128x128xbf16>, vector<256x128xf32> -> vector<256x128xf32>
    %c0_52 = arith.constant 0 : index
    %c0_53 = arith.constant 0 : index
    %130 = vector.load %arg11[%c0_52, %c0_53] : memref<1x128xbf16, #tpu.memory_space<vmem>>, vector<1x128xbf16>
    %131 = arith.extf %130 : vector<1x128xbf16> to vector<1x128xf32>
    %132 = vector.broadcast %131 : vector<1x128xf32> to vector<256x128xf32>
    %133 = arith.addf %129, %132 : vector<256x128xf32>
    %134 = arith.truncf %133 : vector<256x128xf32> to vector<256x128xbf16>
    %c0_54 = arith.constant 0 : index
    %c0_55 = arith.constant 0 : index
    %135 = vector.load %arg12[%c0_54, %c0_55] : memref<256x128xbf16, #tpu.memory_space<vmem>>, vector<256x128xbf16>
    tpu.vector_store %arg12[%c0_54, %c0_55], %134 {strides = array<i32>} : memref<256x128xbf16, #tpu.memory_space<vmem>>, vector<256x128xbf16>,
    return
  }
  func.func @transform_0(%arg0: i32) -> (i32, i32) {
    %c0_i32 = arith.constant 0 : i32
    %c0_i32_0 = arith.constant 0 : i32
    return %arg0, %c0_i32 : i32, i32
  }
  func.func @transform_1(%arg0: i32) -> (i32, i32) {
    %c0_i32 = arith.constant 0 : i32
    %c0_i32_0 = arith.constant 0 : i32
    %c0_i32_1 = arith.constant 0 : i32
    return %c0_i32, %c0_i32_0 : i32, i32
  }
  func.func @transform_2(%arg0: i32) -> (i32, i32) {
    %c0_i32 = arith.constant 0 : i32
    %c0_i32_0 = arith.constant 0 : i32
    %c0_i32_1 = arith.constant 0 : i32
    return %c0_i32, %c0_i32_0 : i32, i32
  }
  func.func @transform_3(%arg0: i32) -> (i32, i32, i32) {
    %c0_i32 = arith.constant 0 : i32
    %c0_i32_0 = arith.constant 0 : i32
    %c0_i32_1 = arith.constant 0 : i32
    %c0_i32_2 = arith.constant 0 : i32
    return %c0_i32, %c0_i32_0, %c0_i32_1 : i32, i32, i32
  }
  func.func @transform_4(%arg0: i32) -> (i32, i32) {
    %c0_i32 = arith.constant 0 : i32
    %c0_i32_0 = arith.constant 0 : i32
    %c0_i32_1 = arith.constant 0 : i32
    return %c0_i32, %c0_i32_0 : i32, i32
  }
  func.func @transform_5(%arg0: i32) -> (i32, i32) {
    %c0_i32 = arith.constant 0 : i32
    %c0_i32_0 = arith.constant 0 : i32
    %c0_i32_1 = arith.constant 0 : i32
    return %c0_i32, %c0_i32_0 : i32, i32
  }
  func.func @transform_6(%arg0: i32) -> (i32, i32) {
    %c0_i32 = arith.constant 0 : i32
    %c0_i32_0 = arith.constant 0 : i32
    %c0_i32_1 = arith.constant 0 : i32
    return %c0_i32, %c0_i32_0 : i32, i32
  }
  func.func @transform_7(%arg0: i32) -> (i32, i32) {
    %c0_i32 = arith.constant 0 : i32
    %c0_i32_0 = arith.constant 0 : i32
    %c0_i32_1 = arith.constant 0 : i32
    return %c0_i32, %c0_i32_0 : i32, i32
  }
  func.func @transform_8(%arg0: i32) -> (i32, i32) {
    %c0_i32 = arith.constant 0 : i32
    %c0_i32_0 = arith.constant 0 : i32
    %c0_i32_1 = arith.constant 0 : i32
    return %c0_i32, %c0_i32_0 : i32, i32
  }
  func.func @transform_9(%arg0: i32) -> (i32, i32) {
    %c0_i32 = arith.constant 0 : i32
    %c0_i32_0 = arith.constant 0 : i32
    %c0_i32_1 = arith.constant 0 : i32
    return %c0_i32, %c0_i32_0 : i32, i32
  }
  func.func @transform_10(%arg0: i32) -> (i32, i32) {
    %c0_i32 = arith.constant 0 : i32
    %c0_i32_0 = arith.constant 0 : i32
    %c0_i32_1 = arith.constant 0 : i32
    return %c0_i32, %c0_i32_0 : i32, i32
  }
  func.func @transform_11(%arg0: i32) -> (i32, i32) {
    %c0_i32 = arith.constant 0 : i32
    %c0_i32_0 = arith.constant 0 : i32
    return %arg0, %c0_i32 : i32, i32
  }
}

</mosaic_0001>

<llo_original>
// kernel: tpu_custom_call.1
$region0: #{tpu_custom_call.1}
  #allocation0 [shape = 'u32[]', space=smem, size = 0x4, offset = 0x4, fixed_abs, tag = 'smem constant byte address 0x4 - core index']
  #allocation1 [shape = 'u32[144,128]{1,0:T(1,128)}', space=vmem, size = 0x12000, scoped, tag = 'internal scratch']
  %s0 = inlined_call_operand.hbm [shape: bf16[512,128], index: 0, kind: input, shape index: {}]
  %s1 = inlined_call_operand.hbm [shape: bf16[128,128], index: 1, kind: input, shape index: {}]
  %s2 = inlined_call_operand.vmem [shape: bf16[1,128], index: 2, kind: input, shape index: {}]
  %s3 = inlined_call_operand.hbm [shape: bf16[2,128,128], index: 3, kind: input, shape index: {}]
  %s4 = inlined_call_operand.vmem [shape: bf16[2,128], index: 4, kind: input, shape index: {}]
  %s5 = inlined_call_operand.vmem [shape: bf16[2,128], index: 5, kind: input, shape index: {}]
  %s6 = inlined_call_operand.vmem [shape: bf16[2,128], index: 6, kind: input, shape index: {}]
  %s7 = inlined_call_operand.vmem [shape: bf16[1,128], index: 7, kind: input, shape index: {}]
  %s8 = inlined_call_operand.vmem [shape: bf16[1,128], index: 8, kind: input, shape index: {}]
  %s9 = inlined_call_operand.hbm [shape: bf16[128,128], index: 9, kind: input, shape index: {}]
  %s10 = inlined_call_operand.vmem [shape: bf16[1,128], index: 10, kind: input, shape index: {}]
  %s11 = inlined_call_operand.hbm [shape: bf16[512,128], index: 11, kind: output, shape index: {}]
  %s12 = sld [smem:[#allocation0]]
  $region93: #{tpu_custom_call.1} parent=0
    _
  %s14 = ssub.s32 1, %s12
  %s15 = scalar_select 0, %s14, %s12
  $region1: #{tpu_custom_call.1} parent=0
    #allocation2 [shape = 'u8[131072]{0}', space=vmem, size = 0x20000, scoped, tag = 'input window, operand 0']
    #allocation3 [shape = 's32[2]{0}', space=sflag, size = 0x8, scoped, tag = 'scoped memory for tpu_custom_call.1']
    #allocation4 [shape = 's32[2]{0}', space=sflag, size = 0x8, scoped, tag = 'scoped memory for tpu_custom_call.1']
    #allocation5 [shape = 'u8[32768]{0}', space=vmem, size = 0x8000, scoped, tag = 'input window, operand 1, single buffered']
    #allocation6 [shape = 's32[1]{0}', space=sflag, size = 0x4, scoped, tag = 'scoped memory for tpu_custom_call.1']
    #allocation7 [shape = 'u8[65536]{0}', space=vmem, size = 0x10000, scoped, tag = 'input window, operand 3, single buffered']
    #allocation8 [shape = 'u8[32768]{0}', space=vmem, size = 0x8000, scoped, tag = 'input window, operand 9, single buffered']
    #allocation9 [shape = 's32[1]{0}', space=sflag, size = 0x4, scoped, tag = 'scoped memory for tpu_custom_call.1']
    #allocation10 [shape = 'u8[131072]{0}', space=vmem, size = 0x20000, scoped, tag = 'output window, operand 0']
    %16 = vsyncpa [#allocation3], 0
    %s17 = scalar_lea.sflag [#allocation3], 1
    %18 = vsyncpa %s17, 0
    %19 = vsyncpa [#allocation6], 0
    %20 = vsyncpa [#allocation9], 0
    %21 = vsyncpa [#allocation4], 0
    %s22 = scalar_lea.sflag [#allocation4], 1
    %23 = vsyncpa %s22, 0
    loop: start=0, step=1, limit=4
    $region2: #{tpu_custom_call.1} parent=1 // loop_pre_header
      _
    $region3: #{tpu_custom_call.1} parent=1 // loop_header
      %s25 = sphi 0, %s29
      %p26 = scmp.ge.s32.totalorder %s25, 4
      %s35 = sphi 0, %s37
      %s38 = sphi 0, %s35
      %s39 = sphi 0, %s38
      %s55 = sphi 0, %s39
      %s59 = sphi 0, %s59
      %s61 = sphi 0, %s59
      %s62 = sphi 0, %s61
      %s76 = sphi 0, %s62
      %s80 = sphi 0, %s80
      %s82 = sphi 0, %s80
      %s83 = sphi 0, %s82
      %s97 = sphi 0, %s83
      %s101 = sphi 0, %s101
      %s103 = sphi 0, %s101
      %s104 = sphi 0, %s103
      %s118 = sphi 0, %s104
      %s122 = sphi 0, %s122
      %s124 = sphi 0, %s122
      %s125 = sphi 0, %s124
      %s139 = sphi 0, %s125
      %s143 = sphi 0, %s143
      %s145 = sphi 0, %s143
      %s146 = sphi 0, %s145
      %s160 = sphi 0, %s146
      %s164 = sphi 0, %s164
      %s166 = sphi 0, %s164
      %s167 = sphi 0, %s166
      %s181 = sphi 0, %s167
      %s185 = sphi 0, %s185
      %s187 = sphi 0, %s185
      %s188 = sphi 0, %s187
      %s202 = sphi 0, %s188
      %s206 = sphi 0, %s206
      %s208 = sphi 0, %s206
      %s209 = sphi 0, %s208
      %s223 = sphi 0, %s209
      %s227 = sphi 0, %s227
      %s229 = sphi 0, %s227
      %s230 = sphi 0, %s229
      %s244 = sphi 0, %s230
      %s248 = sphi 0, %s248
      %s250 = sphi 0, %s248
      %s251 = sphi 0, %s250
      %s265 = sphi 0, %s251
      %s271 = sphi 0, %s273
      %s274 = sphi 0, %s271
      %s275 = sphi 0, %s274
      %s291 = sphi 0, %s275
    $region4: #{tpu_custom_call.1} parent=1 // loop_header_branch
      %28 = sbr.rel (%p26) target = $region8
    $region5: #{tpu_custom_call.1} parent=1 // loop_body
      %s30 = ssub.s32 %s25, 1
      %s31 = ssub.s32 %s25, 2
      %s32 = sadd.s32 %s25, 1
      %s33 = ssub.s32 %s25, %s32
      %p34 = scmp.eq.s32.totalorder %s33, 0
      %s36 = sadd.s32 %s35, 1
      %s37 = scalar_select %p34, %s35, %s36
      %p40 = pneg %p34
      %p41 = scmp.eq.s32.totalorder %s25, 1
      %p42 = por %p40, %p41
      %p43 = scmp.ne.s32.totalorder %s35, %s38
      %p44 = scmp.eq.s32.totalorder %s25, 0
      %p45 = por %p43, %p44
      %p46 = scmp.ne.s32.totalorder %s35, %s38
      %p47 = scmp.eq.s32.totalorder %s30, 1
      %p48 = por %p46, %p47
      %p49 = scmp.ne.s32.totalorder %s38, %s39
      %p50 = scmp.eq.s32.totalorder %s30, 0
      %p51 = por %p49, %p50
      %p52 = scmp.ne.s32.totalorder %s38, %s39
      %p53 = scmp.eq.s32.totalorder %s31, 1
      %p54 = por %p52, %p53
      %p56 = scmp.ne.s32.totalorder %s39, %s55
      %p57 = scmp.eq.s32.totalorder %s31, 0
      %p58 = por %p56, %p57
      %s60 = sadd.s32 %s59, 1
      %p63 = scmp.eq.s32.totalorder %s25, 1
      %p64 = scmp.ne.s32.totalorder %s59, %s61
      %p65 = scmp.eq.s32.totalorder %s25, 0
      %p66 = por %p64, %p65
      %p67 = scmp.ne.s32.totalorder %s59, %s61
      %p68 = scmp.eq.s32.totalorder %s30, 1
      %p69 = por %p67, %p68
      %p70 = scmp.ne.s32.totalorder %s61, %s62
      %p71 = scmp.eq.s32.totalorder %s30, 0
      %p72 = por %p70, %p71
      %p73 = scmp.ne.s32.totalorder %s61, %s62
      %p74 = scmp.eq.s32.totalorder %s31, 1
      %p75 = por %p73, %p74
      %p77 = scmp.ne.s32.totalorder %s62, %s76
      %p78 = scmp.eq.s32.totalorder %s31, 0
      %p79 = por %p77, %p78
      %s81 = sadd.s32 %s80, 1
      %p84 = scmp.eq.s32.totalorder %s25, 1
      %p85 = scmp.ne.s32.totalorder %s80, %s82
      %p86 = scmp.eq.s32.totalorder %s25, 0
      %p87 = por %p85, %p86
      %p88 = scmp.ne.s32.totalorder %s80, %s82
      %p89 = scmp.eq.s32.totalorder %s30, 1
      %p90 = por %p88, %p89
      %p91 = scmp.ne.s32.totalorder %s82, %s83
      %p92 = scmp.eq.s32.totalorder %s30, 0
      %p93 = por %p91, %p92
      %p94 = scmp.ne.s32.totalorder %s82, %s83
      %p95 = scmp.eq.s32.totalorder %s31, 1
      %p96 = por %p94, %p95
      %p98 = scmp.ne.s32.totalorder %s83, %s97
      %p99 = scmp.eq.s32.totalorder %s31, 0
      %p100 = por %p98, %p99
      %s102 = sadd.s32 %s101, 1
      %p105 = scmp.eq.s32.totalorder %s25, 1
      %p106 = scmp.ne.s32.totalorder %s101, %s103
      %p107 = scmp.eq.s32.totalorder %s25, 0
      %p108 = por %p106, %p107
      %p109 = scmp.ne.s32.totalorder %s101, %s103
      %p110 = scmp.eq.s32.totalorder %s30, 1
      %p111 = por %p109, %p110
      %p112 = scmp.ne.s32.totalorder %s103, %s104
      %p113 = scmp.eq.s32.totalorder %s30, 0
      %p114 = por %p112, %p113
      %p115 = scmp.ne.s32.totalorder %s103, %s104
      %p116 = scmp.eq.s32.totalorder %s31, 1
      %p117 = por %p115, %p116
      %p119 = scmp.ne.s32.totalorder %s104, %s118
      %p120 = scmp.eq.s32.totalorder %s31, 0
      %p121 = por %p119, %p120
      %s123 = sadd.s32 %s122, 1
      %p126 = scmp.eq.s32.totalorder %s25, 1
      %p127 = scmp.ne.s32.totalorder %s122, %s124
      %p128 = scmp.eq.s32.totalorder %s25, 0
      %p129 = por %p127, %p128
      %p130 = scmp.ne.s32.totalorder %s122, %s124
      %p131 = scmp.eq.s32.totalorder %s30, 1
      %p132 = por %p130, %p131
      %p133 = scmp.ne.s32.totalorder %s124, %s125
      %p134 = scmp.eq.s32.totalorder %s30, 0
      %p135 = por %p133, %p134
      %p136 = scmp.ne.s32.totalorder %s124, %s125
      %p137 = scmp.eq.s32.totalorder %s31, 1
      %p138 = por %p136, %p137
      %p140 = scmp.ne.s32.totalorder %s125, %s139
      %p141 = scmp.eq.s32.totalorder %s31, 0
      %p142 = por %p140, %p141
      %s144 = sadd.s32 %s143, 1
      %p147 = scmp.eq.s32.totalorder %s25, 1
      %p148 = scmp.ne.s32.totalorder %s143, %s145
      %p149 = scmp.eq.s32.totalorder %s25, 0
      %p150 = por %p148, %p149
      %p151 = scmp.ne.s32.totalorder %s143, %s145
      %p152 = scmp.eq.s32.totalorder %s30, 1
      %p153 = por %p151, %p152
      %p154 = scmp.ne.s32.totalorder %s145, %s146
      %p155 = scmp.eq.s32.totalorder %s30, 0
      %p156 = por %p154, %p155
      %p157 = scmp.ne.s32.totalorder %s145, %s146
      %p158 = scmp.eq.s32.totalorder %s31, 1
      %p159 = por %p157, %p158
      %p161 = scmp.ne.s32.totalorder %s146, %s160
      %p162 = scmp.eq.s32.totalorder %s31, 0
      %p163 = por %p161, %p162
      %s165 = sadd.s32 %s164, 1
      %p168 = scmp.eq.s32.totalorder %s25, 1
      %p169 = scmp.ne.s32.totalorder %s164, %s166
      %p170 = scmp.eq.s32.totalorder %s25, 0
      %p171 = por %p169, %p170
      %p172 = scmp.ne.s32.totalorder %s164, %s166
      %p173 = scmp.eq.s32.totalorder %s30, 1
      %p174 = por %p172, %p173
      %p175 = scmp.ne.s32.totalorder %s166, %s167
      %p176 = scmp.eq.s32.totalorder %s30, 0
      %p177 = por %p175, %p176
      %p178 = scmp.ne.s32.totalorder %s166, %s167
      %p179 = scmp.eq.s32.totalorder %s31, 1
      %p180 = por %p178, %p179
      %p182 = scmp.ne.s32.totalorder %s167, %s181
      %p183 = scmp.eq.s32.totalorder %s31, 0
      %p184 = por %p182, %p183
      %s186 = sadd.s32 %s185, 1
      %p189 = scmp.eq.s32.totalorder %s25, 1
      %p190 = scmp.ne.s32.totalorder %s185, %s187
      %p191 = scmp.eq.s32.totalorder %s25, 0
      %p192 = por %p190, %p191
      %p193 = scmp.ne.s32.totalorder %s185, %s187
      %p194 = scmp.eq.s32.totalorder %s30, 1
      %p195 = por %p193, %p194
      %p196 = scmp.ne.s32.totalorder %s187, %s188
      %p197 = scmp.eq.s32.totalorder %s30, 0
      %p198 = por %p196, %p197
      %p199 = scmp.ne.s32.totalorder %s187, %s188
      %p200 = scmp.eq.s32.totalorder %s31, 1
      %p201 = por %p199, %p200
      %p203 = scmp.ne.s32.totalorder %s188, %s202
      %p204 = scmp.eq.s32.totalorder %s31, 0
      %p205 = por %p203, %p204
      %s207 = sadd.s32 %s206, 1
      %p210 = scmp.eq.s32.totalorder %s25, 1
      %p211 = scmp.ne.s32.totalorder %s206, %s208
      %p212 = scmp.eq.s32.totalorder %s25, 0
      %p213 = por %p211, %p212
      %p214 = scmp.ne.s32.totalorder %s206, %s208
      %p215 = scmp.eq.s32.totalorder %s30, 1
      %p216 = por %p214, %p215
      %p217 = scmp.ne.s32.totalorder %s208, %s209
      %p218 = scmp.eq.s32.totalorder %s30, 0
      %p219 = por %p217, %p218
      %p220 = scmp.ne.s32.totalorder %s208, %s209
      %p221 = scmp.eq.s32.totalorder %s31, 1
      %p222 = por %p220, %p221
      %p224 = scmp.ne.s32.totalorder %s209, %s223
      %p225 = scmp.eq.s32.totalorder %s31, 0
      %p226 = por %p224, %p225
      %s228 = sadd.s32 %s227, 1
      %p231 = scmp.eq.s32.totalorder %s25, 1
      %p232 = scmp.ne.s32.totalorder %s227, %s229
      %p233 = scmp.eq.s32.totalorder %s25, 0
      %p234 = por %p232, %p233
      %p235 = scmp.ne.s32.totalorder %s227, %s229
      %p236 = scmp.eq.s32.totalorder %s30, 1
      %p237 = por %p235, %p236
      %p238 = scmp.ne.s32.totalorder %s229, %s230
      %p239 = scmp.eq.s32.totalorder %s30, 0
      %p240 = por %p238, %p239
      %p241 = scmp.ne.s32.totalorder %s229, %s230
      %p242 = scmp.eq.s32.totalorder %s31, 1
      %p243 = por %p241, %p242
      %p245 = scmp.ne.s32.totalorder %s230, %s244
      %p246 = scmp.eq.s32.totalorder %s31, 0
      %p247 = por %p245, %p246
      %s249 = sadd.s32 %s248, 1
      %p252 = scmp.eq.s32.totalorder %s25, 1
      %p253 = scmp.ne.s32.totalorder %s248, %s250
      %p254 = scmp.eq.s32.totalorder %s25, 0
      %p255 = por %p253, %p254
      %p256 = scmp.ne.s32.totalorder %s248, %s250
      %p257 = scmp.eq.s32.totalorder %s30, 1
      %p258 = por %p256, %p257
      %p259 = scmp.ne.s32.totalorder %s250, %s251
      %p260 = scmp.eq.s32.totalorder %s30, 0
      %p261 = por %p259, %p260
      %p262 = scmp.ne.s32.totalorder %s250, %s251
      %p263 = scmp.eq.s32.totalorder %s31, 1
      %p264 = por %p262, %p263
      %p266 = scmp.ne.s32.totalorder %s251, %s265
      %p267 = scmp.eq.s32.totalorder %s31, 0
      %p268 = por %p266, %p267
      %s269 = ssub.s32 %s25, %s32
      %p270 = scmp.eq.s32.totalorder %s269, 0
      %s272 = sadd.s32 %s271, 1
      %s273 = scalar_select %p270, %s271, %s272
      %p276 = pneg %p270
      %p277 = scmp.eq.s32.totalorder %s25, 1
      %p278 = por %p276, %p277
      %p279 = scmp.ne.s32.totalorder %s271, %s274
      %p280 = scmp.eq.s32.totalorder %s25, 0
      %p281 = por %p279, %p280
      %p282 = scmp.ne.s32.totalorder %s271, %s274
      %p283 = scmp.eq.s32.totalorder %s30, 1
      %p284 = por %p282, %p283
      %p285 = scmp.ne.s32.totalorder %s274, %s275
      %p286 = scmp.eq.s32.totalorder %s30, 0
      %p287 = por %p285, %p286
      %p288 = scmp.ne.s32.totalorder %s274, %s275
      %p289 = scmp.eq.s32.totalorder %s31, 1
      %p290 = por %p288, %p289
      %p292 = scmp.ne.s32.totalorder %s275, %s291
      %p293 = scmp.eq.s32.totalorder %s31, 0
      %p294 = por %p292, %p293
      %p295 = scmp.le.s32.totalorder 1, %s25
      %p296 = scmp.lt.s32.totalorder %s25, 3
      %p297 = pnand %p295, %p296
      %p298 = pneg %p297
      // Predicated region
      $region9: #{tpu_custom_call.1} parent=5 // pred_check
        _
      $region10: #{tpu_custom_call.1} parent=5 // pred_check_branch
        %300 = sbr.rel (%p297) target = $region12
      $region11: #{tpu_custom_call.1} parent=5 // pred_region
        %s301 = ssub.s32 %s25, 1
        // Predicated region
        $region13: #{tpu_custom_call.1} parent=11 // pred_check
          %p302 = pneg %p72
        $region14: #{tpu_custom_call.1} parent=11 // pred_check_branch
          %304 = sbr.rel (%p302) target = $region16
        $region15: #{tpu_custom_call.1} parent=11 // pred_region
          %s306 = ssub.s32 1024, 1024
          %307 = vsyncadd [#allocation6], %s306
          %s308 = sshll.u32 [#allocation5], 4
          %s309 = int_to_ptr.vmem [resolvable:$true] %s308
          %314 = dma.hbm_to_vmem [thread:$0]  %s1, 1024, %s309, [#allocation6], 64, 64, 4
        $region16: #{tpu_custom_call.1} parent=11 // pred_fallthru
          _
        // Predicated region
        $region17: #{tpu_custom_call.1} parent=11 // pred_check
          %p315 = pneg %p93
        $region18: #{tpu_custom_call.1} parent=11 // pred_check_branch
          %317 = sbr.rel (%p315) target = $region20
        $region19: #{tpu_custom_call.1} parent=11 // pred_region
          _
        $region20: #{tpu_custom_call.1} parent=11 // pred_fallthru
          _
        // Predicated region
        $region21: #{tpu_custom_call.1} parent=11 // pred_check
          %p318 = pneg %p114
        $region22: #{tpu_custom_call.1} parent=11 // pred_check_branch
          %320 = sbr.rel (%p318) target = $region24
        $region23: #{tpu_custom_call.1} parent=11 // pred_region
          %s322 = ssub.s32 2048, 2048
          %323 = vsyncadd [#allocation6], %s322
          %s324 = sshll.u32 [#allocation7], 4
          %s325 = int_to_ptr.vmem [resolvable:$true] %s324
          %330 = dma.hbm_to_vmem [thread:$0]  %s3, 2048, %s325, [#allocation6], 64, 64, 4
        $region24: #{tpu_custom_call.1} parent=11 // pred_fallthru
          _
        // Predicated region
        $region25: #{tpu_custom_call.1} parent=11 // pred_check
          %p331 = pneg %p135
        $region26: #{tpu_custom_call.1} parent=11 // pred_check_branch
          %333 = sbr.rel (%p331) target = $region28
        $region27: #{tpu_custom_call.1} parent=11 // pred_region
          _
        $region28: #{tpu_custom_call.1} parent=11 // pred_fallthru
          _
        // Predicated region
        $region29: #{tpu_custom_call.1} parent=11 // pred_check
          %p334 = pneg %p156
        $region30: #{tpu_custom_call.1} parent=11 // pred_check_branch
          %336 = sbr.rel (%p334) target = $region32
        $region31: #{tpu_custom_call.1} parent=11 // pred_region
          _
        $region32: #{tpu_custom_call.1} parent=11 // pred_fallthru
          _
        // Predicated region
        $region33: #{tpu_custom_call.1} parent=11 // pred_check
          %p337 = pneg %p177
        $region34: #{tpu_custom_call.1} parent=11 // pred_check_branch
          %339 = sbr.rel (%p337) target = $region36
        $region35: #{tpu_custom_call.1} parent=11 // pred_region
          _
        $region36: #{tpu_custom_call.1} parent=11 // pred_fallthru
          _
        // Predicated region
        $region37: #{tpu_custom_call.1} parent=11 // pred_check
          %p340 = pneg %p198
        $region38: #{tpu_custom_call.1} parent=11 // pred_check_branch
          %342 = sbr.rel (%p340) target = $region40
        $region39: #{tpu_custom_call.1} parent=11 // pred_region
          _
        $region40: #{tpu_custom_call.1} parent=11 // pred_fallthru
          _
        // Predicated region
        $region41: #{tpu_custom_call.1} parent=11 // pred_check
          %p343 = pneg %p219
        $region42: #{tpu_custom_call.1} parent=11 // pred_check_branch
          %345 = sbr.rel (%p343) target = $region44
        $region43: #{tpu_custom_call.1} parent=11 // pred_region
          _
        $region44: #{tpu_custom_call.1} parent=11 // pred_fallthru
          _
        // Predicated region
        $region45: #{tpu_custom_call.1} parent=11 // pred_check
          %p346 = pneg %p240
        $region46: #{tpu_custom_call.1} parent=11 // pred_check_branch
          %348 = sbr.rel (%p346) target = $region48
        $region47: #{tpu_custom_call.1} parent=11 // pred_region
          %s350 = ssub.s32 1024, 1024
          %351 = vsyncadd [#allocation9], %s350
          %s352 = sshll.u32 [#allocation8], 4
          %s353 = int_to_ptr.vmem [resolvable:$true] %s352
          %358 = dma.hbm_to_vmem [thread:$0]  %s9, 1024, %s353, [#allocation9], 64, 64, 4
        $region48: #{tpu_custom_call.1} parent=11 // pred_fallthru
          _
        // Predicated region
        $region49: #{tpu_custom_call.1} parent=11 // pred_check
          %p359 = pneg %p261
        $region50: #{tpu_custom_call.1} parent=11 // pred_check_branch
          %361 = sbr.rel (%p359) target = $region52
        $region51: #{tpu_custom_call.1} parent=11 // pred_region
          _
        $region52: #{tpu_custom_call.1} parent=11 // pred_fallthru
          _
      $region12: #{tpu_custom_call.1} parent=5 // pred_fallthru
        _
      %p362 = scmp.lt.s32.totalorder %s25, 2
      // Predicated region
      $region53: #{tpu_custom_call.1} parent=5 // pred_check
        %p363 = pneg %p362
      $region54: #{tpu_custom_call.1} parent=5 // pred_check_branch
        %365 = sbr.rel (%p363) target = $region56
      $region55: #{tpu_custom_call.1} parent=5 // pred_region
        // Predicated region
        $region57: #{tpu_custom_call.1} parent=55 // pred_check
          %p366 = pneg %p45
        $region58: #{tpu_custom_call.1} parent=55 // pred_check_branch
          %368 = sbr.rel (%p366) target = $region60
        $region59: #{tpu_custom_call.1} parent=55 // pred_region
          %s369 = sand.u32 %s35, 1
          %s370 = scalar_lea.sflag [#allocation3], %s369
          %s371 = sand.u32 %s35, 1
          %s372 = smul.addr %s371, 128
          %s373 = scalar_lea.vmem [#allocation2], %s372
          %s374 = smul.u32 32, %s25
          %s376 = ssub.s32 2048, 2048
          %377 = vsyncadd %s370, %s376
          %s378 = smul.addr %s374, 64
          %s379 = scalar_lea.hbm %s0, %s378
          %s380 = sshll.u32 %s373, 4
          %s381 = int_to_ptr.vmem [resolvable:$true] %s380
          %386 = dma.hbm_to_vmem [thread:$0]  %s379, 2048, %s381, %s370, 64, 64, 4
        $region60: #{tpu_custom_call.1} parent=55 // pred_fallthru
          _
      $region56: #{tpu_custom_call.1} parent=5 // pred_fallthru
        _
      %p387 = scmp.le.s32.totalorder 1, %s25
      %p388 = scmp.lt.s32.totalorder %s25, 3
      %p389 = pnand %p387, %p388
      %p390 = pneg %p389
      // Predicated region
      $region61: #{tpu_custom_call.1} parent=5 // pred_check
        _
      $region62: #{tpu_custom_call.1} parent=5 // pred_check_branch
        %392 = sbr.rel (%p389) target = $region64
      $region63: #{tpu_custom_call.1} parent=5 // pred_region
        %s393 = ssub.s32 %s25, 1
        %s394 = sand.u32 %s38, 1
        %s395 = scalar_lea.sflag [#allocation3], %s394
        %s396 = sand.u32 %s38, 1
        %s397 = smul.addr %s396, 128
        %s398 = scalar_lea.vmem [#allocation2], %s397
        // Predicated region
        $region65: #{tpu_custom_call.1} parent=63 // pred_check
          %p399 = pneg %p51
        $region66: #{tpu_custom_call.1} parent=63 // pred_check_branch
          %401 = sbr.rel (%p399) target = $region68
        $region67: #{tpu_custom_call.1} parent=63 // pred_region
          %402 = dma.done %s395, 2048
        $region68: #{tpu_custom_call.1} parent=63 // pred_fallthru
          _
        // Predicated region
        $region69: #{tpu_custom_call.1} parent=63 // pred_check
          %p403 = pneg %p72
        $region70: #{tpu_custom_call.1} parent=63 // pred_check_branch
          %405 = sbr.rel (%p403) target = $region72
        $region71: #{tpu_custom_call.1} parent=63 // pred_region
          %406 = dma.done [#allocation6], 1024
        $region72: #{tpu_custom_call.1} parent=63 // pred_fallthru
          _
        // Predicated region
        $region73: #{tpu_custom_call.1} parent=63 // pred_check
          %p407 = pneg %p114
        $region74: #{tpu_custom_call.1} parent=63 // pred_check_branch
          %409 = sbr.rel (%p407) target = $region76
        $region75: #{tpu_custom_call.1} parent=63 // pred_region
          %410 = dma.done [#allocation6], 2048
        $region76: #{tpu_custom_call.1} parent=63 // pred_fallthru
          _
        // Predicated region
        $region77: #{tpu_custom_call.1} parent=63 // pred_check
          %p411 = pneg %p240
        $region78: #{tpu_custom_call.1} parent=63 // pred_check_branch
          %413 = sbr.rel (%p411) target = $region80
        $region79: #{tpu_custom_call.1} parent=63 // pred_region
          %414 = dma.done [#allocation9], 1024
        $region80: #{tpu_custom_call.1} parent=63 // pred_fallthru
          _
        %s415 = sand.u32 %s38, 1
        %s416 = scalar_lea.sflag [#allocation3], %s415
        %s417 = sand.u32 %s38, 1
        %s418 = smul.addr %s417, 128
        %s419 = scalar_lea.vmem [#allocation2], %s418
        %p420 = pneg %p51
        %p421 = pneg %p48
        %p422 = pneg %p72
        %p423 = pneg %p69
        %p424 = pneg %p93
        %p425 = pneg %p90
        %p426 = pneg %p114
        %p427 = pneg %p111
        %p428 = pneg %p135
        %p429 = pneg %p132
        %p430 = pneg %p156
        %p431 = pneg %p153
        %p432 = pneg %p177
        %p433 = pneg %p174
        %p434 = pneg %p198
        %p435 = pneg %p195
        %p436 = pneg %p219
        %p437 = pneg %p216
        %p438 = pneg %p240
        %p439 = pneg %p237
        %p440 = pneg %p261
        %p441 = pneg %p258
        %p442 = pneg %p287
        %p443 = pneg %p284
        %s444 = sand.u32 %s274, 1
        %s445 = scalar_lea.sflag [#allocation4], %s444
        %s446 = sand.u32 %s274, 1
        %s447 = smul.addr %s446, 128
        %s448 = scalar_lea.vmem [#allocation10], %s447
        %s449 = smul.u32 32, %s30
        %s450 = smul.u32 32, %s30
        %v452 = vld [vmem:[%s398] sm:$0xf]
        %v453 = vld [vmem:[%s398 + $0x4] sm:$0xf]
        %v454 = vld [vmem:[%s398 + $0x8] sm:$0xf]
        %v455 = vld [vmem:[%s398 + $0xc] sm:$0xf]
        %v456 = vld [vmem:[%s398 + $0x10] sm:$0xf]
        %v457 = vld [vmem:[%s398 + $0x14] sm:$0xf]
        %v458 = vld [vmem:[%s398 + $0x18] sm:$0xf]
        %v459 = vld [vmem:[%s398 + $0x1c] sm:$0xf]
        %v460 = vld [vmem:[%s398 + $0x20] sm:$0xf]
        %v461 = vld [vmem:[%s398 + $0x24] sm:$0xf]
        %v462 = vld [vmem:[%s398 + $0x28] sm:$0xf]
        %v463 = vld [vmem:[%s398 + $0x2c] sm:$0xf]
        %v464 = vld [vmem:[%s398 + $0x30] sm:$0xf]
        %v465 = vld [vmem:[%s398 + $0x34] sm:$0xf]
        %v466 = vld [vmem:[%s398 + $0x38] sm:$0xf]
        %v467 = vld [vmem:[%s398 + $0x3c] sm:$0xf]
        %v468 = vld [vmem:[%s398 + $0x40] sm:$0xf]
        %v469 = vld [vmem:[%s398 + $0x44] sm:$0xf]
        %v470 = vld [vmem:[%s398 + $0x48] sm:$0xf]
        %v471 = vld [vmem:[%s398 + $0x4c] sm:$0xf]
        %v472 = vld [vmem:[%s398 + $0x50] sm:$0xf]
        %v473 = vld [vmem:[%s398 + $0x54] sm:$0xf]
        %v474 = vld [vmem:[%s398 + $0x58] sm:$0xf]
        %v475 = vld [vmem:[%s398 + $0x5c] sm:$0xf]
        %v476 = vld [vmem:[%s398 + $0x60] sm:$0xf]
        %v477 = vld [vmem:[%s398 + $0x64] sm:$0xf]
        %v478 = vld [vmem:[%s398 + $0x68] sm:$0xf]
        %v479 = vld [vmem:[%s398 + $0x6c] sm:$0xf]
        %v480 = vld [vmem:[%s398 + $0x70] sm:$0xf]
        %v481 = vld [vmem:[%s398 + $0x74] sm:$0xf]
        %v482 = vld [vmem:[%s398 + $0x78] sm:$0xf]
        %v483 = vld [vmem:[%s398 + $0x7c] sm:$0xf]
        %v484 = vld [vmem:[#allocation5] sm:$0xf]
        %v485 = vld [vmem:[#allocation5 + $0x4] sm:$0xf]
        %v486 = vld [vmem:[#allocation5 + $0x8] sm:$0xf]
        %v487 = vld [vmem:[#allocation5 + $0xc] sm:$0xf]
        %v488 = vld [vmem:[#allocation5 + $0x10] sm:$0xf]
        %v489 = vld [vmem:[#allocation5 + $0x14] sm:$0xf]
        %v490 = vld [vmem:[#allocation5 + $0x18] sm:$0xf]
        %v491 = vld [vmem:[#allocation5 + $0x1c] sm:$0xf]
        %v492 = vld [vmem:[#allocation5 + $0x20] sm:$0xf]
        %v493 = vld [vmem:[#allocation5 + $0x24] sm:$0xf]
        %v494 = vld [vmem:[#allocation5 + $0x28] sm:$0xf]
        %v495 = vld [vmem:[#allocation5 + $0x2c] sm:$0xf]
        %v496 = vld [vmem:[#allocation5 + $0x30] sm:$0xf]
        %v497 = vld [vmem:[#allocation5 + $0x34] sm:$0xf]
        %v498 = vld [vmem:[#allocation5 + $0x38] sm:$0xf]
        %v499 = vld [vmem:[#allocation5 + $0x3c] sm:$0xf]
        %v500 = vld [vmem:[%s2] sm:$0x1]
        %v501 = vunpack.c.l.bf16 %v500
        %v502 = vlaneseq
        %v503 = vshrl.u32 %v502, 7
        %v504 = vsub.s32 0, %v503
        %v505 = vrot.slane %v501, %v504
        %v538 = vunpack.c.l.b16 %v452
        %v539 = vunpack.c.l.b16 %v453
        %v540 = vunpack.c.l.b16 %v454
        %v541 = vunpack.c.l.b16 %v455
        %v542 = vunpack.c.l.b16 %v456
        %v543 = vunpack.c.l.b16 %v457
        %v544 = vunpack.c.l.b16 %v458
        %v545 = vunpack.c.l.b16 %v459
        %v546 = vunpack.c.l.b16 %v460
        %v547 = vunpack.c.l.b16 %v461
        %v548 = vunpack.c.l.b16 %v462
        %v549 = vunpack.c.l.b16 %v463
        %v550 = vunpack.c.l.b16 %v464
        %v551 = vunpack.c.l.b16 %v465
        %v552 = vunpack.c.l.b16 %v466
        %v553 = vunpack.c.l.b16 %v467
        %v554 = vunpack.c.l.b16 %v468
        %v555 = vunpack.c.l.b16 %v469
        %v556 = vunpack.c.l.b16 %v470
        %v557 = vunpack.c.l.b16 %v471
        %v558 = vunpack.c.l.b16 %v472
        %v559 = vunpack.c.l.b16 %v473
        %v560 = vunpack.c.l.b16 %v474
        %v561 = vunpack.c.l.b16 %v475
        %v562 = vunpack.c.l.b16 %v476
        %v563 = vunpack.c.l.b16 %v477
        %v564 = vunpack.c.l.b16 %v478
        %v565 = vunpack.c.l.b16 %v479
        %v566 = vunpack.c.l.b16 %v480
        %v567 = vunpack.c.l.b16 %v481
        %v568 = vunpack.c.l.b16 %v482
        %v569 = vunpack.c.l.b16 %v483
        %v570 = vpack.c.b16 %v539, %v538
        %v571 = vpack.c.b16 %v541, %v540
        %v572 = vpack.c.b16 %v543, %v542
        %v573 = vpack.c.b16 %v545, %v544
        %v574 = vpack.c.b16 %v547, %v546
        %v575 = vpack.c.b16 %v549, %v548
        %v576 = vpack.c.b16 %v551, %v550
        %v577 = vpack.c.b16 %v553, %v552
        %v578 = vpack.c.b16 %v555, %v554
        %v579 = vpack.c.b16 %v557, %v556
        %v580 = vpack.c.b16 %v559, %v558
        %v581 = vpack.c.b16 %v561, %v560
        %v582 = vpack.c.b16 %v563, %v562
        %v583 = vpack.c.b16 %v565, %v564
        %v584 = vpack.c.b16 %v567, %v566
        %v585 = vpack.c.b16 %v569, %v568
        %v618 = vunpack.c.l.b16 %v484
        %v619 = vunpack.c.l.b16 %v485
        %v620 = vunpack.c.l.b16 %v486
        %v621 = vunpack.c.l.b16 %v487
        %v622 = vunpack.c.l.b16 %v488
        %v623 = vunpack.c.l.b16 %v489
        %v624 = vunpack.c.l.b16 %v490
        %v625 = vunpack.c.l.b16 %v491
        %v626 = vunpack.c.l.b16 %v492
        %v627 = vunpack.c.l.b16 %v493
        %v628 = vunpack.c.l.b16 %v494
        %v629 = vunpack.c.l.b16 %v495
        %v630 = vunpack.c.l.b16 %v496
        %v631 = vunpack.c.l.b16 %v497
        %v632 = vunpack.c.l.b16 %v498
        %v633 = vunpack.c.l.b16 %v499
        %v634 = vpack.c.b16 %v619, %v618
        %v635 = vpack.c.b16 %v621, %v620
        %v636 = vpack.c.b16 %v623, %v622
        %v637 = vpack.c.b16 %v625, %v624
        %v638 = vpack.c.b16 %v627, %v626
        %v639 = vpack.c.b16 %v629, %v628
        %v640 = vpack.c.b16 %v631, %v630
        %v641 = vpack.c.b16 %v633, %v632
        %650 = vmatprep.subr.bf16.mxu0 0
        %651 = vmatpush1.bf16.msra.mxu0 %v634
        %652 = vmatprep.subr.bf16.mxu0 0
        %653 = vmatpush1.bf16.msra.mxu0 %v635
        %654 = vmatprep.subr.bf16.mxu0 0
        %655 = vmatpush1.bf16.msra.mxu0 %v636
        %656 = vmatprep.subr.bf16.mxu0 0
        %657 = vmatpush1.bf16.msra.mxu0 %v637
        %658 = vmatprep.subr.bf16.mxu0 0
        %659 = vmatpush1.bf16.msra.mxu0 %v638
        %660 = vmatprep.subr.bf16.mxu0 0
        %661 = vmatpush1.bf16.msra.mxu0 %v639
        %662 = vmatprep.subr.bf16.mxu0 0
        %663 = vmatpush1.bf16.msra.mxu0 %v640
        %664 = vmatprep.subr.bf16.mxu0 0
        %665 = vmatpush1.bf16.msra.mxu0 %v641
        %666 = vmatprep.subr.bf16.mxu0 0
        %667 = vmatpush1.bf16.msra.mxu0 0
        %668 = vmatprep.subr.bf16.mxu0 0
        %669 = vmatpush1.bf16.msra.mxu0 0
        %670 = vmatprep.subr.bf16.mxu0 0
        %671 = vmatpush1.bf16.msra.mxu0 0
        %672 = vmatprep.subr.bf16.mxu0 0
        %673 = vmatpush1.bf16.msra.mxu0 0
        %674 = vmatprep.subr.bf16.mxu0 0
        %675 = vmatpush1.bf16.msra.mxu0 0
        %676 = vmatprep.subr.bf16.mxu0 0
        %677 = vmatpush1.bf16.msra.mxu0 0
        %678 = vmatprep.subr.bf16.mxu0 0
        %679 = vmatpush1.bf16.msra.mxu0 0
        %680 = vmatprep.subr.bf16.mxu0 0
        %681 = vmatpush1.bf16.msra.mxu0 0
        %682 = vmatprep.mubr.bf16.mxu0 0
        %683 = vmatmul.mubr.bf16.gmra.mrb[0].mxu0 %v570
        %v684 = vpop.f32.mrb[0].mxu0
        %v685 = vadd.f32 %v505, %v684
        %v686 = vpop.f32.mrb[0].mxu0
        %v687 = vpop.f32.mrb[0].mxu0
        %v688 = vadd.f32 %v505, %v687
        %v689 = vpop.f32.mrb[0].mxu0
        %690 = vmatprep.mubr.bf16.mxu0 0
        %691 = vmatmul.mubr.bf16.gmra.mrb[0].mxu0 %v571
        %v692 = vpop.f32.mrb[0].mxu0
        %v693 = vadd.f32 %v505, %v692
        %v694 = vpop.f32.mrb[0].mxu0
        %v695 = vpop.f32.mrb[0].mxu0
        %v696 = vadd.f32 %v505, %v695
        %v697 = vpop.f32.mrb[0].mxu0
        %698 = vmatprep.mubr.bf16.mxu0 0
        %699 = vmatmul.mubr.bf16.gmra.mrb[0].mxu0 %v572
        %v700 = vpop.f32.mrb[0].mxu0
        %v701 = vadd.f32 %v505, %v700
        %v702 = vpop.f32.mrb[0].mxu0
        %v703 = vpop.f32.mrb[0].mxu0
        %v704 = vadd.f32 %v505, %v703
        %v705 = vpop.f32.mrb[0].mxu0
        %706 = vmatprep.mubr.bf16.mxu0 0
        %707 = vmatmul.mubr.bf16.gmra.mrb[0].mxu0 %v573
        %v708 = vpop.f32.mrb[0].mxu0
        %v709 = vadd.f32 %v505, %v708
        %v710 = vpop.f32.mrb[0].mxu0
        %v711 = vpop.f32.mrb[0].mxu0
        %v712 = vadd.f32 %v505, %v711
        %v713 = vpop.f32.mrb[0].mxu0
        %714 = vmatprep.mubr.bf16.mxu0 0
        %715 = vmatmul.mubr.bf16.gmra.mrb[0].mxu0 %v574
        %v716 = vpop.f32.mrb[0].mxu0
        %v717 = vadd.f32 %v505, %v716
        %v718 = vpop.f32.mrb[0].mxu0
        %v719 = vpop.f32.mrb[0].mxu0
        %v720 = vadd.f32 %v505, %v719
        %v721 = vpop.f32.mrb[0].mxu0
        %722 = vmatprep.mubr.bf16.mxu0 0
        %723 = vmatmul.mubr.bf16.gmra.mrb[0].mxu0 %v575
        %v724 = vpop.f32.mrb[0].mxu0
        %v725 = vadd.f32 %v505, %v724
        %v726 = vpop.f32.mrb[0].mxu0
        %v727 = vpop.f32.mrb[0].mxu0
        %v728 = vadd.f32 %v505, %v727
        %v729 = vpop.f32.mrb[0].mxu0
        %730 = vmatprep.mubr.bf16.mxu0 0
        %731 = vmatmul.mubr.bf16.gmra.mrb[0].mxu0 %v576
        %v732 = vpop.f32.mrb[0].mxu0
        %v733 = vadd.f32 %v505, %v732
        %v734 = vpop.f32.mrb[0].mxu0
        %v735 = vpop.f32.mrb[0].mxu0
        %v736 = vadd.f32 %v505, %v735
        %v737 = vpop.f32.mrb[0].mxu0
        %738 = vmatprep.mubr.bf16.mxu0 0
        %739 = vmatmul.mubr.bf16.gmra.mrb[0].mxu0 %v577
        %v740 = vpop.f32.mrb[0].mxu0
        %v741 = vadd.f32 %v505, %v740
        %v742 = vpop.f32.mrb[0].mxu0
        %v743 = vpop.f32.mrb[0].mxu0
        %v744 = vadd.f32 %v505, %v743
        %v745 = vpop.f32.mrb[0].mxu0
        %746 = vmatprep.mubr.bf16.mxu0 0
        %747 = vmatmul.mubr.bf16.gmra.mrb[0].mxu0 %v578
        %v748 = vpop.f32.mrb[0].mxu0
        %v749 = vadd.f32 %v505, %v748
        %v750 = vpop.f32.mrb[0].mxu0
        %v751 = vpop.f32.mrb[0].mxu0
        %v752 = vadd.f32 %v505, %v751
        %v753 = vpop.f32.mrb[0].mxu0
        %754 = vmatprep.mubr.bf16.mxu0 0
        %755 = vmatmul.mubr.bf16.gmra.mrb[0].mxu0 %v579
        %v756 = vpop.f32.mrb[0].mxu0
        %v757 = vadd.f32 %v505, %v756
        %v758 = vpop.f32.mrb[0].mxu0
        %v759 = vpop.f32.mrb[0].mxu0
        %v760 = vadd.f32 %v505, %v759
        %v761 = vpop.f32.mrb[0].mxu0
        %762 = vmatprep.mubr.bf16.mxu0 0
        %763 = vmatmul.mubr.bf16.gmra.mrb[0].mxu0 %v580
        %v764 = vpop.f32.mrb[0].mxu0
        %v765 = vadd.f32 %v505, %v764
        %v766 = vpop.f32.mrb[0].mxu0
        %v767 = vpop.f32.mrb[0].mxu0
        %v768 = vadd.f32 %v505, %v767
        %v769 = vpop.f32.mrb[0].mxu0
        %770 = vmatprep.mubr.bf16.mxu0 0
        %771 = vmatmul.mubr.bf16.gmra.mrb[0].mxu0 %v581
        %v772 = vpop.f32.mrb[0].mxu0
        %v773 = vadd.f32 %v505, %v772
        %v774 = vpop.f32.mrb[0].mxu0
        %v775 = vpop.f32.mrb[0].mxu0
        %v776 = vadd.f32 %v505, %v775
        %v777 = vpop.f32.mrb[0].mxu0
        %778 = vmatprep.mubr.bf16.mxu0 0
        %779 = vmatmul.mubr.bf16.gmra.mrb[0].mxu0 %v582
        %v780 = vpop.f32.mrb[0].mxu0
        %v781 = vadd.f32 %v505, %v780
        %v782 = vpop.f32.mrb[0].mxu0
        %v783 = vpop.f32.mrb[0].mxu0
        %v784 = vadd.f32 %v505, %v783
        %v785 = vpop.f32.mrb[0].mxu0
        %786 = vmatprep.mubr.bf16.mxu0 0
        %787 = vmatmul.mubr.bf16.gmra.mrb[0].mxu0 %v583
        %v788 = vpop.f32.mrb[0].mxu0
        %v789 = vadd.f32 %v505, %v788
        %v790 = vpop.f32.mrb[0].mxu0
        %v791 = vpop.f32.mrb[0].mxu0
        %v792 = vadd.f32 %v505, %v791
        %v793 = vpop.f32.mrb[0].mxu0
        %794 = vmatprep.mubr.bf16.mxu0 0
        %795 = vmatmul.mubr.bf16.gmra.mrb[0].mxu0 %v584
        %v796 = vpop.f32.mrb[0].mxu0
        %v797 = vadd.f32 %v505, %v796
        %v798 = vpop.f32.mrb[0].mxu0
        %v799 = vpop.f32.mrb[0].mxu0
        %v800 = vadd.f32 %v505, %v799
        %v801 = vpop.f32.mrb[0].mxu0
        %802 = vmatprep.mubr.bf16.mxu0 0
        %803 = vmatmul.mubr.bf16.gmra.mrb[0].mxu0 %v585
        %v804 = vpop.f32.mrb[0].mxu0
        %v805 = vadd.f32 %v505, %v804
        %v806 = vpop.f32.mrb[0].mxu0
        %v807 = vpop.f32.mrb[0].mxu0
        %v808 = vadd.f32 %v505, %v807
        %v809 = vpop.f32.mrb[0].mxu0
        %810 = vdwg.mxu0
        %v811 = vld [vmem:[%s5] sm:$0x1]
        %v812 = vunpack.c.l.bf16 %v811
        %v813 = vld [vmem:[%s6] sm:$0x1]
        %v814 = vunpack.c.l.bf16 %v813
        %815 = vadd.xlane.f32.xlu0 %v685
        %v816 = vpop.xlane.xlu0 %815
        %817 = vadd.xlane.f32.xlu0 %v688
        %v818 = vpop.xlane.xlu0 %817
        %819 = vadd.xlane.f32.xlu0 %v693
        %v820 = vpop.xlane.xlu0 %819
        %821 = vadd.xlane.f32.xlu0 %v696
        %v822 = vpop.xlane.xlu0 %821
        %823 = vadd.xlane.f32.xlu0 %v701
        %v824 = vpop.xlane.xlu0 %823
        %825 = vadd.xlane.f32.xlu0 %v704
        %v826 = vpop.xlane.xlu0 %825
        %827 = vadd.xlane.f32.xlu0 %v709
        %v828 = vpop.xlane.xlu0 %827
        %829 = vadd.xlane.f32.xlu0 %v712
        %v830 = vpop.xlane.xlu0 %829
        %831 = vadd.xlane.f32.xlu0 %v717
        %v832 = vpop.xlane.xlu0 %831
        %833 = vadd.xlane.f32.xlu0 %v720
        %v834 = vpop.xlane.xlu0 %833
        %835 = vadd.xlane.f32.xlu0 %v725
        %v836 = vpop.xlane.xlu0 %835
        %837 = vadd.xlane.f32.xlu0 %v728
        %v838 = vpop.xlane.xlu0 %837
        %839 = vadd.xlane.f32.xlu0 %v733
        %v840 = vpop.xlane.xlu0 %839
        %841 = vadd.xlane.f32.xlu0 %v736
        %v842 = vpop.xlane.xlu0 %841
        %843 = vadd.xlane.f32.xlu0 %v741
        %v844 = vpop.xlane.xlu0 %843
        %845 = vadd.xlane.f32.xlu0 %v744
        %v846 = vpop.xlane.xlu0 %845
        %847 = vadd.xlane.f32.xlu0 %v749
        %v848 = vpop.xlane.xlu0 %847
        %849 = vadd.xlane.f32.xlu0 %v752
        %v850 = vpop.xlane.xlu0 %849
        %851 = vadd.xlane.f32.xlu0 %v757
        %v852 = vpop.xlane.xlu0 %851
        %853 = vadd.xlane.f32.xlu0 %v760
        %v854 = vpop.xlane.xlu0 %853
        %855 = vadd.xlane.f32.xlu0 %v765
        %v856 = vpop.xlane.xlu0 %855
        %857 = vadd.xlane.f32.xlu0 %v768
        %v858 = vpop.xlane.xlu0 %857
        %859 = vadd.xlane.f32.xlu0 %v773
        %v860 = vpop.xlane.xlu0 %859
        %861 = vadd.xlane.f32.xlu0 %v776
        %v862 = vpop.xlane.xlu0 %861
        %863 = vadd.xlane.f32.xlu0 %v781
        %v864 = vpop.xlane.xlu0 %863
        %865 = vadd.xlane.f32.xlu0 %v784
        %v866 = vpop.xlane.xlu0 %865
        %867 = vadd.xlane.f32.xlu0 %v789
        %v868 = vpop.xlane.xlu0 %867
        %869 = vadd.xlane.f32.xlu0 %v792
        %v870 = vpop.xlane.xlu0 %869
        %871 = vadd.xlane.f32.xlu0 %v797
        %v872 = vpop.xlane.xlu0 %871
        %873 = vadd.xlane.f32.xlu0 %v800
        %v874 = vpop.xlane.xlu0 %873
        %875 = vadd.xlane.f32.xlu0 %v805
        %v876 = vpop.xlane.xlu0 %875
        %877 = vadd.xlane.f32.xlu0 %v808
        %v878 = vpop.xlane.xlu0 %877
        %v879 = vmul.f32 %v816, 0.010416667
        %v880 = vmul.f32 %v818, 0.010416667
        %v881 = vmul.f32 %v820, 0.010416667
        %v882 = vmul.f32 %v822, 0.010416667
        %v883 = vmul.f32 %v824, 0.010416667
        %v884 = vmul.f32 %v826, 0.010416667
        %v885 = vmul.f32 %v828, 0.010416667
        %v886 = vmul.f32 %v830, 0.010416667
        %v887 = vmul.f32 %v832, 0.010416667
        %v888 = vmul.f32 %v834, 0.010416667
        %v889 = vmul.f32 %v836, 0.010416667
        %v890 = vmul.f32 %v838, 0.010416667
        %v891 = vmul.f32 %v840, 0.010416667
        %v892 = vmul.f32 %v842, 0.010416667
        %v893 = vmul.f32 %v844, 0.010416667
        %v894 = vmul.f32 %v846, 0.010416667
        %v895 = vmul.f32 %v848, 0.010416667
        %v896 = vmul.f32 %v850, 0.010416667
        %v897 = vmul.f32 %v852, 0.010416667
        %v898 = vmul.f32 %v854, 0.010416667
        %v899 = vmul.f32 %v856, 0.010416667
        %v900 = vmul.f32 %v858, 0.010416667
        %v901 = vmul.f32 %v860, 0.010416667
        %v902 = vmul.f32 %v862, 0.010416667
        %v903 = vmul.f32 %v864, 0.010416667
        %v904 = vmul.f32 %v866, 0.010416667
        %v905 = vmul.f32 %v868, 0.010416667
        %v906 = vmul.f32 %v870, 0.010416667
        %v907 = vmul.f32 %v872, 0.010416667
        %v908 = vmul.f32 %v874, 0.010416667
        %v909 = vmul.f32 %v876, 0.010416667
        %v910 = vmul.f32 %v878, 0.010416667
        %v911 = vmul.f32 %v685, %v685
        %v912 = vmul.f32 %v688, %v688
        %v913 = vmul.f32 %v693, %v693
        %v914 = vmul.f32 %v696, %v696
        %v915 = vmul.f32 %v701, %v701
        %v916 = vmul.f32 %v704, %v704
        %v917 = vmul.f32 %v709, %v709
        %v918 = vmul.f32 %v712, %v712
        %v919 = vmul.f32 %v717, %v717
        %v920 = vmul.f32 %v720, %v720
        %v921 = vmul.f32 %v725, %v725
        %v922 = vmul.f32 %v728, %v728
        %v923 = vmul.f32 %v733, %v733
        %v924 = vmul.f32 %v736, %v736
        %v925 = vmul.f32 %v741, %v741
        %v926 = vmul.f32 %v744, %v744
        %v927 = vmul.f32 %v749, %v749
        %v928 = vmul.f32 %v752, %v752
        %v929 = vmul.f32 %v757, %v757
        %v930 = vmul.f32 %v760, %v760
        %v931 = vmul.f32 %v765, %v765
        %v932 = vmul.f32 %v768, %v768
        %v933 = vmul.f32 %v773, %v773
        %v934 = vmul.f32 %v776, %v776
        %v935 = vmul.f32 %v781, %v781
        %v936 = vmul.f32 %v784, %v784
        %v937 = vmul.f32 %v789, %v789
        %v938 = vmul.f32 %v792, %v792
        %v939 = vmul.f32 %v797, %v797
        %v940 = vmul.f32 %v800, %v800
        %v941 = vmul.f32 %v805, %v805
        %v942 = vmul.f32 %v808, %v808
        %943 = vadd.xlane.f32.xlu0 %v911
        %v944 = vpop.xlane.xlu0 %943
        %945 = vadd.xlane.f32.xlu0 %v912
        %v946 = vpop.xlane.xlu0 %945
        %947 = vadd.xlane.f32.xlu0 %v913
        %v948 = vpop.xlane.xlu0 %947
        %949 = vadd.xlane.f32.xlu0 %v914
        %v950 = vpop.xlane.xlu0 %949
        %951 = vadd.xlane.f32.xlu0 %v915
        %v952 = vpop.xlane.xlu0 %951
        %953 = vadd.xlane.f32.xlu0 %v916
        %v954 = vpop.xlane.xlu0 %953
        %955 = vadd.xlane.f32.xlu0 %v917
        %v956 = vpop.xlane.xlu0 %955
        %957 = vadd.xlane.f32.xlu0 %v918
        %v958 = vpop.xlane.xlu0 %957
        %959 = vadd.xlane.f32.xlu0 %v919
        %v960 = vpop.xlane.xlu0 %959
        %961 = vadd.xlane.f32.xlu0 %v920
        %v962 = vpop.xlane.xlu0 %961
        %963 = vadd.xlane.f32.xlu0 %v921
        %v964 = vpop.xlane.xlu0 %963
        %965 = vadd.xlane.f32.xlu0 %v922
        %v966 = vpop.xlane.xlu0 %965
        %967 = vadd.xlane.f32.xlu0 %v923
        %v968 = vpop.xlane.xlu0 %967
        %969 = vadd.xlane.f32.xlu0 %v924
        %v970 = vpop.xlane.xlu0 %969
        %971 = vadd.xlane.f32.xlu0 %v925
        %v972 = vpop.xlane.xlu0 %971
        %973 = vadd.xlane.f32.xlu0 %v926
        %v974 = vpop.xlane.xlu0 %973
        %975 = vadd.xlane.f32.xlu0 %v927
        %v976 = vpop.xlane.xlu0 %975
        %977 = vadd.xlane.f32.xlu0 %v928
        %v978 = vpop.xlane.xlu0 %977
        %979 = vadd.xlane.f32.xlu0 %v929
        %v980 = vpop.xlane.xlu0 %979
        %981 = vadd.xlane.f32.xlu0 %v930
        %v982 = vpop.xlane.xlu0 %981
        %983 = vadd.xlane.f32.xlu0 %v931
        %v984 = vpop.xlane.xlu0 %983
        %985 = vadd.xlane.f32.xlu0 %v932
        %v986 = vpop.xlane.xlu0 %985
        %987 = vadd.xlane.f32.xlu0 %v933
        %v988 = vpop.xlane.xlu0 %987
        %989 = vadd.xlane.f32.xlu0 %v934
        %v990 = vpop.xlane.xlu0 %989
        %991 = vadd.xlane.f32.xlu0 %v935
        %v992 = vpop.xlane.xlu0 %991
        %993 = vadd.xlane.f32.xlu0 %v936
        %v994 = vpop.xlane.xlu0 %993
        %995 = vadd.xlane.f32.xlu0 %v937
        %v996 = vpop.xlane.xlu0 %995
        %997 = vadd.xlane.f32.xlu0 %v938
        %v998 = vpop.xlane.xlu0 %997
        %999 = vadd.xlane.f32.xlu0 %v939
        %v1000 = vpop.xlane.xlu0 %999
        %1001 = vadd.xlane.f32.xlu0 %v940
        %v1002 = vpop.xlane.xlu0 %1001
        %1003 = vadd.xlane.f32.xlu0 %v941
        %v1004 = vpop.xlane.xlu0 %1003
        %1005 = vadd.xlane.f32.xlu0 %v942
        %v1006 = vpop.xlane.xlu0 %1005
        %v1007 = vmul.f32 %v944, 0.010416667
        %v1008 = vmul.f32 %v946, 0.010416667
        %v1009 = vmul.f32 %v948, 0.010416667
        %v1010 = vmul.f32 %v950, 0.010416667
        %v1011 = vmul.f32 %v952, 0.010416667
        %v1012 = vmul.f32 %v954, 0.010416667
        %v1013 = vmul.f32 %v956, 0.010416667
        %v1014 = vmul.f32 %v958, 0.010416667
        %v1015 = vmul.f32 %v960, 0.010416667
        %v1016 = vmul.f32 %v962, 0.010416667
        %v1017 = vmul.f32 %v964, 0.010416667
        %v1018 = vmul.f32 %v966, 0.010416667
        %v1019 = vmul.f32 %v968, 0.010416667
        %v1020 = vmul.f32 %v970, 0.010416667
        %v1021 = vmul.f32 %v972, 0.010416667
        %v1022 = vmul.f32 %v974, 0.010416667
        %v1023 = vmul.f32 %v976, 0.010416667
        %v1024 = vmul.f32 %v978, 0.010416667
        %v1025 = vmul.f32 %v980, 0.010416667
        %v1026 = vmul.f32 %v982, 0.010416667
        %v1027 = vmul.f32 %v984, 0.010416667
        %v1028 = vmul.f32 %v986, 0.010416667
        %v1029 = vmul.f32 %v988, 0.010416667
        %v1030 = vmul.f32 %v990, 0.010416667
        %v1031 = vmul.f32 %v992, 0.010416667
        %v1032 = vmul.f32 %v994, 0.010416667
        %v1033 = vmul.f32 %v996, 0.010416667
        %v1034 = vmul.f32 %v998, 0.010416667
        %v1035 = vmul.f32 %v1000, 0.010416667
        %v1036 = vmul.f32 %v1002, 0.010416667
        %v1037 = vmul.f32 %v1004, 0.010416667
        %v1038 = vmul.f32 %v1006, 0.010416667
        %v1039 = vmul.f32 %v879, %v879
        %v1040 = vmul.f32 %v880, %v880
        %v1041 = vmul.f32 %v881, %v881
        %v1042 = vmul.f32 %v882, %v882
        %v1043 = vmul.f32 %v883, %v883
        %v1044 = vmul.f32 %v884, %v884
        %v1045 = vmul.f32 %v885, %v885
        %v1046 = vmul.f32 %v886, %v886
        %v1047 = vmul.f32 %v887, %v887
        %v1048 = vmul.f32 %v888, %v888
        %v1049 = vmul.f32 %v889, %v889
        %v1050 = vmul.f32 %v890, %v890
        %v1051 = vmul.f32 %v891, %v891
        %v1052 = vmul.f32 %v892, %v892
        %v1053 = vmul.f32 %v893, %v893
        %v1054 = vmul.f32 %v894, %v894
        %v1055 = vmul.f32 %v895, %v895
        %v1056 = vmul.f32 %v896, %v896
        %v1057 = vmul.f32 %v897, %v897
        %v1058 = vmul.f32 %v898, %v898
        %v1059 = vmul.f32 %v899, %v899
        %v1060 = vmul.f32 %v900, %v900
        %v1061 = vmul.f32 %v901, %v901
        %v1062 = vmul.f32 %v902, %v902
        %v1063 = vmul.f32 %v903, %v903
        %v1064 = vmul.f32 %v904, %v904
        %v1065 = vmul.f32 %v905, %v905
        %v1066 = vmul.f32 %v906, %v906
        %v1067 = vmul.f32 %v907, %v907
        %v1068 = vmul.f32 %v908, %v908
        %v1069 = vmul.f32 %v909, %v909
        %v1070 = vmul.f32 %v910, %v910
        %v1071 = vsub.f32 %v1007, %v1039
        %v1072 = vsub.f32 %v1008, %v1040
        %v1073 = vsub.f32 %v1009, %v1041
        %v1074 = vsub.f32 %v1010, %v1042
        %v1075 = vsub.f32 %v1011, %v1043
        %v1076 = vsub.f32 %v1012, %v1044
        %v1077 = vsub.f32 %v1013, %v1045
        %v1078 = vsub.f32 %v1014, %v1046
        %v1079 = vsub.f32 %v1015, %v1047
        %v1080 = vsub.f32 %v1016, %v1048
        %v1081 = vsub.f32 %v1017, %v1049
        %v1082 = vsub.f32 %v1018, %v1050
        %v1083 = vsub.f32 %v1019, %v1051
        %v1084 = vsub.f32 %v1020, %v1052
        %v1085 = vsub.f32 %v1021, %v1053
        %v1086 = vsub.f32 %v1022, %v1054
        %v1087 = vsub.f32 %v1023, %v1055
        %v1088 = vsub.f32 %v1024, %v1056
        %v1089 = vsub.f32 %v1025, %v1057
        %v1090 = vsub.f32 %v1026, %v1058
        %v1091 = vsub.f32 %v1027, %v1059
        %v1092 = vsub.f32 %v1028, %v1060
        %v1093 = vsub.f32 %v1029, %v1061
        %v1094 = vsub.f32 %v1030, %v1062
        %v1095 = vsub.f32 %v1031, %v1063
        %v1096 = vsub.f32 %v1032, %v1064
        %v1097 = vsub.f32 %v1033, %v1065
        %v1098 = vsub.f32 %v1034, %v1066
        %v1099 = vsub.f32 %v1035, %v1067
        %v1100 = vsub.f32 %v1036, %v1068
        %v1101 = vsub.f32 %v1037, %v1069
        %v1102 = vsub.f32 %v1038, %v1070
        %v1103 = vmax.f32 %v1071, 0.0
        %v1104 = vmax.f32 %v1072, 0.0
        %v1105 = vmax.f32 %v1073, 0.0
        %v1106 = vmax.f32 %v1074, 0.0
        %v1107 = vmax.f32 %v1075, 0.0
        %v1108 = vmax.f32 %v1076, 0.0
        %v1109 = vmax.f32 %v1077, 0.0
        %v1110 = vmax.f32 %v1078, 0.0
        %v1111 = vmax.f32 %v1079, 0.0
        %v1112 = vmax.f32 %v1080, 0.0
        %v1113 = vmax.f32 %v1081, 0.0
        %v1114 = vmax.f32 %v1082, 0.0
        %v1115 = vmax.f32 %v1083, 0.0
        %v1116 = vmax.f32 %v1084, 0.0
        %v1117 = vmax.f32 %v1085, 0.0
        %v1118 = vmax.f32 %v1086, 0.0
        %v1119 = vmax.f32 %v1087, 0.0
        %v1120 = vmax.f32 %v1088, 0.0
        %v1121 = vmax.f32 %v1089, 0.0
        %v1122 = vmax.f32 %v1090, 0.0
        %v1123 = vmax.f32 %v1091, 0.0
        %v1124 = vmax.f32 %v1092, 0.0
        %v1125 = vmax.f32 %v1093, 0.0
        %v1126 = vmax.f32 %v1094, 0.0
        %v1127 = vmax.f32 %v1095, 0.0
        %v1128 = vmax.f32 %v1096, 0.0
        %v1129 = vmax.f32 %v1097, 0.0
        %v1130 = vmax.f32 %v1098, 0.0
        %v1131 = vmax.f32 %v1099, 0.0
        %v1132 = vmax.f32 %v1100, 0.0
        %v1133 = vmax.f32 %v1101, 0.0
        %v1134 = vmax.f32 %v1102, 0.0
        %v1135 = vsub.f32 %v685, %v879
        %v1136 = vsub.f32 %v688, %v880
        %v1137 = vsub.f32 %v693, %v881
        %v1138 = vsub.f32 %v696, %v882
        %v1139 = vsub.f32 %v701, %v883
        %v1140 = vsub.f32 %v704, %v884
        %v1141 = vsub.f32 %v709, %v885
        %v1142 = vsub.f32 %v712, %v886
        %v1143 = vsub.f32 %v717, %v887
        %v1144 = vsub.f32 %v720, %v888
        %v1145 = vsub.f32 %v725, %v889
        %v1146 = vsub.f32 %v728, %v890
        %v1147 = vsub.f32 %v733, %v891
        %v1148 = vsub.f32 %v736, %v892
        %v1149 = vsub.f32 %v741, %v893
        %v1150 = vsub.f32 %v744, %v894
        %v1151 = vsub.f32 %v749, %v895
        %v1152 = vsub.f32 %v752, %v896
        %v1153 = vsub.f32 %v757, %v897
        %v1154 = vsub.f32 %v760, %v898
        %v1155 = vsub.f32 %v765, %v899
        %v1156 = vsub.f32 %v768, %v900
        %v1157 = vsub.f32 %v773, %v901
        %v1158 = vsub.f32 %v776, %v902
        %v1159 = vsub.f32 %v781, %v903
        %v1160 = vsub.f32 %v784, %v904
        %v1161 = vsub.f32 %v789, %v905
        %v1162 = vsub.f32 %v792, %v906
        %v1163 = vsub.f32 %v797, %v907
        %v1164 = vsub.f32 %v800, %v908
        %v1165 = vsub.f32 %v805, %v909
        %v1166 = vsub.f32 %v808, %v910
        %v1167 = vadd.f32 %v1103, 1e-05
        %v1168 = vadd.f32 %v1104, 1e-05
        %v1169 = vadd.f32 %v1105, 1e-05
        %v1170 = vadd.f32 %v1106, 1e-05
        %v1171 = vadd.f32 %v1107, 1e-05
        %v1172 = vadd.f32 %v1108, 1e-05
        %v1173 = vadd.f32 %v1109, 1e-05
        %v1174 = vadd.f32 %v1110, 1e-05
        %v1175 = vadd.f32 %v1111, 1e-05
        %v1176 = vadd.f32 %v1112, 1e-05
        %v1177 = vadd.f32 %v1113, 1e-05
        %v1178 = vadd.f32 %v1114, 1e-05
        %v1179 = vadd.f32 %v1115, 1e-05
        %v1180 = vadd.f32 %v1116, 1e-05
        %v1181 = vadd.f32 %v1117, 1e-05
        %v1182 = vadd.f32 %v1118, 1e-05
        %v1183 = vadd.f32 %v1119, 1e-05
        %v1184 = vadd.f32 %v1120, 1e-05
        %v1185 = vadd.f32 %v1121, 1e-05
        %v1186 = vadd.f32 %v1122, 1e-05
        %v1187 = vadd.f32 %v1123, 1e-05
        %v1188 = vadd.f32 %v1124, 1e-05
        %v1189 = vadd.f32 %v1125, 1e-05
        %v1190 = vadd.f32 %v1126, 1e-05
        %v1191 = vadd.f32 %v1127, 1e-05
        %v1192 = vadd.f32 %v1128, 1e-05
        %v1193 = vadd.f32 %v1129, 1e-05
        %v1194 = vadd.f32 %v1130, 1e-05
        %v1195 = vadd.f32 %v1131, 1e-05
        %v1196 = vadd.f32 %v1132, 1e-05
        %v1197 = vadd.f32 %v1133, 1e-05
        %v1198 = vadd.f32 %v1134, 1e-05
        %v1199 = vrsqrt.pop %v1167
        %v1200 = vrsqrt.pop %v1168
        %v1201 = vrsqrt.pop %v1169
        %v1202 = vrsqrt.pop %v1170
        %v1203 = vrsqrt.pop %v1171
        %v1204 = vrsqrt.pop %v1172
        %v1205 = vrsqrt.pop %v1173
        %v1206 = vrsqrt.pop %v1174
        %v1207 = vrsqrt.pop %v1175
        %v1208 = vrsqrt.pop %v1176
        %v1209 = vrsqrt.pop %v1177
        %v1210 = vrsqrt.pop %v1178
        %v1211 = vrsqrt.pop %v1179
        %v1212 = vrsqrt.pop %v1180
        %v1213 = vrsqrt.pop %v1181
        %v1214 = vrsqrt.pop %v1182
        %v1215 = vrsqrt.pop %v1183
        %v1216 = vrsqrt.pop %v1184
        %v1217 = vrsqrt.pop %v1185
        %v1218 = vrsqrt.pop %v1186
        %v1219 = vrsqrt.pop %v1187
        %v1220 = vrsqrt.pop %v1188
        %v1221 = vrsqrt.pop %v1189
        %v1222 = vrsqrt.pop %v1190
        %v1223 = vrsqrt.pop %v1191
        %v1224 = vrsqrt.pop %v1192
        %v1225 = vrsqrt.pop %v1193
        %v1226 = vrsqrt.pop %v1194
        %v1227 = vrsqrt.pop %v1195
        %v1228 = vrsqrt.pop %v1196
        %v1229 = vrsqrt.pop %v1197
        %v1230 = vrsqrt.pop %v1198
        %v1231 = vmul.f32 %v1135, %v1199
        %v1232 = vmul.f32 %v1136, %v1200
        %v1233 = vmul.f32 %v1137, %v1201
        %v1234 = vmul.f32 %v1138, %v1202
        %v1235 = vmul.f32 %v1139, %v1203
        %v1236 = vmul.f32 %v1140, %v1204
        %v1237 = vmul.f32 %v1141, %v1205
        %v1238 = vmul.f32 %v1142, %v1206
        %v1239 = vmul.f32 %v1143, %v1207
        %v1240 = vmul.f32 %v1144, %v1208
        %v1241 = vmul.f32 %v1145, %v1209
        %v1242 = vmul.f32 %v1146, %v1210
        %v1243 = vmul.f32 %v1147, %v1211
        %v1244 = vmul.f32 %v1148, %v1212
        %v1245 = vmul.f32 %v1149, %v1213
        %v1246 = vmul.f32 %v1150, %v1214
        %v1247 = vmul.f32 %v1151, %v1215
        %v1248 = vmul.f32 %v1152, %v1216
        %v1249 = vmul.f32 %v1153, %v1217
        %v1250 = vmul.f32 %v1154, %v1218
        %v1251 = vmul.f32 %v1155, %v1219
        %v1252 = vmul.f32 %v1156, %v1220
        %v1253 = vmul.f32 %v1157, %v1221
        %v1254 = vmul.f32 %v1158, %v1222
        %v1255 = vmul.f32 %v1159, %v1223
        %v1256 = vmul.f32 %v1160, %v1224
        %v1257 = vmul.f32 %v1161, %v1225
        %v1258 = vmul.f32 %v1162, %v1226
        %v1259 = vmul.f32 %v1163, %v1227
        %v1260 = vmul.f32 %v1164, %v1228
        %v1261 = vmul.f32 %v1165, %v1229
        %v1262 = vmul.f32 %v1166, %v1230
        %v1263 = vlaneseq
        %v1264 = vshrl.u32 %v1263, 7
        %v1265 = vsub.s32 0, %v1264
        %v1266 = vrot.slane %v812, %v1265
        %v1267 = vmul.f32 %v1231, %v1266
        %v1268 = vmul.f32 %v1232, %v1266
        %v1269 = vmul.f32 %v1233, %v1266
        %v1270 = vmul.f32 %v1234, %v1266
        %v1271 = vmul.f32 %v1235, %v1266
        %v1272 = vmul.f32 %v1236, %v1266
        %v1273 = vmul.f32 %v1237, %v1266
        %v1274 = vmul.f32 %v1238, %v1266
        %v1275 = vmul.f32 %v1239, %v1266
        %v1276 = vmul.f32 %v1240, %v1266
        %v1277 = vmul.f32 %v1241, %v1266
        %v1278 = vmul.f32 %v1242, %v1266
        %v1279 = vmul.f32 %v1243, %v1266
        %v1280 = vmul.f32 %v1244, %v1266
        %v1281 = vmul.f32 %v1245, %v1266
        %v1282 = vmul.f32 %v1246, %v1266
        %v1283 = vmul.f32 %v1247, %v1266
        %v1284 = vmul.f32 %v1248, %v1266
        %v1285 = vmul.f32 %v1249, %v1266
        %v1286 = vmul.f32 %v1250, %v1266
        %v1287 = vmul.f32 %v1251, %v1266
        %v1288 = vmul.f32 %v1252, %v1266
        %v1289 = vmul.f32 %v1253, %v1266
        %v1290 = vmul.f32 %v1254, %v1266
        %v1291 = vmul.f32 %v1255, %v1266
        %v1292 = vmul.f32 %v1256, %v1266
        %v1293 = vmul.f32 %v1257, %v1266
        %v1294 = vmul.f32 %v1258, %v1266
        %v1295 = vmul.f32 %v1259, %v1266
        %v1296 = vmul.f32 %v1260, %v1266
        %v1297 = vmul.f32 %v1261, %v1266
        %v1298 = vmul.f32 %v1262, %v1266
        %v1299 = vlaneseq
        %v1300 = vshrl.u32 %v1299, 7
        %v1301 = vsub.s32 0, %v1300
        %v1302 = vrot.slane %v814, %v1301
        %v1303 = vadd.f32 %v1267, %v1302
        %v1304 = vadd.f32 %v1268, %v1302
        %v1305 = vadd.f32 %v1269, %v1302
        %v1306 = vadd.f32 %v1270, %v1302
        %v1307 = vadd.f32 %v1271, %v1302
        %v1308 = vadd.f32 %v1272, %v1302
        %v1309 = vadd.f32 %v1273, %v1302
        %v1310 = vadd.f32 %v1274, %v1302
        %v1311 = vadd.f32 %v1275, %v1302
        %v1312 = vadd.f32 %v1276, %v1302
        %v1313 = vadd.f32 %v1277, %v1302
        %v1314 = vadd.f32 %v1278, %v1302
        %v1315 = vadd.f32 %v1279, %v1302
        %v1316 = vadd.f32 %v1280, %v1302
        %v1317 = vadd.f32 %v1281, %v1302
        %v1318 = vadd.f32 %v1282, %v1302
        %v1319 = vadd.f32 %v1283, %v1302
        %v1320 = vadd.f32 %v1284, %v1302
        %v1321 = vadd.f32 %v1285, %v1302
        %v1322 = vadd.f32 %v1286, %v1302
        %v1323 = vadd.f32 %v1287, %v1302
        %v1324 = vadd.f32 %v1288, %v1302
        %v1325 = vadd.f32 %v1289, %v1302
        %v1326 = vadd.f32 %v1290, %v1302
        %v1327 = vadd.f32 %v1291, %v1302
        %v1328 = vadd.f32 %v1292, %v1302
        %v1329 = vadd.f32 %v1293, %v1302
        %v1330 = vadd.f32 %v1294, %v1302
        %v1331 = vadd.f32 %v1295, %v1302
        %v1332 = vadd.f32 %v1296, %v1302
        %v1333 = vadd.f32 %v1297, %v1302
        %v1334 = vadd.f32 %v1298, %v1302
        %v1335 = vmax.f32 %v1303, 0.0
        %v1336 = vmax.f32 %v1304, 0.0
        %v1337 = vmax.f32 %v1305, 0.0
        %v1338 = vmax.f32 %v1306, 0.0
        %v1339 = vmax.f32 %v1307, 0.0
        %v1340 = vmax.f32 %v1308, 0.0
        %v1341 = vmax.f32 %v1309, 0.0
        %v1342 = vmax.f32 %v1310, 0.0
        %v1343 = vmax.f32 %v1311, 0.0
        %v1344 = vmax.f32 %v1312, 0.0
        %v1345 = vmax.f32 %v1313, 0.0
        %v1346 = vmax.f32 %v1314, 0.0
        %v1347 = vmax.f32 %v1315, 0.0
        %v1348 = vmax.f32 %v1316, 0.0
        %v1349 = vmax.f32 %v1317, 0.0
        %v1350 = vmax.f32 %v1318, 0.0
        %v1351 = vmax.f32 %v1319, 0.0
        %v1352 = vmax.f32 %v1320, 0.0
        %v1353 = vmax.f32 %v1321, 0.0
        %v1354 = vmax.f32 %v1322, 0.0
        %v1355 = vmax.f32 %v1323, 0.0
        %v1356 = vmax.f32 %v1324, 0.0
        %v1357 = vmax.f32 %v1325, 0.0
        %v1358 = vmax.f32 %v1326, 0.0
        %v1359 = vmax.f32 %v1327, 0.0
        %v1360 = vmax.f32 %v1328, 0.0
        %v1361 = vmax.f32 %v1329, 0.0
        %v1362 = vmax.f32 %v1330, 0.0
        %v1363 = vmax.f32 %v1331, 0.0
        %v1364 = vmax.f32 %v1332, 0.0
        %v1365 = vmax.f32 %v1333, 0.0
        %v1366 = vmax.f32 %v1334, 0.0
        %v1367 = vpack.c.bf16 %v1336, %v1335
        %v1368 = vpack.c.bf16 %v1338, %v1337
        %v1369 = vpack.c.bf16 %v1340, %v1339
        %v1370 = vpack.c.bf16 %v1342, %v1341
        %v1371 = vpack.c.bf16 %v1344, %v1343
        %v1372 = vpack.c.bf16 %v1346, %v1345
        %v1373 = vpack.c.bf16 %v1348, %v1347
        %v1374 = vpack.c.bf16 %v1350, %v1349
        %v1375 = vpack.c.bf16 %v1352, %v1351
        %v1376 = vpack.c.bf16 %v1354, %v1353
        %v1377 = vpack.c.bf16 %v1356, %v1355
        %v1378 = vpack.c.bf16 %v1358, %v1357
        %v1379 = vpack.c.bf16 %v1360, %v1359
        %v1380 = vpack.c.bf16 %v1362, %v1361
        %v1381 = vpack.c.bf16 %v1364, %v1363
        %v1382 = vpack.c.bf16 %v1366, %v1365
        %v1383 = vld [vmem:[#allocation7] sm:$0xf]
        %v1384 = vld [vmem:[#allocation7 + $0x4] sm:$0xf]
        %v1385 = vld [vmem:[#allocation7 + $0x8] sm:$0xf]
        %v1386 = vld [vmem:[#allocation7 + $0xc] sm:$0xf]
        %v1387 = vld [vmem:[#allocation7 + $0x10] sm:$0xf]
        %v1388 = vld [vmem:[#allocation7 + $0x14] sm:$0xf]
        %v1389 = vld [vmem:[#allocation7 + $0x18] sm:$0xf]
        %v1390 = vld [vmem:[#allocation7 + $0x1c] sm:$0xf]
        %v1391 = vld [vmem:[#allocation7 + $0x20] sm:$0xf]
        %v1392 = vld [vmem:[#allocation7 + $0x24] sm:$0xf]
        %v1393 = vld [vmem:[#allocation7 + $0x28] sm:$0xf]
        %v1394 = vld [vmem:[#allocation7 + $0x2c] sm:$0xf]
        %v1395 = vld [vmem:[#allocation7 + $0x30] sm:$0xf]
        %v1396 = vld [vmem:[#allocation7 + $0x34] sm:$0xf]
        %v1397 = vld [vmem:[#allocation7 + $0x38] sm:$0xf]
        %v1398 = vld [vmem:[#allocation7 + $0x3c] sm:$0xf]
        %v1415 = vunpack.c.l.b16 %v1383
        %v1416 = vunpack.c.l.b16 %v1384
        %v1417 = vunpack.c.l.b16 %v1385
        %v1418 = vunpack.c.l.b16 %v1386
        %v1419 = vunpack.c.l.b16 %v1387
        %v1420 = vunpack.c.l.b16 %v1388
        %v1421 = vunpack.c.l.b16 %v1389
        %v1422 = vunpack.c.l.b16 %v1390
        %v1423 = vunpack.c.l.b16 %v1391
        %v1424 = vunpack.c.l.b16 %v1392
        %v1425 = vunpack.c.l.b16 %v1393
        %v1426 = vunpack.c.l.b16 %v1394
        %v1427 = vunpack.c.l.b16 %v1395
        %v1428 = vunpack.c.l.b16 %v1396
        %v1429 = vunpack.c.l.b16 %v1397
        %v1430 = vunpack.c.l.b16 %v1398
        %v1431 = vpack.c.b16 %v1416, %v1415
        %v1432 = vpack.c.b16 %v1418, %v1417
        %v1433 = vpack.c.b16 %v1420, %v1419
        %v1434 = vpack.c.b16 %v1422, %v1421
        %v1435 = vpack.c.b16 %v1424, %v1423
        %v1436 = vpack.c.b16 %v1426, %v1425
        %v1437 = vpack.c.b16 %v1428, %v1427
        %v1438 = vpack.c.b16 %v1430, %v1429
        %1447 = vmatprep.subr.bf16.mxu0 0
        %1448 = vmatpush1.bf16.msra.mxu0 %v1431
        %1449 = vmatprep.subr.bf16.mxu0 0
        %1450 = vmatpush1.bf16.msra.mxu0 %v1432
        %1451 = vmatprep.subr.bf16.mxu0 0
        %1452 = vmatpush1.bf16.msra.mxu0 %v1433
        %1453 = vmatprep.subr.bf16.mxu0 0
        %1454 = vmatpush1.bf16.msra.mxu0 %v1434
        %1455 = vmatprep.subr.bf16.mxu0 0
        %1456 = vmatpush1.bf16.msra.mxu0 %v1435
        %1457 = vmatprep.subr.bf16.mxu0 0
        %1458 = vmatpush1.bf16.msra.mxu0 %v1436
        %1459 = vmatprep.subr.bf16.mxu0 0
        %1460 = vmatpush1.bf16.msra.mxu0 %v1437
        %1461 = vmatprep.subr.bf16.mxu0 0
        %1462 = vmatpush1.bf16.msra.mxu0 %v1438
        %1463 = vmatprep.subr.bf16.mxu0 0
        %1464 = vmatpush1.bf16.msra.mxu0 0
        %1465 = vmatprep.subr.bf16.mxu0 0
        %1466 = vmatpush1.bf16.msra.mxu0 0
        %1467 = vmatprep.subr.bf16.mxu0 0
        %1468 = vmatpush1.bf16.msra.mxu0 0
        %1469 = vmatprep.subr.bf16.mxu0 0
        %1470 = vmatpush1.bf16.msra.mxu0 0
        %1471 = vmatprep.subr.bf16.mxu0 0
        %1472 = vmatpush1.bf16.msra.mxu0 0
        %1473 = vmatprep.subr.bf16.mxu0 0
        %1474 = vmatpush1.bf16.msra.mxu0 0
        %1475 = vmatprep.subr.bf16.mxu0 0
        %1476 = vmatpush1.bf16.msra.mxu0 0
        %1477 = vmatprep.subr.bf16.mxu0 0
        %1478 = vmatpush1.bf16.msra.mxu0 0
        %1479 = vmatprep.mubr.bf16.mxu0 0
        %1480 = vmatmul.mubr.bf16.gmra.mrb[0].mxu0 %v1367
        %v1481 = vpop.f32.mrb[0].mxu0
        %v1482 = vadd.f32 0.0, %v1481
        %v1483 = vpop.f32.mrb[0].mxu0
        %v1484 = vpop.f32.mrb[0].mxu0
        %v1485 = vadd.f32 0.0, %v1484
        %v1486 = vpop.f32.mrb[0].mxu0
        %1487 = vmatprep.mubr.bf16.mxu0 0
        %1488 = vmatmul.mubr.bf16.gmra.mrb[0].mxu0 %v1368
        %v1489 = vpop.f32.mrb[0].mxu0
        %v1490 = vadd.f32 0.0, %v1489
        %v1491 = vpop.f32.mrb[0].mxu0
        %v1492 = vpop.f32.mrb[0].mxu0
        %v1493 = vadd.f32 0.0, %v1492
        %v1494 = vpop.f32.mrb[0].mxu0
        %1495 = vmatprep.mubr.bf16.mxu0 0
        %1496 = vmatmul.mubr.bf16.gmra.mrb[0].mxu0 %v1369
        %v1497 = vpop.f32.mrb[0].mxu0
        %v1498 = vadd.f32 0.0, %v1497
        %v1499 = vpop.f32.mrb[0].mxu0
        %v1500 = vpop.f32.mrb[0].mxu0
        %v1501 = vadd.f32 0.0, %v1500
        %v1502 = vpop.f32.mrb[0].mxu0
        %1503 = vmatprep.mubr.bf16.mxu0 0
        %1504 = vmatmul.mubr.bf16.gmra.mrb[0].mxu0 %v1370
        %v1505 = vpop.f32.mrb[0].mxu0
        %v1506 = vadd.f32 0.0, %v1505
        %v1507 = vpop.f32.mrb[0].mxu0
        %v1508 = vpop.f32.mrb[0].mxu0
        %v1509 = vadd.f32 0.0, %v1508
        %v1510 = vpop.f32.mrb[0].mxu0
        %1511 = vmatprep.mubr.bf16.mxu0 0
        %1512 = vmatmul.mubr.bf16.gmra.mrb[0].mxu0 %v1371
        %v1513 = vpop.f32.mrb[0].mxu0
        %v1514 = vadd.f32 0.0, %v1513
        %v1515 = vpop.f32.mrb[0].mxu0
        %v1516 = vpop.f32.mrb[0].mxu0
        %v1517 = vadd.f32 0.0, %v1516
        %v1518 = vpop.f32.mrb[0].mxu0
        %1519 = vmatprep.mubr.bf16.mxu0 0
        %1520 = vmatmul.mubr.bf16.gmra.mrb[0].mxu0 %v1372
        %v1521 = vpop.f32.mrb[0].mxu0
        %v1522 = vadd.f32 0.0, %v1521
        %v1523 = vpop.f32.mrb[0].mxu0
        %v1524 = vpop.f32.mrb[0].mxu0
        %v1525 = vadd.f32 0.0, %v1524
        %v1526 = vpop.f32.mrb[0].mxu0
        %1527 = vmatprep.mubr.bf16.mxu0 0
        %1528 = vmatmul.mubr.bf16.gmra.mrb[0].mxu0 %v1373
        %v1529 = vpop.f32.mrb[0].mxu0
        %v1530 = vadd.f32 0.0, %v1529
        %v1531 = vpop.f32.mrb[0].mxu0
        %v1532 = vpop.f32.mrb[0].mxu0
        %v1533 = vadd.f32 0.0, %v1532
        %v1534 = vpop.f32.mrb[0].mxu0
        %1535 = vmatprep.mubr.bf16.mxu0 0
        %1536 = vmatmul.mubr.bf16.gmra.mrb[0].mxu0 %v1374
        %v1537 = vpop.f32.mrb[0].mxu0
        %v1538 = vadd.f32 0.0, %v1537
        %v1539 = vpop.f32.mrb[0].mxu0
        %v1540 = vpop.f32.mrb[0].mxu0
        %v1541 = vadd.f32 0.0, %v1540
        %v1542 = vpop.f32.mrb[0].mxu0
        %1543 = vmatprep.mubr.bf16.mxu0 0
        %1544 = vmatmul.mubr.bf16.gmra.mrb[0].mxu0 %v1375
        %v1545 = vpop.f32.mrb[0].mxu0
        %v1546 = vadd.f32 0.0, %v1545
        %v1547 = vpop.f32.mrb[0].mxu0
        %v1548 = vpop.f32.mrb[0].mxu0
        %v1549 = vadd.f32 0.0, %v1548
        %v1550 = vpop.f32.mrb[0].mxu0
        %1551 = vmatprep.mubr.bf16.mxu0 0
        %1552 = vmatmul.mubr.bf16.gmra.mrb[0].mxu0 %v1376
        %v1553 = vpop.f32.mrb[0].mxu0
        %v1554 = vadd.f32 0.0, %v1553
        %v1555 = vpop.f32.mrb[0].mxu0
        %v1556 = vpop.f32.mrb[0].mxu0
        %v1557 = vadd.f32 0.0, %v1556
        %v1558 = vpop.f32.mrb[0].mxu0
        %1559 = vmatprep.mubr.bf16.mxu0 0
        %1560 = vmatmul.mubr.bf16.gmra.mrb[0].mxu0 %v1377
        %v1561 = vpop.f32.mrb[0].mxu0
        %v1562 = vadd.f32 0.0, %v1561
        %v1563 = vpop.f32.mrb[0].mxu0
        %v1564 = vpop.f32.mrb[0].mxu0
        %v1565 = vadd.f32 0.0, %v1564
        %v1566 = vpop.f32.mrb[0].mxu0
        %1567 = vmatprep.mubr.bf16.mxu0 0
        %1568 = vmatmul.mubr.bf16.gmra.mrb[0].mxu0 %v1378
        %v1569 = vpop.f32.mrb[0].mxu0
        %v1570 = vadd.f32 0.0, %v1569
        %v1571 = vpop.f32.mrb[0].mxu0
        %v1572 = vpop.f32.mrb[0].mxu0
        %v1573 = vadd.f32 0.0, %v1572
        %v1574 = vpop.f32.mrb[0].mxu0
        %1575 = vmatprep.mubr.bf16.mxu0 0
        %1576 = vmatmul.mubr.bf16.gmra.mrb[0].mxu0 %v1379
        %v1577 = vpop.f32.mrb[0].mxu0
        %v1578 = vadd.f32 0.0, %v1577
        %v1579 = vpop.f32.mrb[0].mxu0
        %v1580 = vpop.f32.mrb[0].mxu0
        %v1581 = vadd.f32 0.0, %v1580
        %v1582 = vpop.f32.mrb[0].mxu0
        %1583 = vmatprep.mubr.bf16.mxu0 0
        %1584 = vmatmul.mubr.bf16.gmra.mrb[0].mxu0 %v1380
        %v1585 = vpop.f32.mrb[0].mxu0
        %v1586 = vadd.f32 0.0, %v1585
        %v1587 = vpop.f32.mrb[0].mxu0
        %v1588 = vpop.f32.mrb[0].mxu0
        %v1589 = vadd.f32 0.0, %v1588
        %v1590 = vpop.f32.mrb[0].mxu0
        %1591 = vmatprep.mubr.bf16.mxu0 0
        %1592 = vmatmul.mubr.bf16.gmra.mrb[0].mxu0 %v1381
        %v1593 = vpop.f32.mrb[0].mxu0
        %v1594 = vadd.f32 0.0, %v1593
        %v1595 = vpop.f32.mrb[0].mxu0
        %v1596 = vpop.f32.mrb[0].mxu0
        %v1597 = vadd.f32 0.0, %v1596
        %v1598 = vpop.f32.mrb[0].mxu0
        %1599 = vmatprep.mubr.bf16.mxu0 0
        %1600 = vmatmul.mubr.bf16.gmra.mrb[0].mxu0 %v1382
        %v1601 = vpop.f32.mrb[0].mxu0
        %v1602 = vadd.f32 0.0, %v1601
        %v1603 = vpop.f32.mrb[0].mxu0
        %v1604 = vpop.f32.mrb[0].mxu0
        %v1605 = vadd.f32 0.0, %v1604
        %v1606 = vpop.f32.mrb[0].mxu0
        %1607 = vdwg.mxu0
        %v1608 = vadd.f32 %v685, %v1482
        %v1609 = vadd.f32 %v688, %v1485
        %v1610 = vadd.f32 %v693, %v1490
        %v1611 = vadd.f32 %v696, %v1493
        %v1612 = vadd.f32 %v701, %v1498
        %v1613 = vadd.f32 %v704, %v1501
        %v1614 = vadd.f32 %v709, %v1506
        %v1615 = vadd.f32 %v712, %v1509
        %v1616 = vadd.f32 %v717, %v1514
        %v1617 = vadd.f32 %v720, %v1517
        %v1618 = vadd.f32 %v725, %v1522
        %v1619 = vadd.f32 %v728, %v1525
        %v1620 = vadd.f32 %v733, %v1530
        %v1621 = vadd.f32 %v736, %v1533
        %v1622 = vadd.f32 %v741, %v1538
        %v1623 = vadd.f32 %v744, %v1541
        %v1624 = vadd.f32 %v749, %v1546
        %v1625 = vadd.f32 %v752, %v1549
        %v1626 = vadd.f32 %v757, %v1554
        %v1627 = vadd.f32 %v760, %v1557
        %v1628 = vadd.f32 %v765, %v1562
        %v1629 = vadd.f32 %v768, %v1565
        %v1630 = vadd.f32 %v773, %v1570
        %v1631 = vadd.f32 %v776, %v1573
        %v1632 = vadd.f32 %v781, %v1578
        %v1633 = vadd.f32 %v784, %v1581
        %v1634 = vadd.f32 %v789, %v1586
        %v1635 = vadd.f32 %v792, %v1589
        %v1636 = vadd.f32 %v797, %v1594
        %v1637 = vadd.f32 %v800, %v1597
        %v1638 = vadd.f32 %v805, %v1602
        %v1639 = vadd.f32 %v808, %v1605
        %v1640 = vld [vmem:[%s4] sm:$0x1]
        %v1641 = vunpack.c.l.bf16 %v1640
        %v1642 = vlaneseq
        %v1643 = vshrl.u32 %v1642, 7
        %v1644 = vsub.s32 0, %v1643
        %v1645 = vrot.slane %v1641, %v1644
        %v1646 = vadd.f32 %v1608, %v1645
        %v1647 = vadd.f32 %v1609, %v1645
        %v1648 = vadd.f32 %v1610, %v1645
        %v1649 = vadd.f32 %v1611, %v1645
        %v1650 = vadd.f32 %v1612, %v1645
        %v1651 = vadd.f32 %v1613, %v1645
        %v1652 = vadd.f32 %v1614, %v1645
        %v1653 = vadd.f32 %v1615, %v1645
        %v1654 = vadd.f32 %v1616, %v1645
        %v1655 = vadd.f32 %v1617, %v1645
        %v1656 = vadd.f32 %v1618, %v1645
        %v1657 = vadd.f32 %v1619, %v1645
        %v1658 = vadd.f32 %v1620, %v1645
        %v1659 = vadd.f32 %v1621, %v1645
        %v1660 = vadd.f32 %v1622, %v1645
        %v1661 = vadd.f32 %v1623, %v1645
        %v1662 = vadd.f32 %v1624, %v1645
        %v1663 = vadd.f32 %v1625, %v1645
        %v1664 = vadd.f32 %v1626, %v1645
        %v1665 = vadd.f32 %v1627, %v1645
        %v1666 = vadd.f32 %v1628, %v1645
        %v1667 = vadd.f32 %v1629, %v1645
        %v1668 = vadd.f32 %v1630, %v1645
        %v1669 = vadd.f32 %v1631, %v1645
        %v1670 = vadd.f32 %v1632, %v1645
        %v1671 = vadd.f32 %v1633, %v1645
        %v1672 = vadd.f32 %v1634, %v1645
        %v1673 = vadd.f32 %v1635, %v1645
        %v1674 = vadd.f32 %v1636, %v1645
        %v1675 = vadd.f32 %v1637, %v1645
        %v1676 = vadd.f32 %v1638, %v1645
        %v1677 = vadd.f32 %v1639, %v1645
        %1678 = vadd.xlane.f32.xlu0 %v1646
        %v1679 = vpop.xlane.xlu0 %1678
        %1680 = vadd.xlane.f32.xlu0 %v1647
        %v1681 = vpop.xlane.xlu0 %1680
        %1682 = vadd.xlane.f32.xlu0 %v1648
        %v1683 = vpop.xlane.xlu0 %1682
        %1684 = vadd.xlane.f32.xlu0 %v1649
        %v1685 = vpop.xlane.xlu0 %1684
        %1686 = vadd.xlane.f32.xlu0 %v1650
        %v1687 = vpop.xlane.xlu0 %1686
        %1688 = vadd.xlane.f32.xlu0 %v1651
        %v1689 = vpop.xlane.xlu0 %1688
        %1690 = vadd.xlane.f32.xlu0 %v1652
        %v1691 = vpop.xlane.xlu0 %1690
        %1692 = vadd.xlane.f32.xlu0 %v1653
        %v1693 = vpop.xlane.xlu0 %1692
        %1694 = vadd.xlane.f32.xlu0 %v1654
        %v1695 = vpop.xlane.xlu0 %1694
        %1696 = vadd.xlane.f32.xlu0 %v1655
        %v1697 = vpop.xlane.xlu0 %1696
        %1698 = vadd.xlane.f32.xlu0 %v1656
        %v1699 = vpop.xlane.xlu0 %1698
        %1700 = vadd.xlane.f32.xlu0 %v1657
        %v1701 = vpop.xlane.xlu0 %1700
        %1702 = vadd.xlane.f32.xlu0 %v1658
        %v1703 = vpop.xlane.xlu0 %1702
        %1704 = vadd.xlane.f32.xlu0 %v1659
        %v1705 = vpop.xlane.xlu0 %1704
        %1706 = vadd.xlane.f32.xlu0 %v1660
        %v1707 = vpop.xlane.xlu0 %1706
        %1708 = vadd.xlane.f32.xlu0 %v1661
        %v1709 = vpop.xlane.xlu0 %1708
        %1710 = vadd.xlane.f32.xlu0 %v1662
        %v1711 = vpop.xlane.xlu0 %1710
        %1712 = vadd.xlane.f32.xlu0 %v1663
        %v1713 = vpop.xlane.xlu0 %1712
        %1714 = vadd.xlane.f32.xlu0 %v1664
        %v1715 = vpop.xlane.xlu0 %1714
        %1716 = vadd.xlane.f32.xlu0 %v1665
        %v1717 = vpop.xlane.xlu0 %1716
        %1718 = vadd.xlane.f32.xlu0 %v1666
        %v1719 = vpop.xlane.xlu0 %1718
        %1720 = vadd.xlane.f32.xlu0 %v1667
        %v1721 = vpop.xlane.xlu0 %1720
        %1722 = vadd.xlane.f32.xlu0 %v1668
        %v1723 = vpop.xlane.xlu0 %1722
        %1724 = vadd.xlane.f32.xlu0 %v1669
        %v1725 = vpop.xlane.xlu0 %1724
        %1726 = vadd.xlane.f32.xlu0 %v1670
        %v1727 = vpop.xlane.xlu0 %1726
        %1728 = vadd.xlane.f32.xlu0 %v1671
        %v1729 = vpop.xlane.xlu0 %1728
        %1730 = vadd.xlane.f32.xlu0 %v1672
        %v1731 = vpop.xlane.xlu0 %1730
        %1732 = vadd.xlane.f32.xlu0 %v1673
        %v1733 = vpop.xlane.xlu0 %1732
        %1734 = vadd.xlane.f32.xlu0 %v1674
        %v1735 = vpop.xlane.xlu0 %1734
        %1736 = vadd.xlane.f32.xlu0 %v1675
        %v1737 = vpop.xlane.xlu0 %1736
        %1738 = vadd.xlane.f32.xlu0 %v1676
        %v1739 = vpop.xlane.xlu0 %1738
        %1740 = vadd.xlane.f32.xlu0 %v1677
        %v1741 = vpop.xlane.xlu0 %1740
        %v1742 = vmul.f32 %v1679, 0.010416667
        %v1743 = vmul.f32 %v1681, 0.010416667
        %v1744 = vmul.f32 %v1683, 0.010416667
        %v1745 = vmul.f32 %v1685, 0.010416667
        %v1746 = vmul.f32 %v1687, 0.010416667
        %v1747 = vmul.f32 %v1689, 0.010416667
        %v1748 = vmul.f32 %v1691, 0.010416667
        %v1749 = vmul.f32 %v1693, 0.010416667
        %v1750 = vmul.f32 %v1695, 0.010416667
        %v1751 = vmul.f32 %v1697, 0.010416667
        %v1752 = vmul.f32 %v1699, 0.010416667
        %v1753 = vmul.f32 %v1701, 0.010416667
        %v1754 = vmul.f32 %v1703, 0.010416667
        %v1755 = vmul.f32 %v1705, 0.010416667
        %v1756 = vmul.f32 %v1707, 0.010416667
        %v1757 = vmul.f32 %v1709, 0.010416667
        %v1758 = vmul.f32 %v1711, 0.010416667
        %v1759 = vmul.f32 %v1713, 0.010416667
        %v1760 = vmul.f32 %v1715, 0.010416667
        %v1761 = vmul.f32 %v1717, 0.010416667
        %v1762 = vmul.f32 %v1719, 0.010416667
        %v1763 = vmul.f32 %v1721, 0.010416667
        %v1764 = vmul.f32 %v1723, 0.010416667
        %v1765 = vmul.f32 %v1725, 0.010416667
        %v1766 = vmul.f32 %v1727, 0.010416667
        %v1767 = vmul.f32 %v1729, 0.010416667
        %v1768 = vmul.f32 %v1731, 0.010416667
        %v1769 = vmul.f32 %v1733, 0.010416667
        %v1770 = vmul.f32 %v1735, 0.010416667
        %v1771 = vmul.f32 %v1737, 0.010416667
        %v1772 = vmul.f32 %v1739, 0.010416667
        %v1773 = vmul.f32 %v1741, 0.010416667
        %v1774 = vmul.f32 %v1646, %v1646
        %v1775 = vmul.f32 %v1647, %v1647
        %v1776 = vmul.f32 %v1648, %v1648
        %v1777 = vmul.f32 %v1649, %v1649
        %v1778 = vmul.f32 %v1650, %v1650
        %v1779 = vmul.f32 %v1651, %v1651
        %v1780 = vmul.f32 %v1652, %v1652
        %v1781 = vmul.f32 %v1653, %v1653
        %v1782 = vmul.f32 %v1654, %v1654
        %v1783 = vmul.f32 %v1655, %v1655
        %v1784 = vmul.f32 %v1656, %v1656
        %v1785 = vmul.f32 %v1657, %v1657
        %v1786 = vmul.f32 %v1658, %v1658
        %v1787 = vmul.f32 %v1659, %v1659
        %v1788 = vmul.f32 %v1660, %v1660
        %v1789 = vmul.f32 %v1661, %v1661
        %v1790 = vmul.f32 %v1662, %v1662
        %v1791 = vmul.f32 %v1663, %v1663
        %v1792 = vmul.f32 %v1664, %v1664
        %v1793 = vmul.f32 %v1665, %v1665
        %v1794 = vmul.f32 %v1666, %v1666
        %v1795 = vmul.f32 %v1667, %v1667
        %v1796 = vmul.f32 %v1668, %v1668
        %v1797 = vmul.f32 %v1669, %v1669
        %v1798 = vmul.f32 %v1670, %v1670
        %v1799 = vmul.f32 %v1671, %v1671
        %v1800 = vmul.f32 %v1672, %v1672
        %v1801 = vmul.f32 %v1673, %v1673
        %v1802 = vmul.f32 %v1674, %v1674
        %v1803 = vmul.f32 %v1675, %v1675
        %v1804 = vmul.f32 %v1676, %v1676
        %v1805 = vmul.f32 %v1677, %v1677
        %1806 = vadd.xlane.f32.xlu0 %v1774
        %v1807 = vpop.xlane.xlu0 %1806
        %1808 = vadd.xlane.f32.xlu0 %v1775
        %v1809 = vpop.xlane.xlu0 %1808
        %1810 = vadd.xlane.f32.xlu0 %v1776
        %v1811 = vpop.xlane.xlu0 %1810
        %1812 = vadd.xlane.f32.xlu0 %v1777
        %v1813 = vpop.xlane.xlu0 %1812
        %1814 = vadd.xlane.f32.xlu0 %v1778
        %v1815 = vpop.xlane.xlu0 %1814
        %1816 = vadd.xlane.f32.xlu0 %v1779
        %v1817 = vpop.xlane.xlu0 %1816
        %1818 = vadd.xlane.f32.xlu0 %v1780
        %v1819 = vpop.xlane.xlu0 %1818
        %1820 = vadd.xlane.f32.xlu0 %v1781
        %v1821 = vpop.xlane.xlu0 %1820
        %1822 = vadd.xlane.f32.xlu0 %v1782
        %v1823 = vpop.xlane.xlu0 %1822
        %1824 = vadd.xlane.f32.xlu0 %v1783
        %v1825 = vpop.xlane.xlu0 %1824
        %1826 = vadd.xlane.f32.xlu0 %v1784
        %v1827 = vpop.xlane.xlu0 %1826
        %1828 = vadd.xlane.f32.xlu0 %v1785
        %v1829 = vpop.xlane.xlu0 %1828
        %1830 = vadd.xlane.f32.xlu0 %v1786
        %v1831 = vpop.xlane.xlu0 %1830
        %1832 = vadd.xlane.f32.xlu0 %v1787
        %v1833 = vpop.xlane.xlu0 %1832
        %1834 = vadd.xlane.f32.xlu0 %v1788
        %v1835 = vpop.xlane.xlu0 %1834
        %1836 = vadd.xlane.f32.xlu0 %v1789
        %v1837 = vpop.xlane.xlu0 %1836
        %1838 = vadd.xlane.f32.xlu0 %v1790
        %v1839 = vpop.xlane.xlu0 %1838
        %1840 = vadd.xlane.f32.xlu0 %v1791
        %v1841 = vpop.xlane.xlu0 %1840
        %1842 = vadd.xlane.f32.xlu0 %v1792
        %v1843 = vpop.xlane.xlu0 %1842
        %1844 = vadd.xlane.f32.xlu0 %v1793
        %v1845 = vpop.xlane.xlu0 %1844
        %1846 = vadd.xlane.f32.xlu0 %v1794
        %v1847 = vpop.xlane.xlu0 %1846
        %1848 = vadd.xlane.f32.xlu0 %v1795
        %v1849 = vpop.xlane.xlu0 %1848
        %1850 = vadd.xlane.f32.xlu0 %v1796
        %v1851 = vpop.xlane.xlu0 %1850
        %1852 = vadd.xlane.f32.xlu0 %v1797
        %v1853 = vpop.xlane.xlu0 %1852
        %1854 = vadd.xlane.f32.xlu0 %v1798
        %v1855 = vpop.xlane.xlu0 %1854
        %1856 = vadd.xlane.f32.xlu0 %v1799
        %v1857 = vpop.xlane.xlu0 %1856
        %1858 = vadd.xlane.f32.xlu0 %v1800
        %v1859 = vpop.xlane.xlu0 %1858
        %1860 = vadd.xlane.f32.xlu0 %v1801
        %v1861 = vpop.xlane.xlu0 %1860
        %1862 = vadd.xlane.f32.xlu0 %v1802
        %v1863 = vpop.xlane.xlu0 %1862
        %1864 = vadd.xlane.f32.xlu0 %v1803
        %v1865 = vpop.xlane.xlu0 %1864
        %1866 = vadd.xlane.f32.xlu0 %v1804
        %v1867 = vpop.xlane.xlu0 %1866
        %1868 = vadd.xlane.f32.xlu0 %v1805
        %v1869 = vpop.xlane.xlu0 %1868
        %v1870 = vmul.f32 %v1807, 0.010416667
        %v1871 = vmul.f32 %v1809, 0.010416667
        %v1872 = vmul.f32 %v1811, 0.010416667
        %v1873 = vmul.f32 %v1813, 0.010416667
        %v1874 = vmul.f32 %v1815, 0.010416667
        %v1875 = vmul.f32 %v1817, 0.010416667
        %v1876 = vmul.f32 %v1819, 0.010416667
        %v1877 = vmul.f32 %v1821, 0.010416667
        %v1878 = vmul.f32 %v1823, 0.010416667
        %v1879 = vmul.f32 %v1825, 0.010416667
        %v1880 = vmul.f32 %v1827, 0.010416667
        %v1881 = vmul.f32 %v1829, 0.010416667
        %v1882 = vmul.f32 %v1831, 0.010416667
        %v1883 = vmul.f32 %v1833, 0.010416667
        %v1884 = vmul.f32 %v1835, 0.010416667
        %v1885 = vmul.f32 %v1837, 0.010416667
        %v1886 = vmul.f32 %v1839, 0.010416667
        %v1887 = vmul.f32 %v1841, 0.010416667
        %v1888 = vmul.f32 %v1843, 0.010416667
        %v1889 = vmul.f32 %v1845, 0.010416667
        %v1890 = vmul.f32 %v1847, 0.010416667
        %v1891 = vmul.f32 %v1849, 0.010416667
        %v1892 = vmul.f32 %v1851, 0.010416667
        %v1893 = vmul.f32 %v1853, 0.010416667
        %v1894 = vmul.f32 %v1855, 0.010416667
        %v1895 = vmul.f32 %v1857, 0.010416667
        %v1896 = vmul.f32 %v1859, 0.010416667
        %v1897 = vmul.f32 %v1861, 0.010416667
        %v1898 = vmul.f32 %v1863, 0.010416667
        %v1899 = vmul.f32 %v1865, 0.010416667
        %v1900 = vmul.f32 %v1867, 0.010416667
        %v1901 = vmul.f32 %v1869, 0.010416667
        %v1902 = vmul.f32 %v1742, %v1742
        %v1903 = vmul.f32 %v1743, %v1743
        %v1904 = vmul.f32 %v1744, %v1744
        %v1905 = vmul.f32 %v1745, %v1745
        %v1906 = vmul.f32 %v1746, %v1746
        %v1907 = vmul.f32 %v1747, %v1747
        %v1908 = vmul.f32 %v1748, %v1748
        %v1909 = vmul.f32 %v1749, %v1749
        %v1910 = vmul.f32 %v1750, %v1750
        %v1911 = vmul.f32 %v1751, %v1751
        %v1912 = vmul.f32 %v1752, %v1752
        %v1913 = vmul.f32 %v1753, %v1753
        %v1914 = vmul.f32 %v1754, %v1754
        %v1915 = vmul.f32 %v1755, %v1755
        %v1916 = vmul.f32 %v1756, %v1756
        %v1917 = vmul.f32 %v1757, %v1757
        %v1918 = vmul.f32 %v1758, %v1758
        %v1919 = vmul.f32 %v1759, %v1759
        %v1920 = vmul.f32 %v1760, %v1760
        %v1921 = vmul.f32 %v1761, %v1761
        %v1922 = vmul.f32 %v1762, %v1762
        %v1923 = vmul.f32 %v1763, %v1763
        %v1924 = vmul.f32 %v1764, %v1764
        %v1925 = vmul.f32 %v1765, %v1765
        %v1926 = vmul.f32 %v1766, %v1766
        %v1927 = vmul.f32 %v1767, %v1767
        %v1928 = vmul.f32 %v1768, %v1768
        %v1929 = vmul.f32 %v1769, %v1769
        %v1930 = vmul.f32 %v1770, %v1770
        %v1931 = vmul.f32 %v1771, %v1771
        %v1932 = vmul.f32 %v1772, %v1772
        %v1933 = vmul.f32 %v1773, %v1773
        %v1934 = vsub.f32 %v1870, %v1902
        %v1935 = vsub.f32 %v1871, %v1903
        %v1936 = vsub.f32 %v1872, %v1904
        %v1937 = vsub.f32 %v1873, %v1905
        %v1938 = vsub.f32 %v1874, %v1906
        %v1939 = vsub.f32 %v1875, %v1907
        %v1940 = vsub.f32 %v1876, %v1908
        %v1941 = vsub.f32 %v1877, %v1909
        %v1942 = vsub.f32 %v1878, %v1910
        %v1943 = vsub.f32 %v1879, %v1911
        %v1944 = vsub.f32 %v1880, %v1912
        %v1945 = vsub.f32 %v1881, %v1913
        %v1946 = vsub.f32 %v1882, %v1914
        %v1947 = vsub.f32 %v1883, %v1915
        %v1948 = vsub.f32 %v1884, %v1916
        %v1949 = vsub.f32 %v1885, %v1917
        %v1950 = vsub.f32 %v1886, %v1918
        %v1951 = vsub.f32 %v1887, %v1919
        %v1952 = vsub.f32 %v1888, %v1920
        %v1953 = vsub.f32 %v1889, %v1921
        %v1954 = vsub.f32 %v1890, %v1922
        %v1955 = vsub.f32 %v1891, %v1923
        %v1956 = vsub.f32 %v1892, %v1924
        %v1957 = vsub.f32 %v1893, %v1925
        %v1958 = vsub.f32 %v1894, %v1926
        %v1959 = vsub.f32 %v1895, %v1927
        %v1960 = vsub.f32 %v1896, %v1928
        %v1961 = vsub.f32 %v1897, %v1929
        %v1962 = vsub.f32 %v1898, %v1930
        %v1963 = vsub.f32 %v1899, %v1931
        %v1964 = vsub.f32 %v1900, %v1932
        %v1965 = vsub.f32 %v1901, %v1933
        %v1966 = vmax.f32 %v1934, 0.0
        %v1967 = vmax.f32 %v1935, 0.0
        %v1968 = vmax.f32 %v1936, 0.0
        %v1969 = vmax.f32 %v1937, 0.0
        %v1970 = vmax.f32 %v1938, 0.0
        %v1971 = vmax.f32 %v1939, 0.0
        %v1972 = vmax.f32 %v1940, 0.0
        %v1973 = vmax.f32 %v1941, 0.0
        %v1974 = vmax.f32 %v1942, 0.0
        %v1975 = vmax.f32 %v1943, 0.0
        %v1976 = vmax.f32 %v1944, 0.0
        %v1977 = vmax.f32 %v1945, 0.0
        %v1978 = vmax.f32 %v1946, 0.0
        %v1979 = vmax.f32 %v1947, 0.0
        %v1980 = vmax.f32 %v1948, 0.0
        %v1981 = vmax.f32 %v1949, 0.0
        %v1982 = vmax.f32 %v1950, 0.0
        %v1983 = vmax.f32 %v1951, 0.0
        %v1984 = vmax.f32 %v1952, 0.0
        %v1985 = vmax.f32 %v1953, 0.0
        %v1986 = vmax.f32 %v1954, 0.0
        %v1987 = vmax.f32 %v1955, 0.0
        %v1988 = vmax.f32 %v1956, 0.0
        %v1989 = vmax.f32 %v1957, 0.0
        %v1990 = vmax.f32 %v1958, 0.0
        %v1991 = vmax.f32 %v1959, 0.0
        %v1992 = vmax.f32 %v1960, 0.0
        %v1993 = vmax.f32 %v1961, 0.0
        %v1994 = vmax.f32 %v1962, 0.0
        %v1995 = vmax.f32 %v1963, 0.0
        %v1996 = vmax.f32 %v1964, 0.0
        %v1997 = vmax.f32 %v1965, 0.0
        %v1998 = vsub.f32 %v1646, %v1742
        %v1999 = vsub.f32 %v1647, %v1743
        %v2000 = vsub.f32 %v1648, %v1744
        %v2001 = vsub.f32 %v1649, %v1745
        %v2002 = vsub.f32 %v1650, %v1746
        %v2003 = vsub.f32 %v1651, %v1747
        %v2004 = vsub.f32 %v1652, %v1748
        %v2005 = vsub.f32 %v1653, %v1749
        %v2006 = vsub.f32 %v1654, %v1750
        %v2007 = vsub.f32 %v1655, %v1751
        %v2008 = vsub.f32 %v1656, %v1752
        %v2009 = vsub.f32 %v1657, %v1753
        %v2010 = vsub.f32 %v1658, %v1754
        %v2011 = vsub.f32 %v1659, %v1755
        %v2012 = vsub.f32 %v1660, %v1756
        %v2013 = vsub.f32 %v1661, %v1757
        %v2014 = vsub.f32 %v1662, %v1758
        %v2015 = vsub.f32 %v1663, %v1759
        %v2016 = vsub.f32 %v1664, %v1760
        %v2017 = vsub.f32 %v1665, %v1761
        %v2018 = vsub.f32 %v1666, %v1762
        %v2019 = vsub.f32 %v1667, %v1763
        %v2020 = vsub.f32 %v1668, %v1764
        %v2021 = vsub.f32 %v1669, %v1765
        %v2022 = vsub.f32 %v1670, %v1766
        %v2023 = vsub.f32 %v1671, %v1767
        %v2024 = vsub.f32 %v1672, %v1768
        %v2025 = vsub.f32 %v1673, %v1769
        %v2026 = vsub.f32 %v1674, %v1770
        %v2027 = vsub.f32 %v1675, %v1771
        %v2028 = vsub.f32 %v1676, %v1772
        %v2029 = vsub.f32 %v1677, %v1773
        %v2030 = vadd.f32 %v1966, 1e-05
        %v2031 = vadd.f32 %v1967, 1e-05
        %v2032 = vadd.f32 %v1968, 1e-05
        %v2033 = vadd.f32 %v1969, 1e-05
        %v2034 = vadd.f32 %v1970, 1e-05
        %v2035 = vadd.f32 %v1971, 1e-05
        %v2036 = vadd.f32 %v1972, 1e-05
        %v2037 = vadd.f32 %v1973, 1e-05
        %v2038 = vadd.f32 %v1974, 1e-05
        %v2039 = vadd.f32 %v1975, 1e-05
        %v2040 = vadd.f32 %v1976, 1e-05
        %v2041 = vadd.f32 %v1977, 1e-05
        %v2042 = vadd.f32 %v1978, 1e-05
        %v2043 = vadd.f32 %v1979, 1e-05
        %v2044 = vadd.f32 %v1980, 1e-05
        %v2045 = vadd.f32 %v1981, 1e-05
        %v2046 = vadd.f32 %v1982, 1e-05
        %v2047 = vadd.f32 %v1983, 1e-05
        %v2048 = vadd.f32 %v1984, 1e-05
        %v2049 = vadd.f32 %v1985, 1e-05
        %v2050 = vadd.f32 %v1986, 1e-05
        %v2051 = vadd.f32 %v1987, 1e-05
        %v2052 = vadd.f32 %v1988, 1e-05
        %v2053 = vadd.f32 %v1989, 1e-05
        %v2054 = vadd.f32 %v1990, 1e-05
        %v2055 = vadd.f32 %v1991, 1e-05
        %v2056 = vadd.f32 %v1992, 1e-05
        %v2057 = vadd.f32 %v1993, 1e-05
        %v2058 = vadd.f32 %v1994, 1e-05
        %v2059 = vadd.f32 %v1995, 1e-05
        %v2060 = vadd.f32 %v1996, 1e-05
        %v2061 = vadd.f32 %v1997, 1e-05
        %v2062 = vrsqrt.pop %v2030
        %v2063 = vrsqrt.pop %v2031
        %v2064 = vrsqrt.pop %v2032
        %v2065 = vrsqrt.pop %v2033
        %v2066 = vrsqrt.pop %v2034
        %v2067 = vrsqrt.pop %v2035
        %v2068 = vrsqrt.pop %v2036
        %v2069 = vrsqrt.pop %v2037
        %v2070 = vrsqrt.pop %v2038
        %v2071 = vrsqrt.pop %v2039
        %v2072 = vrsqrt.pop %v2040
        %v2073 = vrsqrt.pop %v2041
        %v2074 = vrsqrt.pop %v2042
        %v2075 = vrsqrt.pop %v2043
        %v2076 = vrsqrt.pop %v2044
        %v2077 = vrsqrt.pop %v2045
        %v2078 = vrsqrt.pop %v2046
        %v2079 = vrsqrt.pop %v2047
        %v2080 = vrsqrt.pop %v2048
        %v2081 = vrsqrt.pop %v2049
        %v2082 = vrsqrt.pop %v2050
        %v2083 = vrsqrt.pop %v2051
        %v2084 = vrsqrt.pop %v2052
        %v2085 = vrsqrt.pop %v2053
        %v2086 = vrsqrt.pop %v2054
        %v2087 = vrsqrt.pop %v2055
        %v2088 = vrsqrt.pop %v2056
        %v2089 = vrsqrt.pop %v2057
        %v2090 = vrsqrt.pop %v2058
        %v2091 = vrsqrt.pop %v2059
        %v2092 = vrsqrt.pop %v2060
        %v2093 = vrsqrt.pop %v2061
        %v2094 = vmul.f32 %v1998, %v2062
        %v2095 = vmul.f32 %v1999, %v2063
        %v2096 = vmul.f32 %v2000, %v2064
        %v2097 = vmul.f32 %v2001, %v2065
        %v2098 = vmul.f32 %v2002, %v2066
        %v2099 = vmul.f32 %v2003, %v2067
        %v2100 = vmul.f32 %v2004, %v2068
        %v2101 = vmul.f32 %v2005, %v2069
        %v2102 = vmul.f32 %v2006, %v2070
        %v2103 = vmul.f32 %v2007, %v2071
        %v2104 = vmul.f32 %v2008, %v2072
        %v2105 = vmul.f32 %v2009, %v2073
        %v2106 = vmul.f32 %v2010, %v2074
        %v2107 = vmul.f32 %v2011, %v2075
        %v2108 = vmul.f32 %v2012, %v2076
        %v2109 = vmul.f32 %v2013, %v2077
        %v2110 = vmul.f32 %v2014, %v2078
        %v2111 = vmul.f32 %v2015, %v2079
        %v2112 = vmul.f32 %v2016, %v2080
        %v2113 = vmul.f32 %v2017, %v2081
        %v2114 = vmul.f32 %v2018, %v2082
        %v2115 = vmul.f32 %v2019, %v2083
        %v2116 = vmul.f32 %v2020, %v2084
        %v2117 = vmul.f32 %v2021, %v2085
        %v2118 = vmul.f32 %v2022, %v2086
        %v2119 = vmul.f32 %v2023, %v2087
        %v2120 = vmul.f32 %v2024, %v2088
        %v2121 = vmul.f32 %v2025, %v2089
        %v2122 = vmul.f32 %v2026, %v2090
        %v2123 = vmul.f32 %v2027, %v2091
        %v2124 = vmul.f32 %v2028, %v2092
        %v2125 = vmul.f32 %v2029, %v2093
        %v2126 = vlaneseq
        %v2127 = vshrl.u32 %v2126, 7
        %v2128 = vsub.s32 1, %v2127
        %v2129 = vrot.slane %v812, %v2128
        %v2130 = vmul.f32 %v2094, %v2129
        %v2131 = vmul.f32 %v2095, %v2129
        %v2132 = vmul.f32 %v2096, %v2129
        %v2133 = vmul.f32 %v2097, %v2129
        %v2134 = vmul.f32 %v2098, %v2129
        %v2135 = vmul.f32 %v2099, %v2129
        %v2136 = vmul.f32 %v2100, %v2129
        %v2137 = vmul.f32 %v2101, %v2129
        %v2138 = vmul.f32 %v2102, %v2129
        %v2139 = vmul.f32 %v2103, %v2129
        %v2140 = vmul.f32 %v2104, %v2129
        %v2141 = vmul.f32 %v2105, %v2129
        %v2142 = vmul.f32 %v2106, %v2129
        %v2143 = vmul.f32 %v2107, %v2129
        %v2144 = vmul.f32 %v2108, %v2129
        %v2145 = vmul.f32 %v2109, %v2129
        %v2146 = vmul.f32 %v2110, %v2129
        %v2147 = vmul.f32 %v2111, %v2129
        %v2148 = vmul.f32 %v2112, %v2129
        %v2149 = vmul.f32 %v2113, %v2129
        %v2150 = vmul.f32 %v2114, %v2129
        %v2151 = vmul.f32 %v2115, %v2129
        %v2152 = vmul.f32 %v2116, %v2129
        %v2153 = vmul.f32 %v2117, %v2129
        %v2154 = vmul.f32 %v2118, %v2129
        %v2155 = vmul.f32 %v2119, %v2129
        %v2156 = vmul.f32 %v2120, %v2129
        %v2157 = vmul.f32 %v2121, %v2129
        %v2158 = vmul.f32 %v2122, %v2129
        %v2159 = vmul.f32 %v2123, %v2129
        %v2160 = vmul.f32 %v2124, %v2129
        %v2161 = vmul.f32 %v2125, %v2129
        %v2162 = vlaneseq
        %v2163 = vshrl.u32 %v2162, 7
        %v2164 = vsub.s32 1, %v2163
        %v2165 = vrot.slane %v814, %v2164
        %v2166 = vadd.f32 %v2130, %v2165
        %v2167 = vadd.f32 %v2131, %v2165
        %v2168 = vadd.f32 %v2132, %v2165
        %v2169 = vadd.f32 %v2133, %v2165
        %v2170 = vadd.f32 %v2134, %v2165
        %v2171 = vadd.f32 %v2135, %v2165
        %v2172 = vadd.f32 %v2136, %v2165
        %v2173 = vadd.f32 %v2137, %v2165
        %v2174 = vadd.f32 %v2138, %v2165
        %v2175 = vadd.f32 %v2139, %v2165
        %v2176 = vadd.f32 %v2140, %v2165
        %v2177 = vadd.f32 %v2141, %v2165
        %v2178 = vadd.f32 %v2142, %v2165
        %v2179 = vadd.f32 %v2143, %v2165
        %v2180 = vadd.f32 %v2144, %v2165
        %v2181 = vadd.f32 %v2145, %v2165
        %v2182 = vadd.f32 %v2146, %v2165
        %v2183 = vadd.f32 %v2147, %v2165
        %v2184 = vadd.f32 %v2148, %v2165
        %v2185 = vadd.f32 %v2149, %v2165
        %v2186 = vadd.f32 %v2150, %v2165
        %v2187 = vadd.f32 %v2151, %v2165
        %v2188 = vadd.f32 %v2152, %v2165
        %v2189 = vadd.f32 %v2153, %v2165
        %v2190 = vadd.f32 %v2154, %v2165
        %v2191 = vadd.f32 %v2155, %v2165
        %v2192 = vadd.f32 %v2156, %v2165
        %v2193 = vadd.f32 %v2157, %v2165
        %v2194 = vadd.f32 %v2158, %v2165
        %v2195 = vadd.f32 %v2159, %v2165
        %v2196 = vadd.f32 %v2160, %v2165
        %v2197 = vadd.f32 %v2161, %v2165
        %v2198 = vmax.f32 %v2166, 0.0
        %v2199 = vmax.f32 %v2167, 0.0
        %v2200 = vmax.f32 %v2168, 0.0
        %v2201 = vmax.f32 %v2169, 0.0
        %v2202 = vmax.f32 %v2170, 0.0
        %v2203 = vmax.f32 %v2171, 0.0
        %v2204 = vmax.f32 %v2172, 0.0
        %v2205 = vmax.f32 %v2173, 0.0
        %v2206 = vmax.f32 %v2174, 0.0
        %v2207 = vmax.f32 %v2175, 0.0
        %v2208 = vmax.f32 %v2176, 0.0
        %v2209 = vmax.f32 %v2177, 0.0
        %v2210 = vmax.f32 %v2178, 0.0
        %v2211 = vmax.f32 %v2179, 0.0
        %v2212 = vmax.f32 %v2180, 0.0
        %v2213 = vmax.f32 %v2181, 0.0
        %v2214 = vmax.f32 %v2182, 0.0
        %v2215 = vmax.f32 %v2183, 0.0
        %v2216 = vmax.f32 %v2184, 0.0
        %v2217 = vmax.f32 %v2185, 0.0
        %v2218 = vmax.f32 %v2186, 0.0
        %v2219 = vmax.f32 %v2187, 0.0
        %v2220 = vmax.f32 %v2188, 0.0
        %v2221 = vmax.f32 %v2189, 0.0
        %v2222 = vmax.f32 %v2190, 0.0
        %v2223 = vmax.f32 %v2191, 0.0
        %v2224 = vmax.f32 %v2192, 0.0
        %v2225 = vmax.f32 %v2193, 0.0
        %v2226 = vmax.f32 %v2194, 0.0
        %v2227 = vmax.f32 %v2195, 0.0
        %v2228 = vmax.f32 %v2196, 0.0
        %v2229 = vmax.f32 %v2197, 0.0
        %v2230 = vpack.c.bf16 %v2199, %v2198
        %v2231 = vpack.c.bf16 %v2201, %v2200
        %v2232 = vpack.c.bf16 %v2203, %v2202
        %v2233 = vpack.c.bf16 %v2205, %v2204
        %v2234 = vpack.c.bf16 %v2207, %v2206
        %v2235 = vpack.c.bf16 %v2209, %v2208
        %v2236 = vpack.c.bf16 %v2211, %v2210
        %v2237 = vpack.c.bf16 %v2213, %v2212
        %v2238 = vpack.c.bf16 %v2215, %v2214
        %v2239 = vpack.c.bf16 %v2217, %v2216
        %v2240 = vpack.c.bf16 %v2219, %v2218
        %v2241 = vpack.c.bf16 %v2221, %v2220
        %v2242 = vpack.c.bf16 %v2223, %v2222
        %v2243 = vpack.c.bf16 %v2225, %v2224
        %v2244 = vpack.c.bf16 %v2227, %v2226
        %v2245 = vpack.c.bf16 %v2229, %v2228
        %s2246 = scalar_lea.vmem [#allocation7], 64
        %v2247 = vld [vmem:[%s2246] sm:$0xf]
        %v2248 = vld [vmem:[%s2246 + $0x4] sm:$0xf]
        %v2249 = vld [vmem:[%s2246 + $0x8] sm:$0xf]
        %v2250 = vld [vmem:[%s2246 + $0xc] sm:$0xf]
        %v2251 = vld [vmem:[%s2246 + $0x10] sm:$0xf]
        %v2252 = vld [vmem:[%s2246 + $0x14] sm:$0xf]
        %v2253 = vld [vmem:[%s2246 + $0x18] sm:$0xf]
        %v2254 = vld [vmem:[%s2246 + $0x1c] sm:$0xf]
        %v2255 = vld [vmem:[%s2246 + $0x20] sm:$0xf]
        %v2256 = vld [vmem:[%s2246 + $0x24] sm:$0xf]
        %v2257 = vld [vmem:[%s2246 + $0x28] sm:$0xf]
        %v2258 = vld [vmem:[%s2246 + $0x2c] sm:$0xf]
        %v2259 = vld [vmem:[%s2246 + $0x30] sm:$0xf]
        %v2260 = vld [vmem:[%s2246 + $0x34] sm:$0xf]
        %v2261 = vld [vmem:[%s2246 + $0x38] sm:$0xf]
        %v2262 = vld [vmem:[%s2246 + $0x3c] sm:$0xf]
        %v2279 = vunpack.c.l.b16 %v2247
        %v2280 = vunpack.c.l.b16 %v2248
        %v2281 = vunpack.c.l.b16 %v2249
        %v2282 = vunpack.c.l.b16 %v2250
        %v2283 = vunpack.c.l.b16 %v2251
        %v2284 = vunpack.c.l.b16 %v2252
        %v2285 = vunpack.c.l.b16 %v2253
        %v2286 = vunpack.c.l.b16 %v2254
        %v2287 = vunpack.c.l.b16 %v2255
        %v2288 = vunpack.c.l.b16 %v2256
        %v2289 = vunpack.c.l.b16 %v2257
        %v2290 = vunpack.c.l.b16 %v2258
        %v2291 = vunpack.c.l.b16 %v2259
        %v2292 = vunpack.c.l.b16 %v2260
        %v2293 = vunpack.c.l.b16 %v2261
        %v2294 = vunpack.c.l.b16 %v2262
        %v2295 = vpack.c.b16 %v2280, %v2279
        %v2296 = vpack.c.b16 %v2282, %v2281
        %v2297 = vpack.c.b16 %v2284, %v2283
        %v2298 = vpack.c.b16 %v2286, %v2285
        %v2299 = vpack.c.b16 %v2288, %v2287
        %v2300 = vpack.c.b16 %v2290, %v2289
        %v2301 = vpack.c.b16 %v2292, %v2291
        %v2302 = vpack.c.b16 %v2294, %v2293
        %2311 = vmatprep.subr.bf16.mxu0 0
        %2312 = vmatpush1.bf16.msra.mxu0 %v2295
        %2313 = vmatprep.subr.bf16.mxu0 0
        %2314 = vmatpush1.bf16.msra.mxu0 %v2296
        %2315 = vmatprep.subr.bf16.mxu0 0
        %2316 = vmatpush1.bf16.msra.mxu0 %v2297
        %2317 = vmatprep.subr.bf16.mxu0 0
        %2318 = vmatpush1.bf16.msra.mxu0 %v2298
        %2319 = vmatprep.subr.bf16.mxu0 0
        %2320 = vmatpush1.bf16.msra.mxu0 %v2299
        %2321 = vmatprep.subr.bf16.mxu0 0
        %2322 = vmatpush1.bf16.msra.mxu0 %v2300
        %2323 = vmatprep.subr.bf16.mxu0 0
        %2324 = vmatpush1.bf16.msra.mxu0 %v2301
        %2325 = vmatprep.subr.bf16.mxu0 0
        %2326 = vmatpush1.bf16.msra.mxu0 %v2302
        %2327 = vmatprep.subr.bf16.mxu0 0
        %2328 = vmatpush1.bf16.msra.mxu0 0
        %2329 = vmatprep.subr.bf16.mxu0 0
        %2330 = vmatpush1.bf16.msra.mxu0 0
        %2331 = vmatprep.subr.bf16.mxu0 0
        %2332 = vmatpush1.bf16.msra.mxu0 0
        %2333 = vmatprep.subr.bf16.mxu0 0
        %2334 = vmatpush1.bf16.msra.mxu0 0
        %2335 = vmatprep.subr.bf16.mxu0 0
        %2336 = vmatpush1.bf16.msra.mxu0 0
        %2337 = vmatprep.subr.bf16.mxu0 0
        %2338 = vmatpush1.bf16.msra.mxu0 0
        %2339 = vmatprep.subr.bf16.mxu0 0
        %2340 = vmatpush1.bf16.msra.mxu0 0
        %2341 = vmatprep.subr.bf16.mxu0 0
        %2342 = vmatpush1.bf16.msra.mxu0 0
        %2343 = vmatprep.mubr.bf16.mxu0 0
        %2344 = vmatmul.mubr.bf16.gmra.mrb[0].mxu0 %v2230
        %v2345 = vpop.f32.mrb[0].mxu0
        %v2346 = vadd.f32 0.0, %v2345
        %v2347 = vpop.f32.mrb[0].mxu0
        %v2348 = vpop.f32.mrb[0].mxu0
        %v2349 = vadd.f32 0.0, %v2348
        %v2350 = vpop.f32.mrb[0].mxu0
        %2351 = vmatprep.mubr.bf16.mxu0 0
        %2352 = vmatmul.mubr.bf16.gmra.mrb[0].mxu0 %v2231
        %v2353 = vpop.f32.mrb[0].mxu0
        %v2354 = vadd.f32 0.0, %v2353
        %v2355 = vpop.f32.mrb[0].mxu0
        %v2356 = vpop.f32.mrb[0].mxu0
        %v2357 = vadd.f32 0.0, %v2356
        %v2358 = vpop.f32.mrb[0].mxu0
        %2359 = vmatprep.mubr.bf16.mxu0 0
        %2360 = vmatmul.mubr.bf16.gmra.mrb[0].mxu0 %v2232
        %v2361 = vpop.f32.mrb[0].mxu0
        %v2362 = vadd.f32 0.0, %v2361
        %v2363 = vpop.f32.mrb[0].mxu0
        %v2364 = vpop.f32.mrb[0].mxu0
        %v2365 = vadd.f32 0.0, %v2364
        %v2366 = vpop.f32.mrb[0].mxu0
        %2367 = vmatprep.mubr.bf16.mxu0 0
        %2368 = vmatmul.mubr.bf16.gmra.mrb[0].mxu0 %v2233
        %v2369 = vpop.f32.mrb[0].mxu0
        %v2370 = vadd.f32 0.0, %v2369
        %v2371 = vpop.f32.mrb[0].mxu0
        %v2372 = vpop.f32.mrb[0].mxu0
        %v2373 = vadd.f32 0.0, %v2372
        %v2374 = vpop.f32.mrb[0].mxu0
        %2375 = vmatprep.mubr.bf16.mxu0 0
        %2376 = vmatmul.mubr.bf16.gmra.mrb[0].mxu0 %v2234
        %v2377 = vpop.f32.mrb[0].mxu0
        %v2378 = vadd.f32 0.0, %v2377
        %v2379 = vpop.f32.mrb[0].mxu0
        %v2380 = vpop.f32.mrb[0].mxu0
        %v2381 = vadd.f32 0.0, %v2380
        %v2382 = vpop.f32.mrb[0].mxu0
        %2383 = vmatprep.mubr.bf16.mxu0 0
        %2384 = vmatmul.mubr.bf16.gmra.mrb[0].mxu0 %v2235
        %v2385 = vpop.f32.mrb[0].mxu0
        %v2386 = vadd.f32 0.0, %v2385
        %v2387 = vpop.f32.mrb[0].mxu0
        %v2388 = vpop.f32.mrb[0].mxu0
        %v2389 = vadd.f32 0.0, %v2388
        %v2390 = vpop.f32.mrb[0].mxu0
        %2391 = vmatprep.mubr.bf16.mxu0 0
        %2392 = vmatmul.mubr.bf16.gmra.mrb[0].mxu0 %v2236
        %v2393 = vpop.f32.mrb[0].mxu0
        %v2394 = vadd.f32 0.0, %v2393
        %v2395 = vpop.f32.mrb[0].mxu0
        %v2396 = vpop.f32.mrb[0].mxu0
        %v2397 = vadd.f32 0.0, %v2396
        %v2398 = vpop.f32.mrb[0].mxu0
        %2399 = vmatprep.mubr.bf16.mxu0 0
        %2400 = vmatmul.mubr.bf16.gmra.mrb[0].mxu0 %v2237
        %v2401 = vpop.f32.mrb[0].mxu0
        %v2402 = vadd.f32 0.0, %v2401
        %v2403 = vpop.f32.mrb[0].mxu0
        %v2404 = vpop.f32.mrb[0].mxu0
        %v2405 = vadd.f32 0.0, %v2404
        %v2406 = vpop.f32.mrb[0].mxu0
        %2407 = vmatprep.mubr.bf16.mxu0 0
        %2408 = vmatmul.mubr.bf16.gmra.mrb[0].mxu0 %v2238
        %v2409 = vpop.f32.mrb[0].mxu0
        %v2410 = vadd.f32 0.0, %v2409
        %v2411 = vpop.f32.mrb[0].mxu0
        %v2412 = vpop.f32.mrb[0].mxu0
        %v2413 = vadd.f32 0.0, %v2412
        %v2414 = vpop.f32.mrb[0].mxu0
        %2415 = vmatprep.mubr.bf16.mxu0 0
        %2416 = vmatmul.mubr.bf16.gmra.mrb[0].mxu0 %v2239
        %v2417 = vpop.f32.mrb[0].mxu0
        %v2418 = vadd.f32 0.0, %v2417
        %v2419 = vpop.f32.mrb[0].mxu0
        %v2420 = vpop.f32.mrb[0].mxu0
        %v2421 = vadd.f32 0.0, %v2420
        %v2422 = vpop.f32.mrb[0].mxu0
        %2423 = vmatprep.mubr.bf16.mxu0 0
        %2424 = vmatmul.mubr.bf16.gmra.mrb[0].mxu0 %v2240
        %v2425 = vpop.f32.mrb[0].mxu0
        %v2426 = vadd.f32 0.0, %v2425
        %v2427 = vpop.f32.mrb[0].mxu0
        %v2428 = vpop.f32.mrb[0].mxu0
        %v2429 = vadd.f32 0.0, %v2428
        %v2430 = vpop.f32.mrb[0].mxu0
        %2431 = vmatprep.mubr.bf16.mxu0 0
        %2432 = vmatmul.mubr.bf16.gmra.mrb[0].mxu0 %v2241
        %v2433 = vpop.f32.mrb[0].mxu0
        %v2434 = vadd.f32 0.0, %v2433
        %v2435 = vpop.f32.mrb[0].mxu0
        %v2436 = vpop.f32.mrb[0].mxu0
        %v2437 = vadd.f32 0.0, %v2436
        %v2438 = vpop.f32.mrb[0].mxu0
        %2439 = vmatprep.mubr.bf16.mxu0 0
        %2440 = vmatmul.mubr.bf16.gmra.mrb[0].mxu0 %v2242
        %v2441 = vpop.f32.mrb[0].mxu0
        %v2442 = vadd.f32 0.0, %v2441
        %v2443 = vpop.f32.mrb[0].mxu0
        %v2444 = vpop.f32.mrb[0].mxu0
        %v2445 = vadd.f32 0.0, %v2444
        %v2446 = vpop.f32.mrb[0].mxu0
        %2447 = vmatprep.mubr.bf16.mxu0 0
        %2448 = vmatmul.mubr.bf16.gmra.mrb[0].mxu0 %v2243
        %v2449 = vpop.f32.mrb[0].mxu0
        %v2450 = vadd.f32 0.0, %v2449
        %v2451 = vpop.f32.mrb[0].mxu0
        %v2452 = vpop.f32.mrb[0].mxu0
        %v2453 = vadd.f32 0.0, %v2452
        %v2454 = vpop.f32.mrb[0].mxu0
        %2455 = vmatprep.mubr.bf16.mxu0 0
        %2456 = vmatmul.mubr.bf16.gmra.mrb[0].mxu0 %v2244
        %v2457 = vpop.f32.mrb[0].mxu0
        %v2458 = vadd.f32 0.0, %v2457
        %v2459 = vpop.f32.mrb[0].mxu0
        %v2460 = vpop.f32.mrb[0].mxu0
        %v2461 = vadd.f32 0.0, %v2460
        %v2462 = vpop.f32.mrb[0].mxu0
        %2463 = vmatprep.mubr.bf16.mxu0 0
        %2464 = vmatmul.mubr.bf16.gmra.mrb[0].mxu0 %v2245
        %v2465 = vpop.f32.mrb[0].mxu0
        %v2466 = vadd.f32 0.0, %v2465
        %v2467 = vpop.f32.mrb[0].mxu0
        %v2468 = vpop.f32.mrb[0].mxu0
        %v2469 = vadd.f32 0.0, %v2468
        %v2470 = vpop.f32.mrb[0].mxu0
        %2471 = vdwg.mxu0
        %v2472 = vadd.f32 %v1646, %v2346
        %v2473 = vadd.f32 %v1647, %v2349
        %v2474 = vadd.f32 %v1648, %v2354
        %v2475 = vadd.f32 %v1649, %v2357
        %v2476 = vadd.f32 %v1650, %v2362
        %v2477 = vadd.f32 %v1651, %v2365
        %v2478 = vadd.f32 %v1652, %v2370
        %v2479 = vadd.f32 %v1653, %v2373
        %v2480 = vadd.f32 %v1654, %v2378
        %v2481 = vadd.f32 %v1655, %v2381
        %v2482 = vadd.f32 %v1656, %v2386
        %v2483 = vadd.f32 %v1657, %v2389
        %v2484 = vadd.f32 %v1658, %v2394
        %v2485 = vadd.f32 %v1659, %v2397
        %v2486 = vadd.f32 %v1660, %v2402
        %v2487 = vadd.f32 %v1661, %v2405
        %v2488 = vadd.f32 %v1662, %v2410
        %v2489 = vadd.f32 %v1663, %v2413
        %v2490 = vadd.f32 %v1664, %v2418
        %v2491 = vadd.f32 %v1665, %v2421
        %v2492 = vadd.f32 %v1666, %v2426
        %v2493 = vadd.f32 %v1667, %v2429
        %v2494 = vadd.f32 %v1668, %v2434
        %v2495 = vadd.f32 %v1669, %v2437
        %v2496 = vadd.f32 %v1670, %v2442
        %v2497 = vadd.f32 %v1671, %v2445
        %v2498 = vadd.f32 %v1672, %v2450
        %v2499 = vadd.f32 %v1673, %v2453
        %v2500 = vadd.f32 %v1674, %v2458
        %v2501 = vadd.f32 %v1675, %v2461
        %v2502 = vadd.f32 %v1676, %v2466
        %v2503 = vadd.f32 %v1677, %v2469
        %v2504 = vlaneseq
        %v2505 = vshrl.u32 %v2504, 7
        %v2506 = vsub.s32 1, %v2505
        %v2507 = vrot.slane %v1641, %v2506
        %v2508 = vadd.f32 %v2472, %v2507
        %v2509 = vadd.f32 %v2473, %v2507
        %v2510 = vadd.f32 %v2474, %v2507
        %v2511 = vadd.f32 %v2475, %v2507
        %v2512 = vadd.f32 %v2476, %v2507
        %v2513 = vadd.f32 %v2477, %v2507
        %v2514 = vadd.f32 %v2478, %v2507
        %v2515 = vadd.f32 %v2479, %v2507
        %v2516 = vadd.f32 %v2480, %v2507
        %v2517 = vadd.f32 %v2481, %v2507
        %v2518 = vadd.f32 %v2482, %v2507
        %v2519 = vadd.f32 %v2483, %v2507
        %v2520 = vadd.f32 %v2484, %v2507
        %v2521 = vadd.f32 %v2485, %v2507
        %v2522 = vadd.f32 %v2486, %v2507
        %v2523 = vadd.f32 %v2487, %v2507
        %v2524 = vadd.f32 %v2488, %v2507
        %v2525 = vadd.f32 %v2489, %v2507
        %v2526 = vadd.f32 %v2490, %v2507
        %v2527 = vadd.f32 %v2491, %v2507
        %v2528 = vadd.f32 %v2492, %v2507
        %v2529 = vadd.f32 %v2493, %v2507
        %v2530 = vadd.f32 %v2494, %v2507
        %v2531 = vadd.f32 %v2495, %v2507
        %v2532 = vadd.f32 %v2496, %v2507
        %v2533 = vadd.f32 %v2497, %v2507
        %v2534 = vadd.f32 %v2498, %v2507
        %v2535 = vadd.f32 %v2499, %v2507
        %v2536 = vadd.f32 %v2500, %v2507
        %v2537 = vadd.f32 %v2501, %v2507
        %v2538 = vadd.f32 %v2502, %v2507
        %v2539 = vadd.f32 %v2503, %v2507
        %v2540 = vld [vmem:[%s7] sm:$0x1]
        %v2541 = vunpack.c.l.bf16 %v2540
        %v2542 = vld [vmem:[%s8] sm:$0x1]
        %v2543 = vunpack.c.l.bf16 %v2542
        %2544 = vadd.xlane.f32.xlu0 %v2508
        %v2545 = vpop.xlane.xlu0 %2544
        %2546 = vadd.xlane.f32.xlu0 %v2509
        %v2547 = vpop.xlane.xlu0 %2546
        %2548 = vadd.xlane.f32.xlu0 %v2510
        %v2549 = vpop.xlane.xlu0 %2548
        %2550 = vadd.xlane.f32.xlu0 %v2511
        %v2551 = vpop.xlane.xlu0 %2550
        %2552 = vadd.xlane.f32.xlu0 %v2512
        %v2553 = vpop.xlane.xlu0 %2552
        %2554 = vadd.xlane.f32.xlu0 %v2513
        %v2555 = vpop.xlane.xlu0 %2554
        %2556 = vadd.xlane.f32.xlu0 %v2514
        %v2557 = vpop.xlane.xlu0 %2556
        %2558 = vadd.xlane.f32.xlu0 %v2515
        %v2559 = vpop.xlane.xlu0 %2558
        %2560 = vadd.xlane.f32.xlu0 %v2516
        %v2561 = vpop.xlane.xlu0 %2560
        %2562 = vadd.xlane.f32.xlu0 %v2517
        %v2563 = vpop.xlane.xlu0 %2562
        %2564 = vadd.xlane.f32.xlu0 %v2518
        %v2565 = vpop.xlane.xlu0 %2564
        %2566 = vadd.xlane.f32.xlu0 %v2519
        %v2567 = vpop.xlane.xlu0 %2566
        %2568 = vadd.xlane.f32.xlu0 %v2520
        %v2569 = vpop.xlane.xlu0 %2568
        %2570 = vadd.xlane.f32.xlu0 %v2521
        %v2571 = vpop.xlane.xlu0 %2570
        %2572 = vadd.xlane.f32.xlu0 %v2522
        %v2573 = vpop.xlane.xlu0 %2572
        %2574 = vadd.xlane.f32.xlu0 %v2523
        %v2575 = vpop.xlane.xlu0 %2574
        %2576 = vadd.xlane.f32.xlu0 %v2524
        %v2577 = vpop.xlane.xlu0 %2576
        %2578 = vadd.xlane.f32.xlu0 %v2525
        %v2579 = vpop.xlane.xlu0 %2578
        %2580 = vadd.xlane.f32.xlu0 %v2526
        %v2581 = vpop.xlane.xlu0 %2580
        %2582 = vadd.xlane.f32.xlu0 %v2527
        %v2583 = vpop.xlane.xlu0 %2582
        %2584 = vadd.xlane.f32.xlu0 %v2528
        %v2585 = vpop.xlane.xlu0 %2584
        %2586 = vadd.xlane.f32.xlu0 %v2529
        %v2587 = vpop.xlane.xlu0 %2586
        %2588 = vadd.xlane.f32.xlu0 %v2530
        %v2589 = vpop.xlane.xlu0 %2588
        %2590 = vadd.xlane.f32.xlu0 %v2531
        %v2591 = vpop.xlane.xlu0 %2590
        %2592 = vadd.xlane.f32.xlu0 %v2532
        %v2593 = vpop.xlane.xlu0 %2592
        %2594 = vadd.xlane.f32.xlu0 %v2533
        %v2595 = vpop.xlane.xlu0 %2594
        %2596 = vadd.xlane.f32.xlu0 %v2534
        %v2597 = vpop.xlane.xlu0 %2596
        %2598 = vadd.xlane.f32.xlu0 %v2535
        %v2599 = vpop.xlane.xlu0 %2598
        %2600 = vadd.xlane.f32.xlu0 %v2536
        %v2601 = vpop.xlane.xlu0 %2600
        %2602 = vadd.xlane.f32.xlu0 %v2537
        %v2603 = vpop.xlane.xlu0 %2602
        %2604 = vadd.xlane.f32.xlu0 %v2538
        %v2605 = vpop.xlane.xlu0 %2604
        %2606 = vadd.xlane.f32.xlu0 %v2539
        %v2607 = vpop.xlane.xlu0 %2606
        %v2608 = vmul.f32 %v2545, 0.010416667
        %v2609 = vmul.f32 %v2547, 0.010416667
        %v2610 = vmul.f32 %v2549, 0.010416667
        %v2611 = vmul.f32 %v2551, 0.010416667
        %v2612 = vmul.f32 %v2553, 0.010416667
        %v2613 = vmul.f32 %v2555, 0.010416667
        %v2614 = vmul.f32 %v2557, 0.010416667
        %v2615 = vmul.f32 %v2559, 0.010416667
        %v2616 = vmul.f32 %v2561, 0.010416667
        %v2617 = vmul.f32 %v2563, 0.010416667
        %v2618 = vmul.f32 %v2565, 0.010416667
        %v2619 = vmul.f32 %v2567, 0.010416667
        %v2620 = vmul.f32 %v2569, 0.010416667
        %v2621 = vmul.f32 %v2571, 0.010416667
        %v2622 = vmul.f32 %v2573, 0.010416667
        %v2623 = vmul.f32 %v2575, 0.010416667
        %v2624 = vmul.f32 %v2577, 0.010416667
        %v2625 = vmul.f32 %v2579, 0.010416667
        %v2626 = vmul.f32 %v2581, 0.010416667
        %v2627 = vmul.f32 %v2583, 0.010416667
        %v2628 = vmul.f32 %v2585, 0.010416667
        %v2629 = vmul.f32 %v2587, 0.010416667
        %v2630 = vmul.f32 %v2589, 0.010416667
        %v2631 = vmul.f32 %v2591, 0.010416667
        %v2632 = vmul.f32 %v2593, 0.010416667
        %v2633 = vmul.f32 %v2595, 0.010416667
        %v2634 = vmul.f32 %v2597, 0.010416667
        %v2635 = vmul.f32 %v2599, 0.010416667
        %v2636 = vmul.f32 %v2601, 0.010416667
        %v2637 = vmul.f32 %v2603, 0.010416667
        %v2638 = vmul.f32 %v2605, 0.010416667
        %v2639 = vmul.f32 %v2607, 0.010416667
        %v2640 = vmul.f32 %v2508, %v2508
        %v2641 = vmul.f32 %v2509, %v2509
        %v2642 = vmul.f32 %v2510, %v2510
        %v2643 = vmul.f32 %v2511, %v2511
        %v2644 = vmul.f32 %v2512, %v2512
        %v2645 = vmul.f32 %v2513, %v2513
        %v2646 = vmul.f32 %v2514, %v2514
        %v2647 = vmul.f32 %v2515, %v2515
        %v2648 = vmul.f32 %v2516, %v2516
        %v2649 = vmul.f32 %v2517, %v2517
        %v2650 = vmul.f32 %v2518, %v2518
        %v2651 = vmul.f32 %v2519, %v2519
        %v2652 = vmul.f32 %v2520, %v2520
        %v2653 = vmul.f32 %v2521, %v2521
        %v2654 = vmul.f32 %v2522, %v2522
        %v2655 = vmul.f32 %v2523, %v2523
        %v2656 = vmul.f32 %v2524, %v2524
        %v2657 = vmul.f32 %v2525, %v2525
        %v2658 = vmul.f32 %v2526, %v2526
        %v2659 = vmul.f32 %v2527, %v2527
        %v2660 = vmul.f32 %v2528, %v2528
        %v2661 = vmul.f32 %v2529, %v2529
        %v2662 = vmul.f32 %v2530, %v2530
        %v2663 = vmul.f32 %v2531, %v2531
        %v2664 = vmul.f32 %v2532, %v2532
        %v2665 = vmul.f32 %v2533, %v2533
        %v2666 = vmul.f32 %v2534, %v2534
        %v2667 = vmul.f32 %v2535, %v2535
        %v2668 = vmul.f32 %v2536, %v2536
        %v2669 = vmul.f32 %v2537, %v2537
        %v2670 = vmul.f32 %v2538, %v2538
        %v2671 = vmul.f32 %v2539, %v2539
        %2672 = vadd.xlane.f32.xlu0 %v2640
        %v2673 = vpop.xlane.xlu0 %2672
        %2674 = vadd.xlane.f32.xlu0 %v2641
        %v2675 = vpop.xlane.xlu0 %2674
        %2676 = vadd.xlane.f32.xlu0 %v2642
        %v2677 = vpop.xlane.xlu0 %2676
        %2678 = vadd.xlane.f32.xlu0 %v2643
        %v2679 = vpop.xlane.xlu0 %2678
        %2680 = vadd.xlane.f32.xlu0 %v2644
        %v2681 = vpop.xlane.xlu0 %2680
        %2682 = vadd.xlane.f32.xlu0 %v2645
        %v2683 = vpop.xlane.xlu0 %2682
        %2684 = vadd.xlane.f32.xlu0 %v2646
        %v2685 = vpop.xlane.xlu0 %2684
        %2686 = vadd.xlane.f32.xlu0 %v2647
        %v2687 = vpop.xlane.xlu0 %2686
        %2688 = vadd.xlane.f32.xlu0 %v2648
        %v2689 = vpop.xlane.xlu0 %2688
        %2690 = vadd.xlane.f32.xlu0 %v2649
        %v2691 = vpop.xlane.xlu0 %2690
        %2692 = vadd.xlane.f32.xlu0 %v2650
        %v2693 = vpop.xlane.xlu0 %2692
        %2694 = vadd.xlane.f32.xlu0 %v2651
        %v2695 = vpop.xlane.xlu0 %2694
        %2696 = vadd.xlane.f32.xlu0 %v2652
        %v2697 = vpop.xlane.xlu0 %2696
        %2698 = vadd.xlane.f32.xlu0 %v2653
        %v2699 = vpop.xlane.xlu0 %2698
        %2700 = vadd.xlane.f32.xlu0 %v2654
        %v2701 = vpop.xlane.xlu0 %2700
        %2702 = vadd.xlane.f32.xlu0 %v2655
        %v2703 = vpop.xlane.xlu0 %2702
        %2704 = vadd.xlane.f32.xlu0 %v2656
        %v2705 = vpop.xlane.xlu0 %2704
        %2706 = vadd.xlane.f32.xlu0 %v2657
        %v2707 = vpop.xlane.xlu0 %2706
        %2708 = vadd.xlane.f32.xlu0 %v2658
        %v2709 = vpop.xlane.xlu0 %2708
        %2710 = vadd.xlane.f32.xlu0 %v2659
        %v2711 = vpop.xlane.xlu0 %2710
        %2712 = vadd.xlane.f32.xlu0 %v2660
        %v2713 = vpop.xlane.xlu0 %2712
        %2714 = vadd.xlane.f32.xlu0 %v2661
        %v2715 = vpop.xlane.xlu0 %2714
        %2716 = vadd.xlane.f32.xlu0 %v2662
        %v2717 = vpop.xlane.xlu0 %2716
        %2718 = vadd.xlane.f32.xlu0 %v2663
        %v2719 = vpop.xlane.xlu0 %2718
        %2720 = vadd.xlane.f32.xlu0 %v2664
        %v2721 = vpop.xlane.xlu0 %2720
        %2722 = vadd.xlane.f32.xlu0 %v2665
        %v2723 = vpop.xlane.xlu0 %2722
        %2724 = vadd.xlane.f32.xlu0 %v2666
        %v2725 = vpop.xlane.xlu0 %2724
        %2726 = vadd.xlane.f32.xlu0 %v2667
        %v2727 = vpop.xlane.xlu0 %2726
        %2728 = vadd.xlane.f32.xlu0 %v2668
        %v2729 = vpop.xlane.xlu0 %2728
        %2730 = vadd.xlane.f32.xlu0 %v2669
        %v2731 = vpop.xlane.xlu0 %2730
        %2732 = vadd.xlane.f32.xlu0 %v2670
        %v2733 = vpop.xlane.xlu0 %2732
        %2734 = vadd.xlane.f32.xlu0 %v2671
        %v2735 = vpop.xlane.xlu0 %2734
        %v2736 = vmul.f32 %v2673, 0.010416667
        %v2737 = vmul.f32 %v2675, 0.010416667
        %v2738 = vmul.f32 %v2677, 0.010416667
        %v2739 = vmul.f32 %v2679, 0.010416667
        %v2740 = vmul.f32 %v2681, 0.010416667
        %v2741 = vmul.f32 %v2683, 0.010416667
        %v2742 = vmul.f32 %v2685, 0.010416667
        %v2743 = vmul.f32 %v2687, 0.010416667
        %v2744 = vmul.f32 %v2689, 0.010416667
        %v2745 = vmul.f32 %v2691, 0.010416667
        %v2746 = vmul.f32 %v2693, 0.010416667
        %v2747 = vmul.f32 %v2695, 0.010416667
        %v2748 = vmul.f32 %v2697, 0.010416667
        %v2749 = vmul.f32 %v2699, 0.010416667
        %v2750 = vmul.f32 %v2701, 0.010416667
        %v2751 = vmul.f32 %v2703, 0.010416667
        %v2752 = vmul.f32 %v2705, 0.010416667
        %v2753 = vmul.f32 %v2707, 0.010416667
        %v2754 = vmul.f32 %v2709, 0.010416667
        %v2755 = vmul.f32 %v2711, 0.010416667
        %v2756 = vmul.f32 %v2713, 0.010416667
        %v2757 = vmul.f32 %v2715, 0.010416667
        %v2758 = vmul.f32 %v2717, 0.010416667
        %v2759 = vmul.f32 %v2719, 0.010416667
        %v2760 = vmul.f32 %v2721, 0.010416667
        %v2761 = vmul.f32 %v2723, 0.010416667
        %v2762 = vmul.f32 %v2725, 0.010416667
        %v2763 = vmul.f32 %v2727, 0.010416667
        %v2764 = vmul.f32 %v2729, 0.010416667
        %v2765 = vmul.f32 %v2731, 0.010416667
        %v2766 = vmul.f32 %v2733, 0.010416667
        %v2767 = vmul.f32 %v2735, 0.010416667
        %v2768 = vmul.f32 %v2608, %v2608
        %v2769 = vmul.f32 %v2609, %v2609
        %v2770 = vmul.f32 %v2610, %v2610
        %v2771 = vmul.f32 %v2611, %v2611
        %v2772 = vmul.f32 %v2612, %v2612
        %v2773 = vmul.f32 %v2613, %v2613
        %v2774 = vmul.f32 %v2614, %v2614
        %v2775 = vmul.f32 %v2615, %v2615
        %v2776 = vmul.f32 %v2616, %v2616
        %v2777 = vmul.f32 %v2617, %v2617
        %v2778 = vmul.f32 %v2618, %v2618
        %v2779 = vmul.f32 %v2619, %v2619
        %v2780 = vmul.f32 %v2620, %v2620
        %v2781 = vmul.f32 %v2621, %v2621
        %v2782 = vmul.f32 %v2622, %v2622
        %v2783 = vmul.f32 %v2623, %v2623
        %v2784 = vmul.f32 %v2624, %v2624
        %v2785 = vmul.f32 %v2625, %v2625
        %v2786 = vmul.f32 %v2626, %v2626
        %v2787 = vmul.f32 %v2627, %v2627
        %v2788 = vmul.f32 %v2628, %v2628
        %v2789 = vmul.f32 %v2629, %v2629
        %v2790 = vmul.f32 %v2630, %v2630
        %v2791 = vmul.f32 %v2631, %v2631
        %v2792 = vmul.f32 %v2632, %v2632
        %v2793 = vmul.f32 %v2633, %v2633
        %v2794 = vmul.f32 %v2634, %v2634
        %v2795 = vmul.f32 %v2635, %v2635
        %v2796 = vmul.f32 %v2636, %v2636
        %v2797 = vmul.f32 %v2637, %v2637
        %v2798 = vmul.f32 %v2638, %v2638
        %v2799 = vmul.f32 %v2639, %v2639
        %v2800 = vsub.f32 %v2736, %v2768
        %v2801 = vsub.f32 %v2737, %v2769
        %v2802 = vsub.f32 %v2738, %v2770
        %v2803 = vsub.f32 %v2739, %v2771
        %v2804 = vsub.f32 %v2740, %v2772
        %v2805 = vsub.f32 %v2741, %v2773
        %v2806 = vsub.f32 %v2742, %v2774
        %v2807 = vsub.f32 %v2743, %v2775
        %v2808 = vsub.f32 %v2744, %v2776
        %v2809 = vsub.f32 %v2745, %v2777
        %v2810 = vsub.f32 %v2746, %v2778
        %v2811 = vsub.f32 %v2747, %v2779
        %v2812 = vsub.f32 %v2748, %v2780
        %v2813 = vsub.f32 %v2749, %v2781
        %v2814 = vsub.f32 %v2750, %v2782
        %v2815 = vsub.f32 %v2751, %v2783
        %v2816 = vsub.f32 %v2752, %v2784
        %v2817 = vsub.f32 %v2753, %v2785
        %v2818 = vsub.f32 %v2754, %v2786
        %v2819 = vsub.f32 %v2755, %v2787
        %v2820 = vsub.f32 %v2756, %v2788
        %v2821 = vsub.f32 %v2757, %v2789
        %v2822 = vsub.f32 %v2758, %v2790
        %v2823 = vsub.f32 %v2759, %v2791
        %v2824 = vsub.f32 %v2760, %v2792
        %v2825 = vsub.f32 %v2761, %v2793
        %v2826 = vsub.f32 %v2762, %v2794
        %v2827 = vsub.f32 %v2763, %v2795
        %v2828 = vsub.f32 %v2764, %v2796
        %v2829 = vsub.f32 %v2765, %v2797
        %v2830 = vsub.f32 %v2766, %v2798
        %v2831 = vsub.f32 %v2767, %v2799
        %v2832 = vmax.f32 %v2800, 0.0
        %v2833 = vmax.f32 %v2801, 0.0
        %v2834 = vmax.f32 %v2802, 0.0
        %v2835 = vmax.f32 %v2803, 0.0
        %v2836 = vmax.f32 %v2804, 0.0
        %v2837 = vmax.f32 %v2805, 0.0
        %v2838 = vmax.f32 %v2806, 0.0
        %v2839 = vmax.f32 %v2807, 0.0
        %v2840 = vmax.f32 %v2808, 0.0
        %v2841 = vmax.f32 %v2809, 0.0
        %v2842 = vmax.f32 %v2810, 0.0
        %v2843 = vmax.f32 %v2811, 0.0
        %v2844 = vmax.f32 %v2812, 0.0
        %v2845 = vmax.f32 %v2813, 0.0
        %v2846 = vmax.f32 %v2814, 0.0
        %v2847 = vmax.f32 %v2815, 0.0
        %v2848 = vmax.f32 %v2816, 0.0
        %v2849 = vmax.f32 %v2817, 0.0
        %v2850 = vmax.f32 %v2818, 0.0
        %v2851 = vmax.f32 %v2819, 0.0
        %v2852 = vmax.f32 %v2820, 0.0
        %v2853 = vmax.f32 %v2821, 0.0
        %v2854 = vmax.f32 %v2822, 0.0
        %v2855 = vmax.f32 %v2823, 0.0
        %v2856 = vmax.f32 %v2824, 0.0
        %v2857 = vmax.f32 %v2825, 0.0
        %v2858 = vmax.f32 %v2826, 0.0
        %v2859 = vmax.f32 %v2827, 0.0
        %v2860 = vmax.f32 %v2828, 0.0
        %v2861 = vmax.f32 %v2829, 0.0
        %v2862 = vmax.f32 %v2830, 0.0
        %v2863 = vmax.f32 %v2831, 0.0
        %v2864 = vsub.f32 %v2508, %v2608
        %v2865 = vsub.f32 %v2509, %v2609
        %v2866 = vsub.f32 %v2510, %v2610
        %v2867 = vsub.f32 %v2511, %v2611
        %v2868 = vsub.f32 %v2512, %v2612
        %v2869 = vsub.f32 %v2513, %v2613
        %v2870 = vsub.f32 %v2514, %v2614
        %v2871 = vsub.f32 %v2515, %v2615
        %v2872 = vsub.f32 %v2516, %v2616
        %v2873 = vsub.f32 %v2517, %v2617
        %v2874 = vsub.f32 %v2518, %v2618
        %v2875 = vsub.f32 %v2519, %v2619
        %v2876 = vsub.f32 %v2520, %v2620
        %v2877 = vsub.f32 %v2521, %v2621
        %v2878 = vsub.f32 %v2522, %v2622
        %v2879 = vsub.f32 %v2523, %v2623
        %v2880 = vsub.f32 %v2524, %v2624
        %v2881 = vsub.f32 %v2525, %v2625
        %v2882 = vsub.f32 %v2526, %v2626
        %v2883 = vsub.f32 %v2527, %v2627
        %v2884 = vsub.f32 %v2528, %v2628
        %v2885 = vsub.f32 %v2529, %v2629
        %v2886 = vsub.f32 %v2530, %v2630
        %v2887 = vsub.f32 %v2531, %v2631
        %v2888 = vsub.f32 %v2532, %v2632
        %v2889 = vsub.f32 %v2533, %v2633
        %v2890 = vsub.f32 %v2534, %v2634
        %v2891 = vsub.f32 %v2535, %v2635
        %v2892 = vsub.f32 %v2536, %v2636
        %v2893 = vsub.f32 %v2537, %v2637
        %v2894 = vsub.f32 %v2538, %v2638
        %v2895 = vsub.f32 %v2539, %v2639
        %v2896 = vadd.f32 %v2832, 1e-05
        %v2897 = vadd.f32 %v2833, 1e-05
        %v2898 = vadd.f32 %v2834, 1e-05
        %v2899 = vadd.f32 %v2835, 1e-05
        %v2900 = vadd.f32 %v2836, 1e-05
        %v2901 = vadd.f32 %v2837, 1e-05
        %v2902 = vadd.f32 %v2838, 1e-05
        %v2903 = vadd.f32 %v2839, 1e-05
        %v2904 = vadd.f32 %v2840, 1e-05
        %v2905 = vadd.f32 %v2841, 1e-05
        %v2906 = vadd.f32 %v2842, 1e-05
        %v2907 = vadd.f32 %v2843, 1e-05
        %v2908 = vadd.f32 %v2844, 1e-05
        %v2909 = vadd.f32 %v2845, 1e-05
        %v2910 = vadd.f32 %v2846, 1e-05
        %v2911 = vadd.f32 %v2847, 1e-05
        %v2912 = vadd.f32 %v2848, 1e-05
        %v2913 = vadd.f32 %v2849, 1e-05
        %v2914 = vadd.f32 %v2850, 1e-05
        %v2915 = vadd.f32 %v2851, 1e-05
        %v2916 = vadd.f32 %v2852, 1e-05
        %v2917 = vadd.f32 %v2853, 1e-05
        %v2918 = vadd.f32 %v2854, 1e-05
        %v2919 = vadd.f32 %v2855, 1e-05
        %v2920 = vadd.f32 %v2856, 1e-05
        %v2921 = vadd.f32 %v2857, 1e-05
        %v2922 = vadd.f32 %v2858, 1e-05
        %v2923 = vadd.f32 %v2859, 1e-05
        %v2924 = vadd.f32 %v2860, 1e-05
        %v2925 = vadd.f32 %v2861, 1e-05
        %v2926 = vadd.f32 %v2862, 1e-05
        %v2927 = vadd.f32 %v2863, 1e-05
        %v2928 = vrsqrt.pop %v2896
        %v2929 = vrsqrt.pop %v2897
        %v2930 = vrsqrt.pop %v2898
        %v2931 = vrsqrt.pop %v2899
        %v2932 = vrsqrt.pop %v2900
        %v2933 = vrsqrt.pop %v2901
        %v2934 = vrsqrt.pop %v2902
        %v2935 = vrsqrt.pop %v2903
        %v2936 = vrsqrt.pop %v2904
        %v2937 = vrsqrt.pop %v2905
        %v2938 = vrsqrt.pop %v2906
        %v2939 = vrsqrt.pop %v2907
        %v2940 = vrsqrt.pop %v2908
        %v2941 = vrsqrt.pop %v2909
        %v2942 = vrsqrt.pop %v2910
        %v2943 = vrsqrt.pop %v2911
        %v2944 = vrsqrt.pop %v2912
        %v2945 = vrsqrt.pop %v2913
        %v2946 = vrsqrt.pop %v2914
        %v2947 = vrsqrt.pop %v2915
        %v2948 = vrsqrt.pop %v2916
        %v2949 = vrsqrt.pop %v2917
        %v2950 = vrsqrt.pop %v2918
        %v2951 = vrsqrt.pop %v2919
        %v2952 = vrsqrt.pop %v2920
        %v2953 = vrsqrt.pop %v2921
        %v2954 = vrsqrt.pop %v2922
        %v2955 = vrsqrt.pop %v2923
        %v2956 = vrsqrt.pop %v2924
        %v2957 = vrsqrt.pop %v2925
        %v2958 = vrsqrt.pop %v2926
        %v2959 = vrsqrt.pop %v2927
        %v2960 = vmul.f32 %v2864, %v2928
        %v2961 = vmul.f32 %v2865, %v2929
        %v2962 = vmul.f32 %v2866, %v2930
        %v2963 = vmul.f32 %v2867, %v2931
        %v2964 = vmul.f32 %v2868, %v2932
        %v2965 = vmul.f32 %v2869, %v2933
        %v2966 = vmul.f32 %v2870, %v2934
        %v2967 = vmul.f32 %v2871, %v2935
        %v2968 = vmul.f32 %v2872, %v2936
        %v2969 = vmul.f32 %v2873, %v2937
        %v2970 = vmul.f32 %v2874, %v2938
        %v2971 = vmul.f32 %v2875, %v2939
        %v2972 = vmul.f32 %v2876, %v2940
        %v2973 = vmul.f32 %v2877, %v2941
        %v2974 = vmul.f32 %v2878, %v2942
        %v2975 = vmul.f32 %v2879, %v2943
        %v2976 = vmul.f32 %v2880, %v2944
        %v2977 = vmul.f32 %v2881, %v2945
        %v2978 = vmul.f32 %v2882, %v2946
        %v2979 = vmul.f32 %v2883, %v2947
        %v2980 = vmul.f32 %v2884, %v2948
        %v2981 = vmul.f32 %v2885, %v2949
        %v2982 = vmul.f32 %v2886, %v2950
        %v2983 = vmul.f32 %v2887, %v2951
        %v2984 = vmul.f32 %v2888, %v2952
        %v2985 = vmul.f32 %v2889, %v2953
        %v2986 = vmul.f32 %v2890, %v2954
        %v2987 = vmul.f32 %v2891, %v2955
        %v2988 = vmul.f32 %v2892, %v2956
        %v2989 = vmul.f32 %v2893, %v2957
        %v2990 = vmul.f32 %v2894, %v2958
        %v2991 = vmul.f32 %v2895, %v2959
        %v2992 = vlaneseq
        %v2993 = vshrl.u32 %v2992, 7
        %v2994 = vsub.s32 0, %v2993
        %v2995 = vrot.slane %v2541, %v2994
        %v2996 = vmul.f32 %v2960, %v2995
        %v2997 = vmul.f32 %v2961, %v2995
        %v2998 = vmul.f32 %v2962, %v2995
        %v2999 = vmul.f32 %v2963, %v2995
        %v3000 = vmul.f32 %v2964, %v2995
        %v3001 = vmul.f32 %v2965, %v2995
        %v3002 = vmul.f32 %v2966, %v2995
        %v3003 = vmul.f32 %v2967, %v2995
        %v3004 = vmul.f32 %v2968, %v2995
        %v3005 = vmul.f32 %v2969, %v2995
        %v3006 = vmul.f32 %v2970, %v2995
        %v3007 = vmul.f32 %v2971, %v2995
        %v3008 = vmul.f32 %v2972, %v2995
        %v3009 = vmul.f32 %v2973, %v2995
        %v3010 = vmul.f32 %v2974, %v2995
        %v3011 = vmul.f32 %v2975, %v2995
        %v3012 = vmul.f32 %v2976, %v2995
        %v3013 = vmul.f32 %v2977, %v2995
        %v3014 = vmul.f32 %v2978, %v2995
        %v3015 = vmul.f32 %v2979, %v2995
        %v3016 = vmul.f32 %v2980, %v2995
        %v3017 = vmul.f32 %v2981, %v2995
        %v3018 = vmul.f32 %v2982, %v2995
        %v3019 = vmul.f32 %v2983, %v2995
        %v3020 = vmul.f32 %v2984, %v2995
        %v3021 = vmul.f32 %v2985, %v2995
        %v3022 = vmul.f32 %v2986, %v2995
        %v3023 = vmul.f32 %v2987, %v2995
        %v3024 = vmul.f32 %v2988, %v2995
        %v3025 = vmul.f32 %v2989, %v2995
        %v3026 = vmul.f32 %v2990, %v2995
        %v3027 = vmul.f32 %v2991, %v2995
        %v3028 = vlaneseq
        %v3029 = vshrl.u32 %v3028, 7
        %v3030 = vsub.s32 0, %v3029
        %v3031 = vrot.slane %v2543, %v3030
        %v3032 = vadd.f32 %v2996, %v3031
        %v3033 = vadd.f32 %v2997, %v3031
        %v3034 = vadd.f32 %v2998, %v3031
        %v3035 = vadd.f32 %v2999, %v3031
        %v3036 = vadd.f32 %v3000, %v3031
        %v3037 = vadd.f32 %v3001, %v3031
        %v3038 = vadd.f32 %v3002, %v3031
        %v3039 = vadd.f32 %v3003, %v3031
        %v3040 = vadd.f32 %v3004, %v3031
        %v3041 = vadd.f32 %v3005, %v3031
        %v3042 = vadd.f32 %v3006, %v3031
        %v3043 = vadd.f32 %v3007, %v3031
        %v3044 = vadd.f32 %v3008, %v3031
        %v3045 = vadd.f32 %v3009, %v3031
        %v3046 = vadd.f32 %v3010, %v3031
        %v3047 = vadd.f32 %v3011, %v3031
        %v3048 = vadd.f32 %v3012, %v3031
        %v3049 = vadd.f32 %v3013, %v3031
        %v3050 = vadd.f32 %v3014, %v3031
        %v3051 = vadd.f32 %v3015, %v3031
        %v3052 = vadd.f32 %v3016, %v3031
        %v3053 = vadd.f32 %v3017, %v3031
        %v3054 = vadd.f32 %v3018, %v3031
        %v3055 = vadd.f32 %v3019, %v3031
        %v3056 = vadd.f32 %v3020, %v3031
        %v3057 = vadd.f32 %v3021, %v3031
        %v3058 = vadd.f32 %v3022, %v3031
        %v3059 = vadd.f32 %v3023, %v3031
        %v3060 = vadd.f32 %v3024, %v3031
        %v3061 = vadd.f32 %v3025, %v3031
        %v3062 = vadd.f32 %v3026, %v3031
        %v3063 = vadd.f32 %v3027, %v3031
        %v3064 = vmax.f32 %v3032, 0.0
        %v3065 = vmax.f32 %v3033, 0.0
        %v3066 = vmax.f32 %v3034, 0.0
        %v3067 = vmax.f32 %v3035, 0.0
        %v3068 = vmax.f32 %v3036, 0.0
        %v3069 = vmax.f32 %v3037, 0.0
        %v3070 = vmax.f32 %v3038, 0.0
        %v3071 = vmax.f32 %v3039, 0.0
        %v3072 = vmax.f32 %v3040, 0.0
        %v3073 = vmax.f32 %v3041, 0.0
        %v3074 = vmax.f32 %v3042, 0.0
        %v3075 = vmax.f32 %v3043, 0.0
        %v3076 = vmax.f32 %v3044, 0.0
        %v3077 = vmax.f32 %v3045, 0.0
        %v3078 = vmax.f32 %v3046, 0.0
        %v3079 = vmax.f32 %v3047, 0.0
        %v3080 = vmax.f32 %v3048, 0.0
        %v3081 = vmax.f32 %v3049, 0.0
        %v3082 = vmax.f32 %v3050, 0.0
        %v3083 = vmax.f32 %v3051, 0.0
        %v3084 = vmax.f32 %v3052, 0.0
        %v3085 = vmax.f32 %v3053, 0.0
        %v3086 = vmax.f32 %v3054, 0.0
        %v3087 = vmax.f32 %v3055, 0.0
        %v3088 = vmax.f32 %v3056, 0.0
        %v3089 = vmax.f32 %v3057, 0.0
        %v3090 = vmax.f32 %v3058, 0.0
        %v3091 = vmax.f32 %v3059, 0.0
        %v3092 = vmax.f32 %v3060, 0.0
        %v3093 = vmax.f32 %v3061, 0.0
        %v3094 = vmax.f32 %v3062, 0.0
        %v3095 = vmax.f32 %v3063, 0.0
        %v3096 = vpack.c.bf16 %v3065, %v3064
        %v3097 = vpack.c.bf16 %v3067, %v3066
        %v3098 = vpack.c.bf16 %v3069, %v3068
        %v3099 = vpack.c.bf16 %v3071, %v3070
        %v3100 = vpack.c.bf16 %v3073, %v3072
        %v3101 = vpack.c.bf16 %v3075, %v3074
        %v3102 = vpack.c.bf16 %v3077, %v3076
        %v3103 = vpack.c.bf16 %v3079, %v3078
        %v3104 = vpack.c.bf16 %v3081, %v3080
        %v3105 = vpack.c.bf16 %v3083, %v3082
        %v3106 = vpack.c.bf16 %v3085, %v3084
        %v3107 = vpack.c.bf16 %v3087, %v3086
        %v3108 = vpack.c.bf16 %v3089, %v3088
        %v3109 = vpack.c.bf16 %v3091, %v3090
        %v3110 = vpack.c.bf16 %v3093, %v3092
        %v3111 = vpack.c.bf16 %v3095, %v3094
        %v3112 = vld [vmem:[#allocation8] sm:$0xf]
        %v3113 = vld [vmem:[#allocation8 + $0x4] sm:$0xf]
        %v3114 = vld [vmem:[#allocation8 + $0x8] sm:$0xf]
        %v3115 = vld [vmem:[#allocation8 + $0xc] sm:$0xf]
        %v3116 = vld [vmem:[#allocation8 + $0x10] sm:$0xf]
        %v3117 = vld [vmem:[#allocation8 + $0x14] sm:$0xf]
        %v3118 = vld [vmem:[#allocation8 + $0x18] sm:$0xf]
        %v3119 = vld [vmem:[#allocation8 + $0x1c] sm:$0xf]
        %v3120 = vld [vmem:[#allocation8 + $0x20] sm:$0xf]
        %v3121 = vld [vmem:[#allocation8 + $0x24] sm:$0xf]
        %v3122 = vld [vmem:[#allocation8 + $0x28] sm:$0xf]
        %v3123 = vld [vmem:[#allocation8 + $0x2c] sm:$0xf]
        %v3124 = vld [vmem:[#allocation8 + $0x30] sm:$0xf]
        %v3125 = vld [vmem:[#allocation8 + $0x34] sm:$0xf]
        %v3126 = vld [vmem:[#allocation8 + $0x38] sm:$0xf]
        %v3127 = vld [vmem:[#allocation8 + $0x3c] sm:$0xf]
        %v3128 = vld [vmem:[%s10] sm:$0x1]
        %v3129 = vunpack.c.l.bf16 %v3128
        %v3130 = vlaneseq
        %v3131 = vshrl.u32 %v3130, 7
        %v3132 = vsub.s32 0, %v3131
        %v3133 = vrot.slane %v3129, %v3132
        %v3150 = vunpack.c.l.b16 %v3112
        %v3151 = vunpack.c.l.b16 %v3113
        %v3152 = vunpack.c.l.b16 %v3114
        %v3153 = vunpack.c.l.b16 %v3115
        %v3154 = vunpack.c.l.b16 %v3116
        %v3155 = vunpack.c.l.b16 %v3117
        %v3156 = vunpack.c.l.b16 %v3118
        %v3157 = vunpack.c.l.b16 %v3119
        %v3158 = vunpack.c.l.b16 %v3120
        %v3159 = vunpack.c.l.b16 %v3121
        %v3160 = vunpack.c.l.b16 %v3122
        %v3161 = vunpack.c.l.b16 %v3123
        %v3162 = vunpack.c.l.b16 %v3124
        %v3163 = vunpack.c.l.b16 %v3125
        %v3164 = vunpack.c.l.b16 %v3126
        %v3165 = vunpack.c.l.b16 %v3127
        %v3166 = vpack.c.b16 %v3151, %v3150
        %v3167 = vpack.c.b16 %v3153, %v3152
        %v3168 = vpack.c.b16 %v3155, %v3154
        %v3169 = vpack.c.b16 %v3157, %v3156
        %v3170 = vpack.c.b16 %v3159, %v3158
        %v3171 = vpack.c.b16 %v3161, %v3160
        %v3172 = vpack.c.b16 %v3163, %v3162
        %v3173 = vpack.c.b16 %v3165, %v3164
        %3182 = vmatprep.subr.bf16.mxu0 0
        %3183 = vmatpush1.bf16.msra.mxu0 %v3166
        %3184 = vmatprep.subr.bf16.mxu0 0
        %3185 = vmatpush1.bf16.msra.mxu0 %v3167
        %3186 = vmatprep.subr.bf16.mxu0 0
        %3187 = vmatpush1.bf16.msra.mxu0 %v3168
        %3188 = vmatprep.subr.bf16.mxu0 0
        %3189 = vmatpush1.bf16.msra.mxu0 %v3169
        %3190 = vmatprep.subr.bf16.mxu0 0
        %3191 = vmatpush1.bf16.msra.mxu0 %v3170
        %3192 = vmatprep.subr.bf16.mxu0 0
        %3193 = vmatpush1.bf16.msra.mxu0 %v3171
        %3194 = vmatprep.subr.bf16.mxu0 0
        %3195 = vmatpush1.bf16.msra.mxu0 %v3172
        %3196 = vmatprep.subr.bf16.mxu0 0
        %3197 = vmatpush1.bf16.msra.mxu0 %v3173
        %3198 = vmatprep.subr.bf16.mxu0 0
        %3199 = vmatpush1.bf16.msra.mxu0 0
        %3200 = vmatprep.subr.bf16.mxu0 0
        %3201 = vmatpush1.bf16.msra.mxu0 0
        %3202 = vmatprep.subr.bf16.mxu0 0
        %3203 = vmatpush1.bf16.msra.mxu0 0
        %3204 = vmatprep.subr.bf16.mxu0 0
        %3205 = vmatpush1.bf16.msra.mxu0 0
        %3206 = vmatprep.subr.bf16.mxu0 0
        %3207 = vmatpush1.bf16.msra.mxu0 0
        %3208 = vmatprep.subr.bf16.mxu0 0
        %3209 = vmatpush1.bf16.msra.mxu0 0
        %3210 = vmatprep.subr.bf16.mxu0 0
        %3211 = vmatpush1.bf16.msra.mxu0 0
        %3212 = vmatprep.subr.bf16.mxu0 0
        %3213 = vmatpush1.bf16.msra.mxu0 0
        %3214 = vmatprep.mubr.bf16.mxu0 0
        %3215 = vmatmul.mubr.bf16.gmra.mrb[0].mxu0 %v3096
        %v3216 = vpop.f32.mrb[0].mxu0
        %v3217 = vadd.f32 %v3133, %v3216
        %v3218 = vpop.f32.mrb[0].mxu0
        %v3219 = vpop.f32.mrb[0].mxu0
        %v3220 = vadd.f32 %v3133, %v3219
        %v3221 = vpop.f32.mrb[0].mxu0
        %3222 = vmatprep.mubr.bf16.mxu0 0
        %3223 = vmatmul.mubr.bf16.gmra.mrb[0].mxu0 %v3097
        %v3224 = vpop.f32.mrb[0].mxu0
        %v3225 = vadd.f32 %v3133, %v3224
        %v3226 = vpop.f32.mrb[0].mxu0
        %v3227 = vpop.f32.mrb[0].mxu0
        %v3228 = vadd.f32 %v3133, %v3227
        %v3229 = vpop.f32.mrb[0].mxu0
        %3230 = vmatprep.mubr.bf16.mxu0 0
        %3231 = vmatmul.mubr.bf16.gmra.mrb[0].mxu0 %v3098
        %v3232 = vpop.f32.mrb[0].mxu0
        %v3233 = vadd.f32 %v3133, %v3232
        %v3234 = vpop.f32.mrb[0].mxu0
        %v3235 = vpop.f32.mrb[0].mxu0
        %v3236 = vadd.f32 %v3133, %v3235
        %v3237 = vpop.f32.mrb[0].mxu0
        %3238 = vmatprep.mubr.bf16.mxu0 0
        %3239 = vmatmul.mubr.bf16.gmra.mrb[0].mxu0 %v3099
        %v3240 = vpop.f32.mrb[0].mxu0
        %v3241 = vadd.f32 %v3133, %v3240
        %v3242 = vpop.f32.mrb[0].mxu0
        %v3243 = vpop.f32.mrb[0].mxu0
        %v3244 = vadd.f32 %v3133, %v3243
        %v3245 = vpop.f32.mrb[0].mxu0
        %3246 = vmatprep.mubr.bf16.mxu0 0
        %3247 = vmatmul.mubr.bf16.gmra.mrb[0].mxu0 %v3100
        %v3248 = vpop.f32.mrb[0].mxu0
        %v3249 = vadd.f32 %v3133, %v3248
        %v3250 = vpop.f32.mrb[0].mxu0
        %v3251 = vpop.f32.mrb[0].mxu0
        %v3252 = vadd.f32 %v3133, %v3251
        %v3253 = vpop.f32.mrb[0].mxu0
        %3254 = vmatprep.mubr.bf16.mxu0 0
        %3255 = vmatmul.mubr.bf16.gmra.mrb[0].mxu0 %v3101
        %v3256 = vpop.f32.mrb[0].mxu0
        %v3257 = vadd.f32 %v3133, %v3256
        %v3258 = vpop.f32.mrb[0].mxu0
        %v3259 = vpop.f32.mrb[0].mxu0
        %v3260 = vadd.f32 %v3133, %v3259
        %v3261 = vpop.f32.mrb[0].mxu0
        %3262 = vmatprep.mubr.bf16.mxu0 0
        %3263 = vmatmul.mubr.bf16.gmra.mrb[0].mxu0 %v3102
        %v3264 = vpop.f32.mrb[0].mxu0
        %v3265 = vadd.f32 %v3133, %v3264
        %v3266 = vpop.f32.mrb[0].mxu0
        %v3267 = vpop.f32.mrb[0].mxu0
        %v3268 = vadd.f32 %v3133, %v3267
        %v3269 = vpop.f32.mrb[0].mxu0
        %3270 = vmatprep.mubr.bf16.mxu0 0
        %3271 = vmatmul.mubr.bf16.gmra.mrb[0].mxu0 %v3103
        %v3272 = vpop.f32.mrb[0].mxu0
        %v3273 = vadd.f32 %v3133, %v3272
        %v3274 = vpop.f32.mrb[0].mxu0
        %v3275 = vpop.f32.mrb[0].mxu0
        %v3276 = vadd.f32 %v3133, %v3275
        %v3277 = vpop.f32.mrb[0].mxu0
        %3278 = vmatprep.mubr.bf16.mxu0 0
        %3279 = vmatmul.mubr.bf16.gmra.mrb[0].mxu0 %v3104
        %v3280 = vpop.f32.mrb[0].mxu0
        %v3281 = vadd.f32 %v3133, %v3280
        %v3282 = vpop.f32.mrb[0].mxu0
        %v3283 = vpop.f32.mrb[0].mxu0
        %v3284 = vadd.f32 %v3133, %v3283
        %v3285 = vpop.f32.mrb[0].mxu0
        %3286 = vmatprep.mubr.bf16.mxu0 0
        %3287 = vmatmul.mubr.bf16.gmra.mrb[0].mxu0 %v3105
        %v3288 = vpop.f32.mrb[0].mxu0
        %v3289 = vadd.f32 %v3133, %v3288
        %v3290 = vpop.f32.mrb[0].mxu0
        %v3291 = vpop.f32.mrb[0].mxu0
        %v3292 = vadd.f32 %v3133, %v3291
        %v3293 = vpop.f32.mrb[0].mxu0
        %3294 = vmatprep.mubr.bf16.mxu0 0
        %3295 = vmatmul.mubr.bf16.gmra.mrb[0].mxu0 %v3106
        %v3296 = vpop.f32.mrb[0].mxu0
        %v3297 = vadd.f32 %v3133, %v3296
        %v3298 = vpop.f32.mrb[0].mxu0
        %v3299 = vpop.f32.mrb[0].mxu0
        %v3300 = vadd.f32 %v3133, %v3299
        %v3301 = vpop.f32.mrb[0].mxu0
        %3302 = vmatprep.mubr.bf16.mxu0 0
        %3303 = vmatmul.mubr.bf16.gmra.mrb[0].mxu0 %v3107
        %v3304 = vpop.f32.mrb[0].mxu0
        %v3305 = vadd.f32 %v3133, %v3304
        %v3306 = vpop.f32.mrb[0].mxu0
        %v3307 = vpop.f32.mrb[0].mxu0
        %v3308 = vadd.f32 %v3133, %v3307
        %v3309 = vpop.f32.mrb[0].mxu0
        %3310 = vmatprep.mubr.bf16.mxu0 0
        %3311 = vmatmul.mubr.bf16.gmra.mrb[0].mxu0 %v3108
        %v3312 = vpop.f32.mrb[0].mxu0
        %v3313 = vadd.f32 %v3133, %v3312
        %v3314 = vpop.f32.mrb[0].mxu0
        %v3315 = vpop.f32.mrb[0].mxu0
        %v3316 = vadd.f32 %v3133, %v3315
        %v3317 = vpop.f32.mrb[0].mxu0
        %3318 = vmatprep.mubr.bf16.mxu0 0
        %3319 = vmatmul.mubr.bf16.gmra.mrb[0].mxu0 %v3109
        %v3320 = vpop.f32.mrb[0].mxu0
        %v3321 = vadd.f32 %v3133, %v3320
        %v3322 = vpop.f32.mrb[0].mxu0
        %v3323 = vpop.f32.mrb[0].mxu0
        %v3324 = vadd.f32 %v3133, %v3323
        %v3325 = vpop.f32.mrb[0].mxu0
        %3326 = vmatprep.mubr.bf16.mxu0 0
        %3327 = vmatmul.mubr.bf16.gmra.mrb[0].mxu0 %v3110
        %v3328 = vpop.f32.mrb[0].mxu0
        %v3329 = vadd.f32 %v3133, %v3328
        %v3330 = vpop.f32.mrb[0].mxu0
        %v3331 = vpop.f32.mrb[0].mxu0
        %v3332 = vadd.f32 %v3133, %v3331
        %v3333 = vpop.f32.mrb[0].mxu0
        %3334 = vmatprep.mubr.bf16.mxu0 0
        %3335 = vmatmul.mubr.bf16.gmra.mrb[0].mxu0 %v3111
        %v3336 = vpop.f32.mrb[0].mxu0
        %v3337 = vadd.f32 %v3133, %v3336
        %v3338 = vpop.f32.mrb[0].mxu0
        %v3339 = vpop.f32.mrb[0].mxu0
        %v3340 = vadd.f32 %v3133, %v3339
        %v3341 = vpop.f32.mrb[0].mxu0
        %3342 = vdwg.mxu0
        %v3343 = vpack.c.bf16 %v3220, %v3217
        %v3344 = vpack.c.bf16 %v3228, %v3225
        %v3345 = vpack.c.bf16 %v3236, %v3233
        %v3346 = vpack.c.bf16 %v3244, %v3241
        %v3347 = vpack.c.bf16 %v3252, %v3249
        %v3348 = vpack.c.bf16 %v3260, %v3257
        %v3349 = vpack.c.bf16 %v3268, %v3265
        %v3350 = vpack.c.bf16 %v3276, %v3273
        %v3351 = vpack.c.bf16 %v3284, %v3281
        %v3352 = vpack.c.bf16 %v3292, %v3289
        %v3353 = vpack.c.bf16 %v3300, %v3297
        %v3354 = vpack.c.bf16 %v3308, %v3305
        %v3355 = vpack.c.bf16 %v3316, %v3313
        %v3356 = vpack.c.bf16 %v3324, %v3321
        %v3357 = vpack.c.bf16 %v3332, %v3329
        %v3358 = vpack.c.bf16 %v3340, %v3337
        %v3375 = vunpack.c.l.b16 %v3343
        %v3376 = vunpack.c.h.b16 %v3343
        %v3377 = vunpack.c.l.b16 %v3344
        %v3378 = vunpack.c.h.b16 %v3344
        %v3379 = vunpack.c.l.b16 %v3345
        %v3380 = vunpack.c.h.b16 %v3345
        %v3381 = vunpack.c.l.b16 %v3346
        %v3382 = vunpack.c.h.b16 %v3346
        %v3383 = vunpack.c.l.b16 %v3347
        %v3384 = vunpack.c.h.b16 %v3347
        %v3385 = vunpack.c.l.b16 %v3348
        %v3386 = vunpack.c.h.b16 %v3348
        %v3387 = vunpack.c.l.b16 %v3349
        %v3388 = vunpack.c.h.b16 %v3349
        %v3389 = vunpack.c.l.b16 %v3350
        %v3390 = vunpack.c.h.b16 %v3350
        %v3391 = vunpack.c.l.b16 %v3351
        %v3392 = vunpack.c.h.b16 %v3351
        %v3393 = vunpack.c.l.b16 %v3352
        %v3394 = vunpack.c.h.b16 %v3352
        %v3395 = vunpack.c.l.b16 %v3353
        %v3396 = vunpack.c.h.b16 %v3353
        %v3397 = vunpack.c.l.b16 %v3354
        %v3398 = vunpack.c.h.b16 %v3354
        %v3399 = vunpack.c.l.b16 %v3355
        %v3400 = vunpack.c.h.b16 %v3355
        %v3401 = vunpack.c.l.b16 %v3356
        %v3402 = vunpack.c.h.b16 %v3356
        %v3403 = vunpack.c.l.b16 %v3357
        %v3404 = vunpack.c.h.b16 %v3357
        %v3405 = vunpack.c.l.b16 %v3358
        %v3406 = vunpack.c.h.b16 %v3358
        %v3407 = vpack.c.b16 %v3375, %v3375
        %v3408 = vpack.c.b16 %v3376, %v3376
        %v3409 = vpack.c.b16 %v3377, %v3377
        %v3410 = vpack.c.b16 %v3378, %v3378
        %v3411 = vpack.c.b16 %v3379, %v3379
        %v3412 = vpack.c.b16 %v3380, %v3380
        %v3413 = vpack.c.b16 %v3381, %v3381
        %v3414 = vpack.c.b16 %v3382, %v3382
        %v3415 = vpack.c.b16 %v3383, %v3383
        %v3416 = vpack.c.b16 %v3384, %v3384
        %v3417 = vpack.c.b16 %v3385, %v3385
        %v3418 = vpack.c.b16 %v3386, %v3386
        %v3419 = vpack.c.b16 %v3387, %v3387
        %v3420 = vpack.c.b16 %v3388, %v3388
        %v3421 = vpack.c.b16 %v3389, %v3389
        %v3422 = vpack.c.b16 %v3390, %v3390
        %v3423 = vpack.c.b16 %v3391, %v3391
        %v3424 = vpack.c.b16 %v3392, %v3392
        %v3425 = vpack.c.b16 %v3393, %v3393
        %v3426 = vpack.c.b16 %v3394, %v3394
        %v3427 = vpack.c.b16 %v3395, %v3395
        %v3428 = vpack.c.b16 %v3396, %v3396
        %v3429 = vpack.c.b16 %v3397, %v3397
        %v3430 = vpack.c.b16 %v3398, %v3398
        %v3431 = vpack.c.b16 %v3399, %v3399
        %v3432 = vpack.c.b16 %v3400, %v3400
        %v3433 = vpack.c.b16 %v3401, %v3401
        %v3434 = vpack.c.b16 %v3402, %v3402
        %v3435 = vpack.c.b16 %v3403, %v3403
        %v3436 = vpack.c.b16 %v3404, %v3404
        %v3437 = vpack.c.b16 %v3405, %v3405
        %v3438 = vpack.c.b16 %v3406, %v3406
        %3471 = vst [vmem:[%s448] sm:$0xf] %v3407
        %3472 = vst [vmem:[%s448 + $0x4] sm:$0xf] %v3408
        %3473 = vst [vmem:[%s448 + $0x8] sm:$0xf] %v3409
        %3474 = vst [vmem:[%s448 + $0xc] sm:$0xf] %v3410
        %3475 = vst [vmem:[%s448 + $0x10] sm:$0xf] %v3411
        %3476 = vst [vmem:[%s448 + $0x14] sm:$0xf] %v3412
        %3477 = vst [vmem:[%s448 + $0x18] sm:$0xf] %v3413
        %3478 = vst [vmem:[%s448 + $0x1c] sm:$0xf] %v3414
        %3479 = vst [vmem:[%s448 + $0x20] sm:$0xf] %v3415
        %3480 = vst [vmem:[%s448 + $0x24] sm:$0xf] %v3416
        %3481 = vst [vmem:[%s448 + $0x28] sm:$0xf] %v3417
        %3482 = vst [vmem:[%s448 + $0x2c] sm:$0xf] %v3418
        %3483 = vst [vmem:[%s448 + $0x30] sm:$0xf] %v3419
        %3484 = vst [vmem:[%s448 + $0x34] sm:$0xf] %v3420
        %3485 = vst [vmem:[%s448 + $0x38] sm:$0xf] %v3421
        %3486 = vst [vmem:[%s448 + $0x3c] sm:$0xf] %v3422
        %3487 = vst [vmem:[%s448 + $0x40] sm:$0xf] %v3423
        %3488 = vst [vmem:[%s448 + $0x44] sm:$0xf] %v3424
        %3489 = vst [vmem:[%s448 + $0x48] sm:$0xf] %v3425
        %3490 = vst [vmem:[%s448 + $0x4c] sm:$0xf] %v3426
        %3491 = vst [vmem:[%s448 + $0x50] sm:$0xf] %v3427
        %3492 = vst [vmem:[%s448 + $0x54] sm:$0xf] %v3428
        %3493 = vst [vmem:[%s448 + $0x58] sm:$0xf] %v3429
        %3494 = vst [vmem:[%s448 + $0x5c] sm:$0xf] %v3430
        %3495 = vst [vmem:[%s448 + $0x60] sm:$0xf] %v3431
        %3496 = vst [vmem:[%s448 + $0x64] sm:$0xf] %v3432
        %3497 = vst [vmem:[%s448 + $0x68] sm:$0xf] %v3433
        %3498 = vst [vmem:[%s448 + $0x6c] sm:$0xf] %v3434
        %3499 = vst [vmem:[%s448 + $0x70] sm:$0xf] %v3435
        %3500 = vst [vmem:[%s448 + $0x74] sm:$0xf] %v3436
        %3501 = vst [vmem:[%s448 + $0x78] sm:$0xf] %v3437
        %3502 = vst [vmem:[%s448 + $0x7c] sm:$0xf] %v3438
        %s3503 = sand.u32 %s274, 1
        %s3504 = scalar_lea.sflag [#allocation4], %s3503
        %s3505 = sand.u32 %s274, 1
        %s3506 = smul.addr %s3505, 128
        %s3507 = scalar_lea.vmem [#allocation10], %s3506
        // Predicated region
        $region81: #{tpu_custom_call.1} parent=63 // pred_check
          %p3508 = pneg %p284
        $region82: #{tpu_custom_call.1} parent=63 // pred_check_branch
          %3510 = sbr.rel (%p3508) target = $region84
        $region83: #{tpu_custom_call.1} parent=63 // pred_region
          %s3511 = smul.u32 32, %s30
          %s3513 = ssub.s32 2048, 2048
          %3514 = vsyncadd %s3504, %s3513
          %s3515 = smul.addr %s3511, 64
          %s3516 = scalar_lea.hbm %s11, %s3515
          %s3517 = sshll.u32 %s3507, 4
          %s3518 = int_to_ptr.vmem [resolvable:$true] %s3517
          %3523 = dma.vmem_to_hbm [thread:$0]  %s3518, 2048, %s3516, %s3504, 64, 64, 4
        $region84: #{tpu_custom_call.1} parent=63 // pred_fallthru
          _
      $region64: #{tpu_custom_call.1} parent=5 // pred_fallthru
        _
      %p3524 = scmp.le.s32.totalorder 2, %s25
      // Predicated region
      $region85: #{tpu_custom_call.1} parent=5 // pred_check
        %p3525 = pneg %p3524
      $region86: #{tpu_custom_call.1} parent=5 // pred_check_branch
        %3527 = sbr.rel (%p3525) target = $region88
      $region87: #{tpu_custom_call.1} parent=5 // pred_region
        %s3528 = ssub.s32 %s25, 2
        // Predicated region
        $region89: #{tpu_custom_call.1} parent=87 // pred_check
          %p3529 = pneg %p290
        $region90: #{tpu_custom_call.1} parent=87 // pred_check_branch
          %3531 = sbr.rel (%p3529) target = $region92
        $region91: #{tpu_custom_call.1} parent=87 // pred_region
          %s3532 = sand.u32 %s275, 1
          %s3533 = scalar_lea.sflag [#allocation4], %s3532
          %s3534 = sand.u32 %s275, 1
          %s3535 = smul.addr %s3534, 128
          %s3536 = scalar_lea.vmem [#allocation10], %s3535
          %3537 = dma.done %s3533, 2048
        $region92: #{tpu_custom_call.1} parent=87 // pred_fallthru
          _
      $region88: #{tpu_custom_call.1} parent=5 // pred_fallthru
        _
    $region6: #{tpu_custom_call.1} parent=1 // loop_footer
      %s29 = sadd.s32 1, %s25
    $region7: #{tpu_custom_call.1} parent=1 // loop_footer_branch
      %24 = sbr.rel target = $region3
    $region8: #{tpu_custom_call.1} parent=1 // loop_exit
      _
    %3538 = vsyncpa [#allocation3], 1
    %s3539 = scalar_lea.sflag [#allocation3], 1
    %3540 = vsyncpa %s3539, 1
    %3541 = vsyncpa [#allocation6], 1
    %3542 = vsyncpa [#allocation9], 1
    %3543 = vsyncpa [#allocation4], 1
    %s3544 = scalar_lea.sflag [#allocation4], 1
    %3545 = vsyncpa %s3544, 1

</llo_original>
